<compile_context>
chip_gen: v7x
topology: tpu7x:2x2x1
jax: 0.10.0
libtpu: 0.0.40
codegen_flags: <defaults>
</compile_context>

<pallas_src>
import functools

import jax
import jax.numpy as jnp
import numpy as np
from jax import lax
from jax.experimental import pallas as pl
from jax.experimental.pallas import tpu as pltpu

NEG_SLOPE = 0.01  # F.leaky_relu default slope

_VMEM_LIMIT = 32 * 1024 * 1024    # safe scoped-VMEM request on v5e/v6e/v7x
_VMEM_BUDGET = 20 * 1024 * 1024   # sizing target for tc (headroom under limit)


def _lrelu(x):
    return jnp.where(x > 0, x, NEG_SLOPE * x)


def _nbytes(*arrays):
    return int(sum(a.size * a.dtype.itemsize for a in arrays))


def _unroll_for(tc):
    """Partial unroll of the recurrence loop (LLO scheduler visibility)."""
    for u in (8, 4, 2):
        if tc % u == 0:
            return u
    return 1


def _pick_time_chunk(T, per_step_bytes, fixed_bytes):
    """Largest divisor of T whose per-chunk VMEM footprint fits the budget."""
    # TODO(synk): for awkward/prime T, pad to a composite length + mask instead
    # of degrading toward tc=1.
    best = 1
    for d in range(1, T + 1):
        if T % d == 0 and fixed_bytes + d * per_step_bytes <= _VMEM_BUDGET:
            best = d
    return best


# ----------------------------------------------------------------------------
# Shared recurrence (both directions, one time chunk)
# ----------------------------------------------------------------------------
def _lstm_chunk_recurrence(gxf_sc, gxb_sc, whhf_ref, whhb_ref,
                           hseq_f_sc, hseq_b_sc,
                           hf_sc, cf_sc, hb_sc, cb_sc, tc, unroll):
    """gxf_sc/gxb_sc: (tc,B,4H) f32 pre-projected gates (fwd order / the chunk
    the backward direction consumes).  Writes per-step hidden states into
    hseq_f_sc / hseq_b_sc (f32).  Carries hf/cf/hb/cb persist across chunks."""
    H = hf_sc.shape[1]
    bf16 = jnp.bfloat16

    def cell(g, c_prev):
        # PyTorch gate order i, f, g, o.
        # NOTE: for H % 128 != 0 these lane slices are not vreg-aligned; padding
        # H to 128 (or a (B,4,H) gate layout) removes per-step lane shuffles.
        i_g = jax.nn.sigmoid(g[:, 0 * H:1 * H])
        f_g = jax.nn.sigmoid(g[:, 1 * H:2 * H])
        g_g = jnp.tanh(g[:, 2 * H:3 * H])
        o_g = jax.nn.sigmoid(g[:, 3 * H:4 * H])
        c_new = f_g * c_prev + i_g * g_g
        return o_g * jnp.tanh(c_new), c_new

    def step(s, carry):
        # Only h @ W_hh is on the serial critical path: two dense independent
        # (B,H)@(H,4H) matmuls that pipeline back-to-back through the MXU.
        gh_f = jnp.dot(hf_sc[...].astype(bf16), whhf_ref[...],
                       preferred_element_type=jnp.float32)
        gh_b = jnp.dot(hb_sc[...].astype(bf16), whhb_ref[...],
                       preferred_element_type=jnp.float32)
        h_f, c_f = cell(gxf_sc[s] + gh_f, cf_sc[...])
        h_b, c_b = cell(gxb_sc[tc - 1 - s] + gh_b, cb_sc[...])
        hf_sc[...] = h_f
        cf_sc[...] = c_f
        hb_sc[...] = h_b
        cb_sc[...] = c_b
        hseq_f_sc[s] = h_f
        hseq_b_sc[tc - 1 - s] = h_b
        return carry

    lax.fori_loop(0, tc, step, 0, unroll=unroll)


# ----------------------------------------------------------------------------
# Layer 0: i_fc/c_fc + leaky_relu + input projection + bidir recurrence
# ----------------------------------------------------------------------------
def _layer0_lstm_kernel(x_f_ref, c_f_ref, x_b_ref, c_b_ref,
                        wi_ref, bi_ref, wc_ref, bc_ref,
                        wfi_ref, wfc_ref, bf_ref,
                        wbi_ref, wbc_ref, bb_ref,
                        whhf_ref, whhb_ref,
                        hf_out_ref, hb_out_ref,
                        gxf_sc, gxb_sc, hseq_f_sc, hseq_b_sc,
                        hf_sc, cf_sc, hb_sc, cb_sc, *, tc, unroll):
    @pl.when(pl.program_id(0) == 0)
    def _():
        hf_sc[...] = jnp.zeros_like(hf_sc)
        cf_sc[...] = jnp.zeros_like(cf_sc)
        hb_sc[...] = jnp.zeros_like(hb_sc)
        cb_sc[...] = jnp.zeros_like(cb_sc)

    bf16 = jnp.bfloat16
    B, H = hf_sc.shape

    def gates(x3, c3, w_ih_i, w_ih_c, bg):
        n = x3.shape[0] * x3.shape[1]
        ih = _lrelu(jnp.dot(x3.reshape(n, -1).astype(bf16), wi_ref[...],
                            preferred_element_type=jnp.float32) + bi_ref[...])
        ch = _lrelu(jnp.dot(c3.reshape(n, -1).astype(bf16), wc_ref[...],
                            preferred_element_type=jnp.float32) + bc_ref[...])
        g = (jnp.dot(ih.astype(bf16), w_ih_i,
                     preferred_element_type=jnp.float32)
             + jnp.dot(ch.astype(bf16), w_ih_c,
                       preferred_element_type=jnp.float32)
             + bg)
        return g.reshape(tc, B, 4 * H)

    # Prologue: gate pre-activations for this chunk, both directions (no HBM
    # round-trip for the (tc,B,4H) intermediates).
    gxf_sc[...] = gates(x_f_ref[...], c_f_ref[...],
                        wfi_ref[...], wfc_ref[...], bf_ref[...])
    gxb_sc[...] = gates(x_b_ref[...], c_b_ref[...],
                        wbi_ref[...], wbc_ref[...], bb_ref[...])

    _lstm_chunk_recurrence(gxf_sc, gxb_sc, whhf_ref, whhb_ref,
                           hseq_f_sc, hseq_b_sc,
                           hf_sc, cf_sc, hb_sc, cb_sc, tc, unroll)

    # Bulk bf16 writeback (halves the inter-layer HBM stream).
    hf_out_ref[...] = hseq_f_sc[...].astype(hf_out_ref.dtype)
    hb_out_ref[...] = hseq_b_sc[...].astype(hb_out_ref.dtype)


def lstm_layer0(x, c, p):
    T, B, i_size = x.shape
    c_size = c.shape[2]
    H = p["l0_f_whh"].shape[0]

    weights = (p["i_fc_w"], p["i_fc_b"], p["c_fc_w"], p["c_fc_b"],
               p["l0_f_wih_i"], p["l0_f_wih_c"], p["l0_f_b"],
               p["l0_b_wih_i"], p["l0_b_wih_c"], p["l0_b_b"],
               p["l0_f_whh"], p["l0_b_whh"])

    per_step = B * (2 * 4 * H * 4                     # gate scratch (f32 x2)
                    + 2 * H * 4                       # h-sequence scratch
                    + 2 * 2 * (i_size + c_size) * 4   # fwd+bwd inputs, 2 bufs
                    + 2 * 2 * H * 2)                  # bf16 outputs, 2 bufs
    fixed = 2 * _nbytes(*weights) + 4 * B * H * 4 + (2 << 20)
    tc = _pick_time_chunk(T, per_step, fixed)
    nc = T // tc

    kernel = functools.partial(_layer0_lstm_kernel, tc=tc,
                               unroll=_unroll_for(tc))
    fwd_map = lambda ci: (ci, 0, 0)
    bwd_map = lambda ci: (nc - 1 - ci, 0, 0)
    cst = lambda ci: (0, 0)

    return pl.pallas_call(
        kernel,
        out_shape=(jax.ShapeDtypeStruct((T, B, H), jnp.bfloat16),
                   jax.ShapeDtypeStruct((T, B, H), jnp.bfloat16)),
        grid=(nc,),
        in_specs=[
            pl.BlockSpec((tc, B, i_size), fwd_map),
            pl.BlockSpec((tc, B, c_size), fwd_map),
            pl.BlockSpec((tc, B, i_size), bwd_map),
            pl.BlockSpec((tc, B, c_size), bwd_map),
        ] + [pl.BlockSpec(w.shape, cst) for w in weights],
        out_specs=(pl.BlockSpec((tc, B, H), fwd_map),
                   pl.BlockSpec((tc, B, H), bwd_map)),
        scratch_shapes=[
            pltpu.VMEM((tc, B, 4 * H), jnp.float32),   # gxf
            pltpu.VMEM((tc, B, 4 * H), jnp.float32),   # gxb
            pltpu.VMEM((tc, B, H), jnp.float32),       # h sequence fwd
            pltpu.VMEM((tc, B, H), jnp.float32),       # h sequence bwd
            pltpu.VMEM((B, H), jnp.float32),           # h carry fwd
            pltpu.VMEM((B, H), jnp.float32),           # c carry fwd
            pltpu.VMEM((B, H), jnp.float32),           # h carry bwd
            pltpu.VMEM((B, H), jnp.float32),           # c carry bwd
        ],
        compiler_params=pltpu.CompilerParams(
            dimension_semantics=("arbitrary",),        # carries live in scratch
            vmem_limit_bytes=_VMEM_LIMIT),
    )(x, c, x, c, *weights)


# ----------------------------------------------------------------------------
# Layer 1: input projection + bidir recurrence + fused o_fc epilogue
# ----------------------------------------------------------------------------
def _layer1_lstm_kernel(hf_f_ref, hb_f_ref, hf_b_ref, hb_b_ref,
                        wff_ref, wfb_ref, bf_ref,
                        wbf_ref, wbb_ref, bb_ref,
                        whhf_ref, whhb_ref,
                        wo_f_ref, wo_b_ref, bo_ref,
                        pf_out_ref, pb_out_ref,
                        gxf_sc, gxb_sc, hseq_f_sc, hseq_b_sc,
                        hf_sc, cf_sc, hb_sc, cb_sc, *, tc, unroll):
    @pl.when(pl.program_id(0) == 0)
    def _():
        hf_sc[...] = jnp.zeros_like(hf_sc)
        cf_sc[...] = jnp.zeros_like(cf_sc)
        hb_sc[...] = jnp.zeros_like(hb_sc)
        cb_sc[...] = jnp.zeros_like(cb_sc)

    bf16 = jnp.bfloat16
    B, H = hf_sc.shape

    def gates(a3, b3, w_a, w_b, bg):
        n = a3.shape[0] * a3.shape[1]
        g = (jnp.dot(a3.reshape(n, H), w_a,
                     preferred_element_type=jnp.float32)
             + jnp.dot(b3.reshape(n, H), w_b,
                       preferred_element_type=jnp.float32)
             + bg)
        return g.reshape(tc, B, 4 * H)

    gxf_sc[...] = gates(hf_f_ref[...], hb_f_ref[...],
                        wff_ref[...], wfb_ref[...], bf_ref[...])
    gxb_sc[...] = gates(hf_b_ref[...], hb_b_ref[...],
                        wbf_ref[...], wbb_ref[...], bb_ref[...])

    _lstm_chunk_recurrence(gxf_sc, gxb_sc, whhf_ref, whhb_ref,
                           hseq_f_sc, hseq_b_sc,
                           hf_sc, cf_sc, hb_sc, cb_sc, tc, unroll)

    # Fused o_fc epilogue: per-direction partial contributions (fwd/bwd chunks
    # cover different absolute times, so the add + sigmoid happens outside).
    n = tc * B
    pf = (jnp.dot(hseq_f_sc[...].reshape(n, H).astype(bf16), wo_f_ref[...],
                  preferred_element_type=jnp.float32) + bo_ref[...])
    pb = jnp.dot(hseq_b_sc[...].reshape(n, H).astype(bf16), wo_b_ref[...],
                 preferred_element_type=jnp.float32)
    pf_out_ref[...] = pf.reshape(tc, B, 1)
    pb_out_ref[...] = pb.reshape(tc, B, 1)


def lstm_layer1_with_output(hf0, hb0, p):
    T, B, H = hf0.shape

    weights = (p["l1_f_wih_hf"], p["l1_f_wih_hb"], p["l1_f_b"],
               p["l1_b_wih_hf"], p["l1_b_wih_hb"], p["l1_b_b"],
               p["l1_f_whh"], p["l1_b_whh"],
               p["o_w_f"], p["o_w_b"], p["o_b"])

    per_step = B * (2 * 4 * H * 4           # gate scratch
                    + 2 * H * 4             # h-sequence scratch
                    + 4 * 2 * H * 2         # 4 bf16 input streams, 2 bufs
                    + 2 * 2 * 4)            # (tc,B,1) partial outputs, 2 bufs
    fixed = 2 * _nbytes(*weights) + 4 * B * H * 4 + (2 << 20)
    tc = _pick_time_chunk(T, per_step, fixed)
    nc = T // tc

    kernel = functools.partial(_layer1_lstm_kernel, tc=tc,
                               unroll=_unroll_for(tc))
    fwd_map = lambda ci: (ci, 0, 0)
    bwd_map = lambda ci: (nc - 1 - ci, 0, 0)
    cst = lambda ci: (0, 0)

    return pl.pallas_call(
        kernel,
        out_shape=(jax.ShapeDtypeStruct((T, B, 1), jnp.float32),
                   jax.ShapeDtypeStruct((T, B, 1), jnp.float32)),
        grid=(nc,),
        in_specs=[
            pl.BlockSpec((tc, B, H), fwd_map),
            pl.BlockSpec((tc, B, H), fwd_map),
            pl.BlockSpec((tc, B, H), bwd_map),
            pl.BlockSpec((tc, B, H), bwd_map),
        ] + [pl.BlockSpec(w.shape, cst) for w in weights],
        out_specs=(pl.BlockSpec((tc, B, 1), fwd_map),
                   pl.BlockSpec((tc, B, 1), bwd_map)),
        scratch_shapes=[
            pltpu.VMEM((tc, B, 4 * H), jnp.float32),
            pltpu.VMEM((tc, B, 4 * H), jnp.float32),
            pltpu.VMEM((tc, B, H), jnp.float32),
            pltpu.VMEM((tc, B, H), jnp.float32),
            pltpu.VMEM((B, H), jnp.float32),
            pltpu.VMEM((B, H), jnp.float32),
            pltpu.VMEM((B, H), jnp.float32),
            pltpu.VMEM((B, H), jnp.float32),
        ],
        compiler_params=pltpu.CompilerParams(
            dimension_semantics=("arbitrary",),
            vmem_limit_bytes=_VMEM_LIMIT),
    )(hf0, hb0, hf0, hb0, *weights)


# ----------------------------------------------------------------------------
# Parameters (deterministic synthetic; shapes match the PyTorch module)
# ----------------------------------------------------------------------------
def init_params(key, i_size, c_size, h_size):
    H = h_size
    Hh = H // 2
    bf16 = jnp.bfloat16
    keys = iter(jax.random.split(key, 32))

    def uni(shape, scale):
        return jax.random.uniform(next(keys), shape, jnp.float32, -scale, scale)

    p = {}
    si, sc = 1.0 / np.sqrt(i_size), 1.0 / np.sqrt(c_size)
    p["i_fc_w"] = uni((i_size, Hh), si).astype(bf16)
    p["i_fc_b"] = uni((1, Hh), si)
    p["c_fc_w"] = uni((c_size, Hh), sc).astype(bf16)
    p["c_fc_b"] = uni((1, Hh), sc)

    s = 1.0 / np.sqrt(H)

    def lstm_dir(in_dim, split, name_a, name_b, name_whh, name_bias):
        # Per direction: W_ih^T (in_dim, 4H) split by which input half its rows
        # multiply; W_hh^T (H, 4H); b = b_ih + b_hh.
        wih = uni((in_dim, 4 * H), s)
        p[name_a] = wih[:split].astype(bf16)
        p[name_b] = wih[split:].astype(bf16)
        p[name_whh] = uni((H, 4 * H), s).astype(bf16)
        p[name_bias] = (uni((4 * H,), s) + uni((4 * H,), s)).reshape(1, 4 * H)

    # layer 0: input = [i_fc out | c_fc out] (width H)
    lstm_dir(H, Hh, "l0_f_wih_i", "l0_f_wih_c", "l0_f_whh", "l0_f_b")
    lstm_dir(H, Hh, "l0_b_wih_i", "l0_b_wih_c", "l0_b_whh", "l0_b_b")
    # layer 1: input = [h_fwd | h_bwd] (width 2H)
    lstm_dir(2 * H, H, "l1_f_wih_hf", "l1_f_wih_hb", "l1_f_whh", "l1_f_b")
    lstm_dir(2 * H, H, "l1_b_wih_hf", "l1_b_wih_hb", "l1_b_whh", "l1_b_b")

    so = 1.0 / np.sqrt(2 * H)
    w_o = uni((2 * H, 1), so)
    p["o_w_f"] = w_o[:H].astype(bf16)
    p["o_w_b"] = w_o[H:].astype(bf16)
    p["o_b"] = uni((1, 1), so)
    return p


# ----------------------------------------------------------------------------
# Discriminator forward (Pallas)
# ----------------------------------------------------------------------------
def discriminator_forward(params, x, c):
    """x: (T, B, i_size), c: (T, B, c_size) -> (T, B, 1)"""
    assert x.ndim == 3 and c.ndim == 3
    T, B = x.shape[0], x.shape[1]
    assert c.shape[0] == T and c.shape[1] == B

    hf0, hb0 = lstm_layer0(x, c, params)
    pf, pb = lstm_layer1_with_output(hf0, hb0, params)
    # Tiny (T,B,1) elementwise combine of the two fused-epilogue partials.
    return jax.nn.sigmoid(pf + pb)


# ----------------------------------------------------------------------------
# Pure-JAX reference (same bf16-weight / f32-accumulate math)
# ----------------------------------------------------------------------------
def _mm(a, w_bf16):
    return jnp.dot(a.astype(jnp.bfloat16), w_bf16,
                   preferred_element_type=jnp.float32)


def _ref_lstm_dir(gx, whh_bf16):
    """gx: (T, B, 4H) pre-projected gates (incl. biases); forward recurrence."""
    T, B, G4 = gx.shape
    H = G4 // 4

    def step(carry, g_x):
        h, cst = carry
        g = g_x + _mm(h, whh_bf16)
        i_g = jax.nn.sigmoid(g[:, 0 * H:1 * H])
        f_g = jax.nn.sigmoid(g[:, 1 * H:2 * H])
        g_g = jnp.tanh(g[:, 2 * H:3 * H])
        o_g = jax.nn.sigmoid(g[:, 3 * H:4 * H])
        cst = f_g * cst + i_g * g_g
        h = o_g * jnp.tanh(cst)
        return (h, cst), h

    init = (jnp.zeros((B, H), jnp.float32), jnp.zeros((B, H), jnp.float32))
    _, hs = lax.scan(step, init, gx)
    return hs


def discriminator_forward_ref(params, x, c):
    T, B = x.shape[0], x.shape[1]
    H = params["l0_f_whh"].shape[0]
    x_h = _lrelu(_mm(x.reshape(T * B, -1), params["i_fc_w"]) + params["i_fc_b"])
    c_h = _lrelu(_mm(c.reshape(T * B, -1), params["c_fc_w"]) + params["c_fc_b"])

    def layer(a, b, wa_f, wb_f, bias_f, whh_f, wa_b, wb_b, bias_b, whh_b):
        gx_f = (_mm(a, wa_f) + _mm(b, wb_f) + bias_f).reshape(T, B, 4 * H)
        gx_b = (_mm(a, wa_b) + _mm(b, wb_b) + bias_b).reshape(T, B, 4 * H)
        hf = _ref_lstm_dir(gx_f, whh_f)
        hb = jnp.flip(_ref_lstm_dir(jnp.flip(gx_b, 0), whh_b), 0)
        return hf, hb

    hf0, hb0 = layer(x_h, c_h,
                     params["l0_f_wih_i"], params["l0_f_wih_c"],
                     params["l0_f_b"], params["l0_f_whh"],
                     params["l0_b_wih_i"], params["l0_b_wih_c"],
                     params["l0_b_b"], params["l0_b_whh"])
    hf1, hb1 = layer(hf0.reshape(T * B, H), hb0.reshape(T * B, H),
                     params["l1_f_wih_hf"], params["l1_f_wih_hb"],
                     params["l1_f_b"], params["l1_f_whh"],
                     params["l1_b_wih_hf"], params["l1_b_wih_hb"],
                     params["l1_b_b"], params["l1_b_whh"])

    y = (_mm(hf1.reshape(T * B, H), params["o_w_f"])
         + _mm(hb1.reshape(T * B, H), params["o_w_b"]) + params["o_b"])
    return jax.nn.sigmoid(y).reshape(T, B, 1)


# ----------------------------------------------------------------------------
if __name__ == "__main__":
    # Small shapes consistent with Discriminator(i_size, c_size, h_size).
    T, B = 8, 8
    i_size, c_size, h_size = 4, 4, 32

    key = jax.random.PRNGKey(0)
    k_p, k_x, k_c = jax.random.split(key, 3)

    params = init_params(k_p, i_size, c_size, h_size)
    x = jax.random.normal(k_x, (T, B, i_size), jnp.float32)
    c = jax.random.normal(k_c, (T, B, c_size), jnp.float32)

    out = jax.block_until_ready(discriminator_forward(params, x, c))
    ref = jax.block_until_ready(discriminator_forward_ref(params, x, c))

    np.testing.assert_allclose(np.asarray(out), np.asarray(ref),
                               rtol=2e-2, atol=2e-2)
    assert out.shape == (T, B, 1)

    print("KERNEL_OK")
</pallas_src>

<mosaic_0001>
module attributes {stable_mosaic.version = 11 : i64} {
  func.func @_layer0_lstm_kernel(%arg0: i32, %arg1: memref<8x8x4xf32, #tpu.memory_space<vmem>>, %arg2: memref<8x8x4xf32, #tpu.memory_space<vmem>>, %arg3: memref<8x8x4xf32, #tpu.memory_space<vmem>>, %arg4: memref<8x8x4xf32, #tpu.memory_space<vmem>>, %arg5: memref<4x16xbf16, #tpu.memory_space<vmem>>, %arg6: memref<1x16xf32, #tpu.memory_space<vmem>>, %arg7: memref<4x16xbf16, #tpu.memory_space<vmem>>, %arg8: memref<1x16xf32, #tpu.memory_space<vmem>>, %arg9: memref<16x128xbf16, #tpu.memory_space<vmem>>, %arg10: memref<16x128xbf16, #tpu.memory_space<vmem>>, %arg11: memref<1x128xf32, #tpu.memory_space<vmem>>, %arg12: memref<16x128xbf16, #tpu.memory_space<vmem>>, %arg13: memref<16x128xbf16, #tpu.memory_space<vmem>>, %arg14: memref<1x128xf32, #tpu.memory_space<vmem>>, %arg15: memref<32x128xbf16, #tpu.memory_space<vmem>>, %arg16: memref<32x128xbf16, #tpu.memory_space<vmem>>, %arg17: memref<8x8x32xbf16, #tpu.memory_space<vmem>>, %arg18: memref<8x8x32xbf16, #tpu.memory_space<vmem>>, %arg19: memref<8x8x128xf32, #tpu.memory_space<vmem>>, %arg20: memref<8x8x128xf32, #tpu.memory_space<vmem>>, %arg21: memref<8x8x32xf32, #tpu.memory_space<vmem>>, %arg22: memref<8x8x32xf32, #tpu.memory_space<vmem>>, %arg23: memref<8x32xf32, #tpu.memory_space<vmem>>, %arg24: memref<8x32xf32, #tpu.memory_space<vmem>>, %arg25: memref<8x32xf32, #tpu.memory_space<vmem>>, %arg26: memref<8x32xf32, #tpu.memory_space<vmem>>) attributes {dimension_semantics = [#tpu.dimension_semantics<arbitrary>], iteration_bounds = array<i64: 1>, scalar_prefetch = 0 : i64, scratch_operands = 8 : i64, tpu.core_type = #tpu.core_type<tc>, window_params = [{transform_indices = @transform_0, window_bounds = array<i64: 8, 8, 4>}, {transform_indices = @transform_1, window_bounds = array<i64: 8, 8, 4>}, {transform_indices = @transform_2, window_bounds = array<i64: 8, 8, 4>}, {transform_indices = @transform_3, window_bounds = array<i64: 8, 8, 4>}, {pipeline_mode = #tpu.pipeline_mode<synchronous>, transform_indices = @transform_4, window_bounds = array<i64: 4, 16>}, {pipeline_mode = #tpu.pipeline_mode<synchronous>, transform_indices = @transform_5, window_bounds = array<i64: 1, 16>}, {pipeline_mode = #tpu.pipeline_mode<synchronous>, transform_indices = @transform_6, window_bounds = array<i64: 4, 16>}, {pipeline_mode = #tpu.pipeline_mode<synchronous>, transform_indices = @transform_7, window_bounds = array<i64: 1, 16>}, {pipeline_mode = #tpu.pipeline_mode<synchronous>, transform_indices = @transform_8, window_bounds = array<i64: 16, 128>}, {pipeline_mode = #tpu.pipeline_mode<synchronous>, transform_indices = @transform_9, window_bounds = array<i64: 16, 128>}, {pipeline_mode = #tpu.pipeline_mode<synchronous>, transform_indices = @transform_10, window_bounds = array<i64: 1, 128>}, {pipeline_mode = #tpu.pipeline_mode<synchronous>, transform_indices = @transform_11, window_bounds = array<i64: 16, 128>}, {pipeline_mode = #tpu.pipeline_mode<synchronous>, transform_indices = @transform_12, window_bounds = array<i64: 16, 128>}, {pipeline_mode = #tpu.pipeline_mode<synchronous>, transform_indices = @transform_13, window_bounds = array<i64: 1, 128>}, {pipeline_mode = #tpu.pipeline_mode<synchronous>, transform_indices = @transform_14, window_bounds = array<i64: 32, 128>}, {pipeline_mode = #tpu.pipeline_mode<synchronous>, transform_indices = @transform_15, window_bounds = array<i64: 32, 128>}, {transform_indices = @transform_16, window_bounds = array<i64: 8, 8, 32>}, {transform_indices = @transform_17, window_bounds = array<i64: 8, 8, 32>}]} {
    %c0_i32 = arith.constant 0 : i32
    %0 = arith.cmpi eq, %arg0, %c0_i32 : i32
    %1 = arith.extui %0 : i1 to i32
    %c0_i32_0 = arith.constant 0 : i32
    %2 = arith.cmpi ne, %1, %c0_i32_0 : i32
    scf.if %2 {
      %cst_378 = arith.constant 0.000000e+00 : f32
      %741 = vector.broadcast %cst_378 : f32 to vector<8x32xf32>
      %c0_379 = arith.constant 0 : index
      %c0_380 = arith.constant 0 : index
      %742 = vector.load %arg23[%c0_379, %c0_380] : memref<8x32xf32, #tpu.memory_space<vmem>>, vector<8x32xf32>
      tpu.vector_store %arg23[%c0_379, %c0_380], %741 {strides = array<i32>} : memref<8x32xf32, #tpu.memory_space<vmem>>, vector<8x32xf32>,
      %cst_381 = arith.constant 0.000000e+00 : f32
      %743 = vector.broadcast %cst_381 : f32 to vector<8x32xf32>
      %c0_382 = arith.constant 0 : index
      %c0_383 = arith.constant 0 : index
      %744 = vector.load %arg24[%c0_382, %c0_383] : memref<8x32xf32, #tpu.memory_space<vmem>>, vector<8x32xf32>
      tpu.vector_store %arg24[%c0_382, %c0_383], %743 {strides = array<i32>} : memref<8x32xf32, #tpu.memory_space<vmem>>, vector<8x32xf32>,
      %cst_384 = arith.constant 0.000000e+00 : f32
      %745 = vector.broadcast %cst_384 : f32 to vector<8x32xf32>
      %c0_385 = arith.constant 0 : index
      %c0_386 = arith.constant 0 : index
      %746 = vector.load %arg25[%c0_385, %c0_386] : memref<8x32xf32, #tpu.memory_space<vmem>>, vector<8x32xf32>
      tpu.vector_store %arg25[%c0_385, %c0_386], %745 {strides = array<i32>} : memref<8x32xf32, #tpu.memory_space<vmem>>, vector<8x32xf32>,
      %cst_387 = arith.constant 0.000000e+00 : f32
      %747 = vector.broadcast %cst_387 : f32 to vector<8x32xf32>
      %c0_388 = arith.constant 0 : index
      %c0_389 = arith.constant 0 : index
      %748 = vector.load %arg26[%c0_388, %c0_389] : memref<8x32xf32, #tpu.memory_space<vmem>>, vector<8x32xf32>
      tpu.vector_store %arg26[%c0_388, %c0_389], %747 {strides = array<i32>} : memref<8x32xf32, #tpu.memory_space<vmem>>, vector<8x32xf32>,
    } else {
    }
    %c0 = arith.constant 0 : index
    %c0_1 = arith.constant 0 : index
    %c0_2 = arith.constant 0 : index
    %3 = vector.load %arg1[%c0, %c0_1, %c0_2] : memref<8x8x4xf32, #tpu.memory_space<vmem>>, vector<8x8x4xf32>
    %c0_3 = arith.constant 0 : index
    %c0_4 = arith.constant 0 : index
    %c0_5 = arith.constant 0 : index
    %4 = vector.load %arg2[%c0_3, %c0_4, %c0_5] : memref<8x8x4xf32, #tpu.memory_space<vmem>>, vector<8x8x4xf32>
    %c0_6 = arith.constant 0 : index
    %c0_7 = arith.constant 0 : index
    %5 = vector.load %arg9[%c0_6, %c0_7] : memref<16x128xbf16, #tpu.memory_space<vmem>>, vector<16x128xbf16>
    %c0_8 = arith.constant 0 : index
    %c0_9 = arith.constant 0 : index
    %6 = vector.load %arg10[%c0_8, %c0_9] : memref<16x128xbf16, #tpu.memory_space<vmem>>, vector<16x128xbf16>
    %c0_10 = arith.constant 0 : index
    %c0_11 = arith.constant 0 : index
    %7 = vector.load %arg11[%c0_10, %c0_11] : memref<1x128xf32, #tpu.memory_space<vmem>>, vector<1x128xf32>
    %8 = vector.shape_cast %3 : vector<8x8x4xf32> to vector<64x4xf32>
    %9 = arith.truncf %8 : vector<64x4xf32> to vector<64x4xbf16>
    %c0_12 = arith.constant 0 : index
    %c0_13 = arith.constant 0 : index
    %10 = vector.load %arg5[%c0_12, %c0_13] : memref<4x16xbf16, #tpu.memory_space<vmem>>, vector<4x16xbf16>
    %cst = arith.constant dense<0.000000e+00> : vector<64x16xf32>
    %11 = tpu.matmul %9, %10, %cst {dimension_numbers = #tpu.dot_dimension_numbers<[1], [0], [0], [1], [0, 0, 1, 1], [], []>} : vector<64x4xbf16>, vector<4x16xbf16>, vector<64x16xf32> -> vector<64x16xf32>
    %c0_14 = arith.constant 0 : index
    %c0_15 = arith.constant 0 : index
    %12 = vector.load %arg6[%c0_14, %c0_15] : memref<1x16xf32, #tpu.memory_space<vmem>>, vector<1x16xf32>
    %13 = vector.broadcast %12 : vector<1x16xf32> to vector<64x16xf32>
    %14 = arith.addf %11, %13 : vector<64x16xf32>
    %cst_16 = arith.constant 0.000000e+00 : f32
    %15 = vector.broadcast %cst_16 : f32 to vector<64x16xf32>
    %16 = arith.cmpf ogt, %14, %15 : vector<64x16xf32>
    %cst_17 = arith.constant 0.00999999977 : f32
    %17 = vector.broadcast %cst_17 : f32 to vector<64x16xf32>
    %18 = arith.mulf %17, %14 : vector<64x16xf32>
    %19 = arith.select %16, %14, %18 : vector<64x16xi1>, vector<64x16xf32>
    %20 = vector.shape_cast %4 : vector<8x8x4xf32> to vector<64x4xf32>
    %21 = arith.truncf %20 : vector<64x4xf32> to vector<64x4xbf16>
    %c0_18 = arith.constant 0 : index
    %c0_19 = arith.constant 0 : index
    %22 = vector.load %arg7[%c0_18, %c0_19] : memref<4x16xbf16, #tpu.memory_space<vmem>>, vector<4x16xbf16>
    %cst_20 = arith.constant dense<0.000000e+00> : vector<64x16xf32>
    %23 = tpu.matmul %21, %22, %cst_20 {dimension_numbers = #tpu.dot_dimension_numbers<[1], [0], [0], [1], [0, 0, 1, 1], [], []>} : vector<64x4xbf16>, vector<4x16xbf16>, vector<64x16xf32> -> vector<64x16xf32>
    %c0_21 = arith.constant 0 : index
    %c0_22 = arith.constant 0 : index
    %24 = vector.load %arg8[%c0_21, %c0_22] : memref<1x16xf32, #tpu.memory_space<vmem>>, vector<1x16xf32>
    %25 = vector.broadcast %24 : vector<1x16xf32> to vector<64x16xf32>
    %26 = arith.addf %23, %25 : vector<64x16xf32>
    %cst_23 = arith.constant 0.000000e+00 : f32
    %27 = vector.broadcast %cst_23 : f32 to vector<64x16xf32>
    %28 = arith.cmpf ogt, %26, %27 : vector<64x16xf32>
    %cst_24 = arith.constant 0.00999999977 : f32
    %29 = vector.broadcast %cst_24 : f32 to vector<64x16xf32>
    %30 = arith.mulf %29, %26 : vector<64x16xf32>
    %31 = arith.select %28, %26, %30 : vector<64x16xi1>, vector<64x16xf32>
    %32 = arith.truncf %19 : vector<64x16xf32> to vector<64x16xbf16>
    %cst_25 = arith.constant dense<0.000000e+00> : vector<64x128xf32>
    %33 = tpu.matmul %32, %5, %cst_25 {dimension_numbers = #tpu.dot_dimension_numbers<[1], [0], [0], [1], [0, 0, 1, 1], [], []>} : vector<64x16xbf16>, vector<16x128xbf16>, vector<64x128xf32> -> vector<64x128xf32>
    %34 = arith.truncf %31 : vector<64x16xf32> to vector<64x16xbf16>
    %cst_26 = arith.constant dense<0.000000e+00> : vector<64x128xf32>
    %35 = tpu.matmul %34, %6, %cst_26 {dimension_numbers = #tpu.dot_dimension_numbers<[1], [0], [0], [1], [0, 0, 1, 1], [], []>} : vector<64x16xbf16>, vector<16x128xbf16>, vector<64x128xf32> -> vector<64x128xf32>
    %36 = arith.addf %33, %35 : vector<64x128xf32>
    %37 = vector.broadcast %7 : vector<1x128xf32> to vector<64x128xf32>
    %38 = arith.addf %36, %37 : vector<64x128xf32>
    %39 = vector.shape_cast %38 : vector<64x128xf32> to vector<8x8x128xf32>
    %c0_27 = arith.constant 0 : index
    %c0_28 = arith.constant 0 : index
    %c0_29 = arith.constant 0 : index
    %40 = vector.load %arg19[%c0_27, %c0_28, %c0_29] : memref<8x8x128xf32, #tpu.memory_space<vmem>>, vector<8x8x128xf32>
    tpu.vector_store %arg19[%c0_27, %c0_28, %c0_29], %39 {strides = array<i32>} : memref<8x8x128xf32, #tpu.memory_space<vmem>>, vector<8x8x128xf32>,
    %c0_30 = arith.constant 0 : index
    %c0_31 = arith.constant 0 : index
    %c0_32 = arith.constant 0 : index
    %41 = vector.load %arg3[%c0_30, %c0_31, %c0_32] : memref<8x8x4xf32, #tpu.memory_space<vmem>>, vector<8x8x4xf32>
    %c0_33 = arith.constant 0 : index
    %c0_34 = arith.constant 0 : index
    %c0_35 = arith.constant 0 : index
    %42 = vector.load %arg4[%c0_33, %c0_34, %c0_35] : memref<8x8x4xf32, #tpu.memory_space<vmem>>, vector<8x8x4xf32>
    %c0_36 = arith.constant 0 : index
    %c0_37 = arith.constant 0 : index
    %43 = vector.load %arg12[%c0_36, %c0_37] : memref<16x128xbf16, #tpu.memory_space<vmem>>, vector<16x128xbf16>
    %c0_38 = arith.constant 0 : index
    %c0_39 = arith.constant 0 : index
    %44 = vector.load %arg13[%c0_38, %c0_39] : memref<16x128xbf16, #tpu.memory_space<vmem>>, vector<16x128xbf16>
    %c0_40 = arith.constant 0 : index
    %c0_41 = arith.constant 0 : index
    %45 = vector.load %arg14[%c0_40, %c0_41] : memref<1x128xf32, #tpu.memory_space<vmem>>, vector<1x128xf32>
    %46 = vector.shape_cast %41 : vector<8x8x4xf32> to vector<64x4xf32>
    %47 = arith.truncf %46 : vector<64x4xf32> to vector<64x4xbf16>
    %c0_42 = arith.constant 0 : index
    %c0_43 = arith.constant 0 : index
    %48 = vector.load %arg5[%c0_42, %c0_43] : memref<4x16xbf16, #tpu.memory_space<vmem>>, vector<4x16xbf16>
    %cst_44 = arith.constant dense<0.000000e+00> : vector<64x16xf32>
    %49 = tpu.matmul %47, %48, %cst_44 {dimension_numbers = #tpu.dot_dimension_numbers<[1], [0], [0], [1], [0, 0, 1, 1], [], []>} : vector<64x4xbf16>, vector<4x16xbf16>, vector<64x16xf32> -> vector<64x16xf32>
    %c0_45 = arith.constant 0 : index
    %c0_46 = arith.constant 0 : index
    %50 = vector.load %arg6[%c0_45, %c0_46] : memref<1x16xf32, #tpu.memory_space<vmem>>, vector<1x16xf32>
    %51 = vector.broadcast %50 : vector<1x16xf32> to vector<64x16xf32>
    %52 = arith.addf %49, %51 : vector<64x16xf32>
    %cst_47 = arith.constant 0.000000e+00 : f32
    %53 = vector.broadcast %cst_47 : f32 to vector<64x16xf32>
    %54 = arith.cmpf ogt, %52, %53 : vector<64x16xf32>
    %cst_48 = arith.constant 0.00999999977 : f32
    %55 = vector.broadcast %cst_48 : f32 to vector<64x16xf32>
    %56 = arith.mulf %55, %52 : vector<64x16xf32>
    %57 = arith.select %54, %52, %56 : vector<64x16xi1>, vector<64x16xf32>
    %58 = vector.shape_cast %42 : vector<8x8x4xf32> to vector<64x4xf32>
    %59 = arith.truncf %58 : vector<64x4xf32> to vector<64x4xbf16>
    %c0_49 = arith.constant 0 : index
    %c0_50 = arith.constant 0 : index
    %60 = vector.load %arg7[%c0_49, %c0_50] : memref<4x16xbf16, #tpu.memory_space<vmem>>, vector<4x16xbf16>
    %cst_51 = arith.constant dense<0.000000e+00> : vector<64x16xf32>
    %61 = tpu.matmul %59, %60, %cst_51 {dimension_numbers = #tpu.dot_dimension_numbers<[1], [0], [0], [1], [0, 0, 1, 1], [], []>} : vector<64x4xbf16>, vector<4x16xbf16>, vector<64x16xf32> -> vector<64x16xf32>
    %c0_52 = arith.constant 0 : index
    %c0_53 = arith.constant 0 : index
    %62 = vector.load %arg8[%c0_52, %c0_53] : memref<1x16xf32, #tpu.memory_space<vmem>>, vector<1x16xf32>
    %63 = vector.broadcast %62 : vector<1x16xf32> to vector<64x16xf32>
    %64 = arith.addf %61, %63 : vector<64x16xf32>
    %cst_54 = arith.constant 0.000000e+00 : f32
    %65 = vector.broadcast %cst_54 : f32 to vector<64x16xf32>
    %66 = arith.cmpf ogt, %64, %65 : vector<64x16xf32>
    %cst_55 = arith.constant 0.00999999977 : f32
    %67 = vector.broadcast %cst_55 : f32 to vector<64x16xf32>
    %68 = arith.mulf %67, %64 : vector<64x16xf32>
    %69 = arith.select %66, %64, %68 : vector<64x16xi1>, vector<64x16xf32>
    %70 = arith.truncf %57 : vector<64x16xf32> to vector<64x16xbf16>
    %cst_56 = arith.constant dense<0.000000e+00> : vector<64x128xf32>
    %71 = tpu.matmul %70, %43, %cst_56 {dimension_numbers = #tpu.dot_dimension_numbers<[1], [0], [0], [1], [0, 0, 1, 1], [], []>} : vector<64x16xbf16>, vector<16x128xbf16>, vector<64x128xf32> -> vector<64x128xf32>
    %72 = arith.truncf %69 : vector<64x16xf32> to vector<64x16xbf16>
    %cst_57 = arith.constant dense<0.000000e+00> : vector<64x128xf32>
    %73 = tpu.matmul %72, %44, %cst_57 {dimension_numbers = #tpu.dot_dimension_numbers<[1], [0], [0], [1], [0, 0, 1, 1], [], []>} : vector<64x16xbf16>, vector<16x128xbf16>, vector<64x128xf32> -> vector<64x128xf32>
    %74 = arith.addf %71, %73 : vector<64x128xf32>
    %75 = vector.broadcast %45 : vector<1x128xf32> to vector<64x128xf32>
    %76 = arith.addf %74, %75 : vector<64x128xf32>
    %77 = vector.shape_cast %76 : vector<64x128xf32> to vector<8x8x128xf32>
    %c0_58 = arith.constant 0 : index
    %c0_59 = arith.constant 0 : index
    %c0_60 = arith.constant 0 : index
    %78 = vector.load %arg20[%c0_58, %c0_59, %c0_60] : memref<8x8x128xf32, #tpu.memory_space<vmem>>, vector<8x8x128xf32>
    tpu.vector_store %arg20[%c0_58, %c0_59, %c0_60], %77 {strides = array<i32>} : memref<8x8x128xf32, #tpu.memory_space<vmem>>, vector<8x8x128xf32>,
    %c0_i32_61 = arith.constant 0 : i32
    %c0_62 = arith.constant 0 : index
    %c0_63 = arith.constant 0 : index
    %79 = vector.load %arg23[%c0_62, %c0_63] : memref<8x32xf32, #tpu.memory_space<vmem>>, vector<8x32xf32>
    %80 = arith.truncf %79 : vector<8x32xf32> to vector<8x32xbf16>
    %c0_64 = arith.constant 0 : index
    %c0_65 = arith.constant 0 : index
    %81 = vector.load %arg15[%c0_64, %c0_65] : memref<32x128xbf16, #tpu.memory_space<vmem>>, vector<32x128xbf16>
    %cst_66 = arith.constant dense<0.000000e+00> : vector<8x128xf32>
    %82 = tpu.matmul %80, %81, %cst_66 {dimension_numbers = #tpu.dot_dimension_numbers<[1], [0], [0], [1], [0, 0, 1, 1], [], []>} : vector<8x32xbf16>, vector<32x128xbf16>, vector<8x128xf32> -> vector<8x128xf32>
    %c0_67 = arith.constant 0 : index
    %c0_68 = arith.constant 0 : index
    %83 = vector.load %arg25[%c0_67, %c0_68] : memref<8x32xf32, #tpu.memory_space<vmem>>, vector<8x32xf32>
    %84 = arith.truncf %83 : vector<8x32xf32> to vector<8x32xbf16>
    %c0_69 = arith.constant 0 : index
    %c0_70 = arith.constant 0 : index
    %85 = vector.load %arg16[%c0_69, %c0_70] : memref<32x128xbf16, #tpu.memory_space<vmem>>, vector<32x128xbf16>
    %cst_71 = arith.constant dense<0.000000e+00> : vector<8x128xf32>
    %86 = tpu.matmul %84, %85, %cst_71 {dimension_numbers = #tpu.dot_dimension_numbers<[1], [0], [0], [1], [0, 0, 1, 1], [], []>} : vector<8x32xbf16>, vector<32x128xbf16>, vector<8x128xf32> -> vector<8x128xf32>
    %87 = arith.index_cast %c0_i32_61 : i32 to index
    %c0_72 = arith.constant 0 : index
    %c0_73 = arith.constant 0 : index
    %88 = vector.load %arg19[%87, %c0_72, %c0_73] : memref<8x8x128xf32, #tpu.memory_space<vmem>>, vector<1x8x128xf32>
    %89 = vector.shape_cast %88 : vector<1x8x128xf32> to vector<8x128xf32>
    %90 = arith.addf %89, %82 : vector<8x128xf32>
    %c0_74 = arith.constant 0 : index
    %c0_75 = arith.constant 0 : index
    %91 = vector.load %arg24[%c0_74, %c0_75] : memref<8x32xf32, #tpu.memory_space<vmem>>, vector<8x32xf32>
    %92 = vector.extract_strided_slice %90 {offsets = [0, 0], sizes = [8, 32], strides = [1, 1]} : vector<8x128xf32> to vector<8x32xf32>
    %93 = arith.negf %92 : vector<8x32xf32>
    %94 = math.exp %93 : vector<8x32xf32>
    %cst_76 = arith.constant 1.000000e+00 : f32
    %95 = vector.broadcast %cst_76 : f32 to vector<8x32xf32>
    %96 = arith.addf %95, %94 : vector<8x32xf32>
    %97 = arith.divf %95, %96 : vector<8x32xf32>
    %98 = vector.extract_strided_slice %90 {offsets = [0, 32], sizes = [8, 32], strides = [1, 1]} : vector<8x128xf32> to vector<8x32xf32>
    %99 = arith.negf %98 : vector<8x32xf32>
    %100 = math.exp %99 : vector<8x32xf32>
    %cst_77 = arith.constant 1.000000e+00 : f32
    %101 = vector.broadcast %cst_77 : f32 to vector<8x32xf32>
    %102 = arith.addf %101, %100 : vector<8x32xf32>
    %103 = arith.divf %101, %102 : vector<8x32xf32>
    %104 = vector.extract_strided_slice %90 {offsets = [0, 64], sizes = [8, 32], strides = [1, 1]} : vector<8x128xf32> to vector<8x32xf32>
    %105 = math.tanh %104 : vector<8x32xf32>
    %106 = vector.extract_strided_slice %90 {offsets = [0, 96], sizes = [8, 32], strides = [1, 1]} : vector<8x128xf32> to vector<8x32xf32>
    %107 = arith.negf %106 : vector<8x32xf32>
    %108 = math.exp %107 : vector<8x32xf32>
    %cst_78 = arith.constant 1.000000e+00 : f32
    %109 = vector.broadcast %cst_78 : f32 to vector<8x32xf32>
    %110 = arith.addf %109, %108 : vector<8x32xf32>
    %111 = arith.divf %109, %110 : vector<8x32xf32>
    %112 = arith.mulf %103, %91 : vector<8x32xf32>
    %113 = arith.mulf %97, %105 : vector<8x32xf32>
    %114 = arith.addf %112, %113 : vector<8x32xf32>
    %115 = math.tanh %114 : vector<8x32xf32>
    %116 = arith.mulf %111, %115 : vector<8x32xf32>
    %c7_i32 = arith.constant 7 : i32
    %117 = arith.subi %c7_i32, %c0_i32_61 : i32
    %118 = arith.index_cast %117 : i32 to index
    %c0_79 = arith.constant 0 : index
    %c0_80 = arith.constant 0 : index
    %119 = vector.load %arg20[%118, %c0_79, %c0_80] : memref<8x8x128xf32, #tpu.memory_space<vmem>>, vector<1x8x128xf32>
    %120 = vector.shape_cast %119 : vector<1x8x128xf32> to vector<8x128xf32>
    %121 = arith.addf %120, %86 : vector<8x128xf32>
    %c0_81 = arith.constant 0 : index
    %c0_82 = arith.constant 0 : index
    %122 = vector.load %arg26[%c0_81, %c0_82] : memref<8x32xf32, #tpu.memory_space<vmem>>, vector<8x32xf32>
    %123 = vector.extract_strided_slice %121 {offsets = [0, 0], sizes = [8, 32], strides = [1, 1]} : vector<8x128xf32> to vector<8x32xf32>
    %124 = arith.negf %123 : vector<8x32xf32>
    %125 = math.exp %124 : vector<8x32xf32>
    %cst_83 = arith.constant 1.000000e+00 : f32
    %126 = vector.broadcast %cst_83 : f32 to vector<8x32xf32>
    %127 = arith.addf %126, %125 : vector<8x32xf32>
    %128 = arith.divf %126, %127 : vector<8x32xf32>
    %129 = vector.extract_strided_slice %121 {offsets = [0, 32], sizes = [8, 32], strides = [1, 1]} : vector<8x128xf32> to vector<8x32xf32>
    %130 = arith.negf %129 : vector<8x32xf32>
    %131 = math.exp %130 : vector<8x32xf32>
    %cst_84 = arith.constant 1.000000e+00 : f32
    %132 = vector.broadcast %cst_84 : f32 to vector<8x32xf32>
    %133 = arith.addf %132, %131 : vector<8x32xf32>
    %134 = arith.divf %132, %133 : vector<8x32xf32>
    %135 = vector.extract_strided_slice %121 {offsets = [0, 64], sizes = [8, 32], strides = [1, 1]} : vector<8x128xf32> to vector<8x32xf32>
    %136 = math.tanh %135 : vector<8x32xf32>
    %137 = vector.extract_strided_slice %121 {offsets = [0, 96], sizes = [8, 32], strides = [1, 1]} : vector<8x128xf32> to vector<8x32xf32>
    %138 = arith.negf %137 : vector<8x32xf32>
    %139 = math.exp %138 : vector<8x32xf32>
    %cst_85 = arith.constant 1.000000e+00 : f32
    %140 = vector.broadcast %cst_85 : f32 to vector<8x32xf32>
    %141 = arith.addf %140, %139 : vector<8x32xf32>
    %142 = arith.divf %140, %141 : vector<8x32xf32>
    %143 = arith.mulf %134, %122 : vector<8x32xf32>
    %144 = arith.mulf %128, %136 : vector<8x32xf32>
    %145 = arith.addf %143, %144 : vector<8x32xf32>
    %146 = math.tanh %145 : vector<8x32xf32>
    %147 = arith.mulf %142, %146 : vector<8x32xf32>
    %c0_86 = arith.constant 0 : index
    %c0_87 = arith.constant 0 : index
    %148 = vector.load %arg23[%c0_86, %c0_87] : memref<8x32xf32, #tpu.memory_space<vmem>>, vector<8x32xf32>
    tpu.vector_store %arg23[%c0_86, %c0_87], %116 {strides = array<i32>} : memref<8x32xf32, #tpu.memory_space<vmem>>, vector<8x32xf32>,
    %c0_88 = arith.constant 0 : index
    %c0_89 = arith.constant 0 : index
    %149 = vector.load %arg24[%c0_88, %c0_89] : memref<8x32xf32, #tpu.memory_space<vmem>>, vector<8x32xf32>
    tpu.vector_store %arg24[%c0_88, %c0_89], %114 {strides = array<i32>} : memref<8x32xf32, #tpu.memory_space<vmem>>, vector<8x32xf32>,
    %c0_90 = arith.constant 0 : index
    %c0_91 = arith.constant 0 : index
    %150 = vector.load %arg25[%c0_90, %c0_91] : memref<8x32xf32, #tpu.memory_space<vmem>>, vector<8x32xf32>
    tpu.vector_store %arg25[%c0_90, %c0_91], %147 {strides = array<i32>} : memref<8x32xf32, #tpu.memory_space<vmem>>, vector<8x32xf32>,
    %c0_92 = arith.constant 0 : index
    %c0_93 = arith.constant 0 : index
    %151 = vector.load %arg26[%c0_92, %c0_93] : memref<8x32xf32, #tpu.memory_space<vmem>>, vector<8x32xf32>
    tpu.vector_store %arg26[%c0_92, %c0_93], %145 {strides = array<i32>} : memref<8x32xf32, #tpu.memory_space<vmem>>, vector<8x32xf32>,
    %152 = arith.index_cast %c0_i32_61 : i32 to index
    %c0_94 = arith.constant 0 : index
    %c0_95 = arith.constant 0 : index
    %153 = vector.load %arg21[%152, %c0_94, %c0_95] : memref<8x8x32xf32, #tpu.memory_space<vmem>>, vector<1x8x32xf32>
    %154 = vector.shape_cast %153 : vector<1x8x32xf32> to vector<8x32xf32>
    %155 = vector.shape_cast %116 : vector<8x32xf32> to vector<1x8x32xf32>
    tpu.vector_store %arg21[%152, %c0_94, %c0_95], %155 {strides = array<i32>} : memref<8x8x32xf32, #tpu.memory_space<vmem>>, vector<1x8x32xf32>,
    %c7_i32_96 = arith.constant 7 : i32
    %156 = arith.subi %c7_i32_96, %c0_i32_61 : i32
    %157 = arith.index_cast %156 : i32 to index
    %c0_97 = arith.constant 0 : index
    %c0_98 = arith.constant 0 : index
    %158 = vector.load %arg22[%157, %c0_97, %c0_98] : memref<8x8x32xf32, #tpu.memory_space<vmem>>, vector<1x8x32xf32>
    %159 = vector.shape_cast %158 : vector<1x8x32xf32> to vector<8x32xf32>
    %160 = vector.shape_cast %147 : vector<8x32xf32> to vector<1x8x32xf32>
    tpu.vector_store %arg22[%157, %c0_97, %c0_98], %160 {strides = array<i32>} : memref<8x8x32xf32, #tpu.memory_space<vmem>>, vector<1x8x32xf32>,
    %c1_i32 = arith.constant 1 : i32
    %c0_99 = arith.constant 0 : index
    %c0_100 = arith.constant 0 : index
    %161 = vector.load %arg23[%c0_99, %c0_100] : memref<8x32xf32, #tpu.memory_space<vmem>>, vector<8x32xf32>
    %162 = arith.truncf %161 : vector<8x32xf32> to vector<8x32xbf16>
    %c0_101 = arith.constant 0 : index
    %c0_102 = arith.constant 0 : index
    %163 = vector.load %arg15[%c0_101, %c0_102] : memref<32x128xbf16, #tpu.memory_space<vmem>>, vector<32x128xbf16>
    %cst_103 = arith.constant dense<0.000000e+00> : vector<8x128xf32>
    %164 = tpu.matmul %162, %163, %cst_103 {dimension_numbers = #tpu.dot_dimension_numbers<[1], [0], [0], [1], [0, 0, 1, 1], [], []>} : vector<8x32xbf16>, vector<32x128xbf16>, vector<8x128xf32> -> vector<8x128xf32>
    %c0_104 = arith.constant 0 : index
    %c0_105 = arith.constant 0 : index
    %165 = vector.load %arg25[%c0_104, %c0_105] : memref<8x32xf32, #tpu.memory_space<vmem>>, vector<8x32xf32>
    %166 = arith.truncf %165 : vector<8x32xf32> to vector<8x32xbf16>
    %c0_106 = arith.constant 0 : index
    %c0_107 = arith.constant 0 : index
    %167 = vector.load %arg16[%c0_106, %c0_107] : memref<32x128xbf16, #tpu.memory_space<vmem>>, vector<32x128xbf16>
    %cst_108 = arith.constant dense<0.000000e+00> : vector<8x128xf32>
    %168 = tpu.matmul %166, %167, %cst_108 {dimension_numbers = #tpu.dot_dimension_numbers<[1], [0], [0], [1], [0, 0, 1, 1], [], []>} : vector<8x32xbf16>, vector<32x128xbf16>, vector<8x128xf32> -> vector<8x128xf32>
    %169 = arith.index_cast %c1_i32 : i32 to index
    %c0_109 = arith.constant 0 : index
    %c0_110 = arith.constant 0 : index
    %170 = vector.load %arg19[%169, %c0_109, %c0_110] : memref<8x8x128xf32, #tpu.memory_space<vmem>>, vector<1x8x128xf32>
    %171 = vector.shape_cast %170 : vector<1x8x128xf32> to vector<8x128xf32>
    %172 = arith.addf %171, %164 : vector<8x128xf32>
    %c0_111 = arith.constant 0 : index
    %c0_112 = arith.constant 0 : index
    %173 = vector.load %arg24[%c0_111, %c0_112] : memref<8x32xf32, #tpu.memory_space<vmem>>, vector<8x32xf32>
    %174 = vector.extract_strided_slice %172 {offsets = [0, 0], sizes = [8, 32], strides = [1, 1]} : vector<8x128xf32> to vector<8x32xf32>
    %175 = arith.negf %174 : vector<8x32xf32>
    %176 = math.exp %175 : vector<8x32xf32>
    %cst_113 = arith.constant 1.000000e+00 : f32
    %177 = vector.broadcast %cst_113 : f32 to vector<8x32xf32>
    %178 = arith.addf %177, %176 : vector<8x32xf32>
    %179 = arith.divf %177, %178 : vector<8x32xf32>
    %180 = vector.extract_strided_slice %172 {offsets = [0, 32], sizes = [8, 32], strides = [1, 1]} : vector<8x128xf32> to vector<8x32xf32>
    %181 = arith.negf %180 : vector<8x32xf32>
    %182 = math.exp %181 : vector<8x32xf32>
    %cst_114 = arith.constant 1.000000e+00 : f32
    %183 = vector.broadcast %cst_114 : f32 to vector<8x32xf32>
    %184 = arith.addf %183, %182 : vector<8x32xf32>
    %185 = arith.divf %183, %184 : vector<8x32xf32>
    %186 = vector.extract_strided_slice %172 {offsets = [0, 64], sizes = [8, 32], strides = [1, 1]} : vector<8x128xf32> to vector<8x32xf32>
    %187 = math.tanh %186 : vector<8x32xf32>
    %188 = vector.extract_strided_slice %172 {offsets = [0, 96], sizes = [8, 32], strides = [1, 1]} : vector<8x128xf32> to vector<8x32xf32>
    %189 = arith.negf %188 : vector<8x32xf32>
    %190 = math.exp %189 : vector<8x32xf32>
    %cst_115 = arith.constant 1.000000e+00 : f32
    %191 = vector.broadcast %cst_115 : f32 to vector<8x32xf32>
    %192 = arith.addf %191, %190 : vector<8x32xf32>
    %193 = arith.divf %191, %192 : vector<8x32xf32>
    %194 = arith.mulf %185, %173 : vector<8x32xf32>
    %195 = arith.mulf %179, %187 : vector<8x32xf32>
    %196 = arith.addf %194, %195 : vector<8x32xf32>
    %197 = math.tanh %196 : vector<8x32xf32>
    %198 = arith.mulf %193, %197 : vector<8x32xf32>
    %c7_i32_116 = arith.constant 7 : i32
    %199 = arith.subi %c7_i32_116, %c1_i32 : i32
    %200 = arith.index_cast %199 : i32 to index
    %c0_117 = arith.constant 0 : index
    %c0_118 = arith.constant 0 : index
    %201 = vector.load %arg20[%200, %c0_117, %c0_118] : memref<8x8x128xf32, #tpu.memory_space<vmem>>, vector<1x8x128xf32>
    %202 = vector.shape_cast %201 : vector<1x8x128xf32> to vector<8x128xf32>
    %203 = arith.addf %202, %168 : vector<8x128xf32>
    %c0_119 = arith.constant 0 : index
    %c0_120 = arith.constant 0 : index
    %204 = vector.load %arg26[%c0_119, %c0_120] : memref<8x32xf32, #tpu.memory_space<vmem>>, vector<8x32xf32>
    %205 = vector.extract_strided_slice %203 {offsets = [0, 0], sizes = [8, 32], strides = [1, 1]} : vector<8x128xf32> to vector<8x32xf32>
    %206 = arith.negf %205 : vector<8x32xf32>
    %207 = math.exp %206 : vector<8x32xf32>
    %cst_121 = arith.constant 1.000000e+00 : f32
    %208 = vector.broadcast %cst_121 : f32 to vector<8x32xf32>
    %209 = arith.addf %208, %207 : vector<8x32xf32>
    %210 = arith.divf %208, %209 : vector<8x32xf32>
    %211 = vector.extract_strided_slice %203 {offsets = [0, 32], sizes = [8, 32], strides = [1, 1]} : vector<8x128xf32> to vector<8x32xf32>
    %212 = arith.negf %211 : vector<8x32xf32>
    %213 = math.exp %212 : vector<8x32xf32>
    %cst_122 = arith.constant 1.000000e+00 : f32
    %214 = vector.broadcast %cst_122 : f32 to vector<8x32xf32>
    %215 = arith.addf %214, %213 : vector<8x32xf32>
    %216 = arith.divf %214, %215 : vector<8x32xf32>
    %217 = vector.extract_strided_slice %203 {offsets = [0, 64], sizes = [8, 32], strides = [1, 1]} : vector<8x128xf32> to vector<8x32xf32>
    %218 = math.tanh %217 : vector<8x32xf32>
    %219 = vector.extract_strided_slice %203 {offsets = [0, 96], sizes = [8, 32], strides = [1, 1]} : vector<8x128xf32> to vector<8x32xf32>
    %220 = arith.negf %219 : vector<8x32xf32>
    %221 = math.exp %220 : vector<8x32xf32>
    %cst_123 = arith.constant 1.000000e+00 : f32
    %222 = vector.broadcast %cst_123 : f32 to vector<8x32xf32>
    %223 = arith.addf %222, %221 : vector<8x32xf32>
    %224 = arith.divf %222, %223 : vector<8x32xf32>
    %225 = arith.mulf %216, %204 : vector<8x32xf32>
    %226 = arith.mulf %210, %218 : vector<8x32xf32>
    %227 = arith.addf %225, %226 : vector<8x32xf32>
    %228 = math.tanh %227 : vector<8x32xf32>
    %229 = arith.mulf %224, %228 : vector<8x32xf32>
    %c0_124 = arith.constant 0 : index
    %c0_125 = arith.constant 0 : index
    %230 = vector.load %arg23[%c0_124, %c0_125] : memref<8x32xf32, #tpu.memory_space<vmem>>, vector<8x32xf32>
    tpu.vector_store %arg23[%c0_124, %c0_125], %198 {strides = array<i32>} : memref<8x32xf32, #tpu.memory_space<vmem>>, vector<8x32xf32>,
    %c0_126 = arith.constant 0 : index
    %c0_127 = arith.constant 0 : index
    %231 = vector.load %arg24[%c0_126, %c0_127] : memref<8x32xf32, #tpu.memory_space<vmem>>, vector<8x32xf32>
    tpu.vector_store %arg24[%c0_126, %c0_127], %196 {strides = array<i32>} : memref<8x32xf32, #tpu.memory_space<vmem>>, vector<8x32xf32>,
    %c0_128 = arith.constant 0 : index
    %c0_129 = arith.constant 0 : index
    %232 = vector.load %arg25[%c0_128, %c0_129] : memref<8x32xf32, #tpu.memory_space<vmem>>, vector<8x32xf32>
    tpu.vector_store %arg25[%c0_128, %c0_129], %229 {strides = array<i32>} : memref<8x32xf32, #tpu.memory_space<vmem>>, vector<8x32xf32>,
    %c0_130 = arith.constant 0 : index
    %c0_131 = arith.constant 0 : index
    %233 = vector.load %arg26[%c0_130, %c0_131] : memref<8x32xf32, #tpu.memory_space<vmem>>, vector<8x32xf32>
    tpu.vector_store %arg26[%c0_130, %c0_131], %227 {strides = array<i32>} : memref<8x32xf32, #tpu.memory_space<vmem>>, vector<8x32xf32>,
    %234 = arith.index_cast %c1_i32 : i32 to index
    %c0_132 = arith.constant 0 : index
    %c0_133 = arith.constant 0 : index
    %235 = vector.load %arg21[%234, %c0_132, %c0_133] : memref<8x8x32xf32, #tpu.memory_space<vmem>>, vector<1x8x32xf32>
    %236 = vector.shape_cast %235 : vector<1x8x32xf32> to vector<8x32xf32>
    %237 = vector.shape_cast %198 : vector<8x32xf32> to vector<1x8x32xf32>
    tpu.vector_store %arg21[%234, %c0_132, %c0_133], %237 {strides = array<i32>} : memref<8x8x32xf32, #tpu.memory_space<vmem>>, vector<1x8x32xf32>,
    %c7_i32_134 = arith.constant 7 : i32
    %238 = arith.subi %c7_i32_134, %c1_i32 : i32
    %239 = arith.index_cast %238 : i32 to index
    %c0_135 = arith.constant 0 : index
    %c0_136 = arith.constant 0 : index
    %240 = vector.load %arg22[%239, %c0_135, %c0_136] : memref<8x8x32xf32, #tpu.memory_space<vmem>>, vector<1x8x32xf32>
    %241 = vector.shape_cast %240 : vector<1x8x32xf32> to vector<8x32xf32>
    %242 = vector.shape_cast %229 : vector<8x32xf32> to vector<1x8x32xf32>
    tpu.vector_store %arg22[%239, %c0_135, %c0_136], %242 {strides = array<i32>} : memref<8x8x32xf32, #tpu.memory_space<vmem>>, vector<1x8x32xf32>,
    %c2_i32 = arith.constant 2 : i32
    %c0_137 = arith.constant 0 : index
    %c0_138 = arith.constant 0 : index
    %243 = vector.load %arg23[%c0_137, %c0_138] : memref<8x32xf32, #tpu.memory_space<vmem>>, vector<8x32xf32>
    %244 = arith.truncf %243 : vector<8x32xf32> to vector<8x32xbf16>
    %c0_139 = arith.constant 0 : index
    %c0_140 = arith.constant 0 : index
    %245 = vector.load %arg15[%c0_139, %c0_140] : memref<32x128xbf16, #tpu.memory_space<vmem>>, vector<32x128xbf16>
    %cst_141 = arith.constant dense<0.000000e+00> : vector<8x128xf32>
    %246 = tpu.matmul %244, %245, %cst_141 {dimension_numbers = #tpu.dot_dimension_numbers<[1], [0], [0], [1], [0, 0, 1, 1], [], []>} : vector<8x32xbf16>, vector<32x128xbf16>, vector<8x128xf32> -> vector<8x128xf32>
    %c0_142 = arith.constant 0 : index
    %c0_143 = arith.constant 0 : index
    %247 = vector.load %arg25[%c0_142, %c0_143] : memref<8x32xf32, #tpu.memory_space<vmem>>, vector<8x32xf32>
    %248 = arith.truncf %247 : vector<8x32xf32> to vector<8x32xbf16>
    %c0_144 = arith.constant 0 : index
    %c0_145 = arith.constant 0 : index
    %249 = vector.load %arg16[%c0_144, %c0_145] : memref<32x128xbf16, #tpu.memory_space<vmem>>, vector<32x128xbf16>
    %cst_146 = arith.constant dense<0.000000e+00> : vector<8x128xf32>
    %250 = tpu.matmul %248, %249, %cst_146 {dimension_numbers = #tpu.dot_dimension_numbers<[1], [0], [0], [1], [0, 0, 1, 1], [], []>} : vector<8x32xbf16>, vector<32x128xbf16>, vector<8x128xf32> -> vector<8x128xf32>
    %251 = arith.index_cast %c2_i32 : i32 to index
    %c0_147 = arith.constant 0 : index
    %c0_148 = arith.constant 0 : index
    %252 = vector.load %arg19[%251, %c0_147, %c0_148] : memref<8x8x128xf32, #tpu.memory_space<vmem>>, vector<1x8x128xf32>
    %253 = vector.shape_cast %252 : vector<1x8x128xf32> to vector<8x128xf32>
    %254 = arith.addf %253, %246 : vector<8x128xf32>
    %c0_149 = arith.constant 0 : index
    %c0_150 = arith.constant 0 : index
    %255 = vector.load %arg24[%c0_149, %c0_150] : memref<8x32xf32, #tpu.memory_space<vmem>>, vector<8x32xf32>
    %256 = vector.extract_strided_slice %254 {offsets = [0, 0], sizes = [8, 32], strides = [1, 1]} : vector<8x128xf32> to vector<8x32xf32>
    %257 = arith.negf %256 : vector<8x32xf32>
    %258 = math.exp %257 : vector<8x32xf32>
    %cst_151 = arith.constant 1.000000e+00 : f32
    %259 = vector.broadcast %cst_151 : f32 to vector<8x32xf32>
    %260 = arith.addf %259, %258 : vector<8x32xf32>
    %261 = arith.divf %259, %260 : vector<8x32xf32>
    %262 = vector.extract_strided_slice %254 {offsets = [0, 32], sizes = [8, 32], strides = [1, 1]} : vector<8x128xf32> to vector<8x32xf32>
    %263 = arith.negf %262 : vector<8x32xf32>
    %264 = math.exp %263 : vector<8x32xf32>
    %cst_152 = arith.constant 1.000000e+00 : f32
    %265 = vector.broadcast %cst_152 : f32 to vector<8x32xf32>
    %266 = arith.addf %265, %264 : vector<8x32xf32>
    %267 = arith.divf %265, %266 : vector<8x32xf32>
    %268 = vector.extract_strided_slice %254 {offsets = [0, 64], sizes = [8, 32], strides = [1, 1]} : vector<8x128xf32> to vector<8x32xf32>
    %269 = math.tanh %268 : vector<8x32xf32>
    %270 = vector.extract_strided_slice %254 {offsets = [0, 96], sizes = [8, 32], strides = [1, 1]} : vector<8x128xf32> to vector<8x32xf32>
    %271 = arith.negf %270 : vector<8x32xf32>
    %272 = math.exp %271 : vector<8x32xf32>
    %cst_153 = arith.constant 1.000000e+00 : f32
    %273 = vector.broadcast %cst_153 : f32 to vector<8x32xf32>
    %274 = arith.addf %273, %272 : vector<8x32xf32>
    %275 = arith.divf %273, %274 : vector<8x32xf32>
    %276 = arith.mulf %267, %255 : vector<8x32xf32>
    %277 = arith.mulf %261, %269 : vector<8x32xf32>
    %278 = arith.addf %276, %277 : vector<8x32xf32>
    %279 = math.tanh %278 : vector<8x32xf32>
    %280 = arith.mulf %275, %279 : vector<8x32xf32>
    %c7_i32_154 = arith.constant 7 : i32
    %281 = arith.subi %c7_i32_154, %c2_i32 : i32
    %282 = arith.index_cast %281 : i32 to index
    %c0_155 = arith.constant 0 : index
    %c0_156 = arith.constant 0 : index
    %283 = vector.load %arg20[%282, %c0_155, %c0_156] : memref<8x8x128xf32, #tpu.memory_space<vmem>>, vector<1x8x128xf32>
    %284 = vector.shape_cast %283 : vector<1x8x128xf32> to vector<8x128xf32>
    %285 = arith.addf %284, %250 : vector<8x128xf32>
    %c0_157 = arith.constant 0 : index
    %c0_158 = arith.constant 0 : index
    %286 = vector.load %arg26[%c0_157, %c0_158] : memref<8x32xf32, #tpu.memory_space<vmem>>, vector<8x32xf32>
    %287 = vector.extract_strided_slice %285 {offsets = [0, 0], sizes = [8, 32], strides = [1, 1]} : vector<8x128xf32> to vector<8x32xf32>
    %288 = arith.negf %287 : vector<8x32xf32>
    %289 = math.exp %288 : vector<8x32xf32>
    %cst_159 = arith.constant 1.000000e+00 : f32
    %290 = vector.broadcast %cst_159 : f32 to vector<8x32xf32>
    %291 = arith.addf %290, %289 : vector<8x32xf32>
    %292 = arith.divf %290, %291 : vector<8x32xf32>
    %293 = vector.extract_strided_slice %285 {offsets = [0, 32], sizes = [8, 32], strides = [1, 1]} : vector<8x128xf32> to vector<8x32xf32>
    %294 = arith.negf %293 : vector<8x32xf32>
    %295 = math.exp %294 : vector<8x32xf32>
    %cst_160 = arith.constant 1.000000e+00 : f32
    %296 = vector.broadcast %cst_160 : f32 to vector<8x32xf32>
    %297 = arith.addf %296, %295 : vector<8x32xf32>
    %298 = arith.divf %296, %297 : vector<8x32xf32>
    %299 = vector.extract_strided_slice %285 {offsets = [0, 64], sizes = [8, 32], strides = [1, 1]} : vector<8x128xf32> to vector<8x32xf32>
    %300 = math.tanh %299 : vector<8x32xf32>
    %301 = vector.extract_strided_slice %285 {offsets = [0, 96], sizes = [8, 32], strides = [1, 1]} : vector<8x128xf32> to vector<8x32xf32>
    %302 = arith.negf %301 : vector<8x32xf32>
    %303 = math.exp %302 : vector<8x32xf32>
    %cst_161 = arith.constant 1.000000e+00 : f32
    %304 = vector.broadcast %cst_161 : f32 to vector<8x32xf32>
    %305 = arith.addf %304, %303 : vector<8x32xf32>
    %306 = arith.divf %304, %305 : vector<8x32xf32>
    %307 = arith.mulf %298, %286 : vector<8x32xf32>
    %308 = arith.mulf %292, %300 : vector<8x32xf32>
    %309 = arith.addf %307, %308 : vector<8x32xf32>
    %310 = math.tanh %309 : vector<8x32xf32>
    %311 = arith.mulf %306, %310 : vector<8x32xf32>
    %c0_162 = arith.constant 0 : index
    %c0_163 = arith.constant 0 : index
    %312 = vector.load %arg23[%c0_162, %c0_163] : memref<8x32xf32, #tpu.memory_space<vmem>>, vector<8x32xf32>
    tpu.vector_store %arg23[%c0_162, %c0_163], %280 {strides = array<i32>} : memref<8x32xf32, #tpu.memory_space<vmem>>, vector<8x32xf32>,
    %c0_164 = arith.constant 0 : index
    %c0_165 = arith.constant 0 : index
    %313 = vector.load %arg24[%c0_164, %c0_165] : memref<8x32xf32, #tpu.memory_space<vmem>>, vector<8x32xf32>
    tpu.vector_store %arg24[%c0_164, %c0_165], %278 {strides = array<i32>} : memref<8x32xf32, #tpu.memory_space<vmem>>, vector<8x32xf32>,
    %c0_166 = arith.constant 0 : index
    %c0_167 = arith.constant 0 : index
    %314 = vector.load %arg25[%c0_166, %c0_167] : memref<8x32xf32, #tpu.memory_space<vmem>>, vector<8x32xf32>
    tpu.vector_store %arg25[%c0_166, %c0_167], %311 {strides = array<i32>} : memref<8x32xf32, #tpu.memory_space<vmem>>, vector<8x32xf32>,
    %c0_168 = arith.constant 0 : index
    %c0_169 = arith.constant 0 : index
    %315 = vector.load %arg26[%c0_168, %c0_169] : memref<8x32xf32, #tpu.memory_space<vmem>>, vector<8x32xf32>
    tpu.vector_store %arg26[%c0_168, %c0_169], %309 {strides = array<i32>} : memref<8x32xf32, #tpu.memory_space<vmem>>, vector<8x32xf32>,
    %316 = arith.index_cast %c2_i32 : i32 to index
    %c0_170 = arith.constant 0 : index
    %c0_171 = arith.constant 0 : index
    %317 = vector.load %arg21[%316, %c0_170, %c0_171] : memref<8x8x32xf32, #tpu.memory_space<vmem>>, vector<1x8x32xf32>
    %318 = vector.shape_cast %317 : vector<1x8x32xf32> to vector<8x32xf32>
    %319 = vector.shape_cast %280 : vector<8x32xf32> to vector<1x8x32xf32>
    tpu.vector_store %arg21[%316, %c0_170, %c0_171], %319 {strides = array<i32>} : memref<8x8x32xf32, #tpu.memory_space<vmem>>, vector<1x8x32xf32>,
    %c7_i32_172 = arith.constant 7 : i32
    %320 = arith.subi %c7_i32_172, %c2_i32 : i32
    %321 = arith.index_cast %320 : i32 to index
    %c0_173 = arith.constant 0 : index
    %c0_174 = arith.constant 0 : index
    %322 = vector.load %arg22[%321, %c0_173, %c0_174] : memref<8x8x32xf32, #tpu.memory_space<vmem>>, vector<1x8x32xf32>
    %323 = vector.shape_cast %322 : vector<1x8x32xf32> to vector<8x32xf32>
    %324 = vector.shape_cast %311 : vector<8x32xf32> to vector<1x8x32xf32>
    tpu.vector_store %arg22[%321, %c0_173, %c0_174], %324 {strides = array<i32>} : memref<8x8x32xf32, #tpu.memory_space<vmem>>, vector<1x8x32xf32>,
    %c3_i32 = arith.constant 3 : i32
    %c0_175 = arith.constant 0 : index
    %c0_176 = arith.constant 0 : index
    %325 = vector.load %arg23[%c0_175, %c0_176] : memref<8x32xf32, #tpu.memory_space<vmem>>, vector<8x32xf32>
    %326 = arith.truncf %325 : vector<8x32xf32> to vector<8x32xbf16>
    %c0_177 = arith.constant 0 : index
    %c0_178 = arith.constant 0 : index
    %327 = vector.load %arg15[%c0_177, %c0_178] : memref<32x128xbf16, #tpu.memory_space<vmem>>, vector<32x128xbf16>
    %cst_179 = arith.constant dense<0.000000e+00> : vector<8x128xf32>
    %328 = tpu.matmul %326, %327, %cst_179 {dimension_numbers = #tpu.dot_dimension_numbers<[1], [0], [0], [1], [0, 0, 1, 1], [], []>} : vector<8x32xbf16>, vector<32x128xbf16>, vector<8x128xf32> -> vector<8x128xf32>
    %c0_180 = arith.constant 0 : index
    %c0_181 = arith.constant 0 : index
    %329 = vector.load %arg25[%c0_180, %c0_181] : memref<8x32xf32, #tpu.memory_space<vmem>>, vector<8x32xf32>
    %330 = arith.truncf %329 : vector<8x32xf32> to vector<8x32xbf16>
    %c0_182 = arith.constant 0 : index
    %c0_183 = arith.constant 0 : index
    %331 = vector.load %arg16[%c0_182, %c0_183] : memref<32x128xbf16, #tpu.memory_space<vmem>>, vector<32x128xbf16>
    %cst_184 = arith.constant dense<0.000000e+00> : vector<8x128xf32>
    %332 = tpu.matmul %330, %331, %cst_184 {dimension_numbers = #tpu.dot_dimension_numbers<[1], [0], [0], [1], [0, 0, 1, 1], [], []>} : vector<8x32xbf16>, vector<32x128xbf16>, vector<8x128xf32> -> vector<8x128xf32>
    %333 = arith.index_cast %c3_i32 : i32 to index
    %c0_185 = arith.constant 0 : index
    %c0_186 = arith.constant 0 : index
    %334 = vector.load %arg19[%333, %c0_185, %c0_186] : memref<8x8x128xf32, #tpu.memory_space<vmem>>, vector<1x8x128xf32>
    %335 = vector.shape_cast %334 : vector<1x8x128xf32> to vector<8x128xf32>
    %336 = arith.addf %335, %328 : vector<8x128xf32>
    %c0_187 = arith.constant 0 : index
    %c0_188 = arith.constant 0 : index
    %337 = vector.load %arg24[%c0_187, %c0_188] : memref<8x32xf32, #tpu.memory_space<vmem>>, vector<8x32xf32>
    %338 = vector.extract_strided_slice %336 {offsets = [0, 0], sizes = [8, 32], strides = [1, 1]} : vector<8x128xf32> to vector<8x32xf32>
    %339 = arith.negf %338 : vector<8x32xf32>
    %340 = math.exp %339 : vector<8x32xf32>
    %cst_189 = arith.constant 1.000000e+00 : f32
    %341 = vector.broadcast %cst_189 : f32 to vector<8x32xf32>
    %342 = arith.addf %341, %340 : vector<8x32xf32>
    %343 = arith.divf %341, %342 : vector<8x32xf32>
    %344 = vector.extract_strided_slice %336 {offsets = [0, 32], sizes = [8, 32], strides = [1, 1]} : vector<8x128xf32> to vector<8x32xf32>
    %345 = arith.negf %344 : vector<8x32xf32>
    %346 = math.exp %345 : vector<8x32xf32>
    %cst_190 = arith.constant 1.000000e+00 : f32
    %347 = vector.broadcast %cst_190 : f32 to vector<8x32xf32>
    %348 = arith.addf %347, %346 : vector<8x32xf32>
    %349 = arith.divf %347, %348 : vector<8x32xf32>
    %350 = vector.extract_strided_slice %336 {offsets = [0, 64], sizes = [8, 32], strides = [1, 1]} : vector<8x128xf32> to vector<8x32xf32>
    %351 = math.tanh %350 : vector<8x32xf32>
    %352 = vector.extract_strided_slice %336 {offsets = [0, 96], sizes = [8, 32], strides = [1, 1]} : vector<8x128xf32> to vector<8x32xf32>
    %353 = arith.negf %352 : vector<8x32xf32>
    %354 = math.exp %353 : vector<8x32xf32>
    %cst_191 = arith.constant 1.000000e+00 : f32
    %355 = vector.broadcast %cst_191 : f32 to vector<8x32xf32>
    %356 = arith.addf %355, %354 : vector<8x32xf32>
    %357 = arith.divf %355, %356 : vector<8x32xf32>
    %358 = arith.mulf %349, %337 : vector<8x32xf32>
    %359 = arith.mulf %343, %351 : vector<8x32xf32>
    %360 = arith.addf %358, %359 : vector<8x32xf32>
    %361 = math.tanh %360 : vector<8x32xf32>
    %362 = arith.mulf %357, %361 : vector<8x32xf32>
    %c7_i32_192 = arith.constant 7 : i32
    %363 = arith.subi %c7_i32_192, %c3_i32 : i32
    %364 = arith.index_cast %363 : i32 to index
    %c0_193 = arith.constant 0 : index
    %c0_194 = arith.constant 0 : index
    %365 = vector.load %arg20[%364, %c0_193, %c0_194] : memref<8x8x128xf32, #tpu.memory_space<vmem>>, vector<1x8x128xf32>
    %366 = vector.shape_cast %365 : vector<1x8x128xf32> to vector<8x128xf32>
    %367 = arith.addf %366, %332 : vector<8x128xf32>
    %c0_195 = arith.constant 0 : index
    %c0_196 = arith.constant 0 : index
    %368 = vector.load %arg26[%c0_195, %c0_196] : memref<8x32xf32, #tpu.memory_space<vmem>>, vector<8x32xf32>
    %369 = vector.extract_strided_slice %367 {offsets = [0, 0], sizes = [8, 32], strides = [1, 1]} : vector<8x128xf32> to vector<8x32xf32>
    %370 = arith.negf %369 : vector<8x32xf32>
    %371 = math.exp %370 : vector<8x32xf32>
    %cst_197 = arith.constant 1.000000e+00 : f32
    %372 = vector.broadcast %cst_197 : f32 to vector<8x32xf32>
    %373 = arith.addf %372, %371 : vector<8x32xf32>
    %374 = arith.divf %372, %373 : vector<8x32xf32>
    %375 = vector.extract_strided_slice %367 {offsets = [0, 32], sizes = [8, 32], strides = [1, 1]} : vector<8x128xf32> to vector<8x32xf32>
    %376 = arith.negf %375 : vector<8x32xf32>
    %377 = math.exp %376 : vector<8x32xf32>
    %cst_198 = arith.constant 1.000000e+00 : f32
    %378 = vector.broadcast %cst_198 : f32 to vector<8x32xf32>
    %379 = arith.addf %378, %377 : vector<8x32xf32>
    %380 = arith.divf %378, %379 : vector<8x32xf32>
    %381 = vector.extract_strided_slice %367 {offsets = [0, 64], sizes = [8, 32], strides = [1, 1]} : vector<8x128xf32> to vector<8x32xf32>
    %382 = math.tanh %381 : vector<8x32xf32>
    %383 = vector.extract_strided_slice %367 {offsets = [0, 96], sizes = [8, 32], strides = [1, 1]} : vector<8x128xf32> to vector<8x32xf32>
    %384 = arith.negf %383 : vector<8x32xf32>
    %385 = math.exp %384 : vector<8x32xf32>
    %cst_199 = arith.constant 1.000000e+00 : f32
    %386 = vector.broadcast %cst_199 : f32 to vector<8x32xf32>
    %387 = arith.addf %386, %385 : vector<8x32xf32>
    %388 = arith.divf %386, %387 : vector<8x32xf32>
    %389 = arith.mulf %380, %368 : vector<8x32xf32>
    %390 = arith.mulf %374, %382 : vector<8x32xf32>
    %391 = arith.addf %389, %390 : vector<8x32xf32>
    %392 = math.tanh %391 : vector<8x32xf32>
    %393 = arith.mulf %388, %392 : vector<8x32xf32>
    %c0_200 = arith.constant 0 : index
    %c0_201 = arith.constant 0 : index
    %394 = vector.load %arg23[%c0_200, %c0_201] : memref<8x32xf32, #tpu.memory_space<vmem>>, vector<8x32xf32>
    tpu.vector_store %arg23[%c0_200, %c0_201], %362 {strides = array<i32>} : memref<8x32xf32, #tpu.memory_space<vmem>>, vector<8x32xf32>,
    %c0_202 = arith.constant 0 : index
    %c0_203 = arith.constant 0 : index
    %395 = vector.load %arg24[%c0_202, %c0_203] : memref<8x32xf32, #tpu.memory_space<vmem>>, vector<8x32xf32>
    tpu.vector_store %arg24[%c0_202, %c0_203], %360 {strides = array<i32>} : memref<8x32xf32, #tpu.memory_space<vmem>>, vector<8x32xf32>,
    %c0_204 = arith.constant 0 : index
    %c0_205 = arith.constant 0 : index
    %396 = vector.load %arg25[%c0_204, %c0_205] : memref<8x32xf32, #tpu.memory_space<vmem>>, vector<8x32xf32>
    tpu.vector_store %arg25[%c0_204, %c0_205], %393 {strides = array<i32>} : memref<8x32xf32, #tpu.memory_space<vmem>>, vector<8x32xf32>,
    %c0_206 = arith.constant 0 : index
    %c0_207 = arith.constant 0 : index
    %397 = vector.load %arg26[%c0_206, %c0_207] : memref<8x32xf32, #tpu.memory_space<vmem>>, vector<8x32xf32>
    tpu.vector_store %arg26[%c0_206, %c0_207], %391 {strides = array<i32>} : memref<8x32xf32, #tpu.memory_space<vmem>>, vector<8x32xf32>,
    %398 = arith.index_cast %c3_i32 : i32 to index
    %c0_208 = arith.constant 0 : index
    %c0_209 = arith.constant 0 : index
    %399 = vector.load %arg21[%398, %c0_208, %c0_209] : memref<8x8x32xf32, #tpu.memory_space<vmem>>, vector<1x8x32xf32>
    %400 = vector.shape_cast %399 : vector<1x8x32xf32> to vector<8x32xf32>
    %401 = vector.shape_cast %362 : vector<8x32xf32> to vector<1x8x32xf32>
    tpu.vector_store %arg21[%398, %c0_208, %c0_209], %401 {strides = array<i32>} : memref<8x8x32xf32, #tpu.memory_space<vmem>>, vector<1x8x32xf32>,
    %c7_i32_210 = arith.constant 7 : i32
    %402 = arith.subi %c7_i32_210, %c3_i32 : i32
    %403 = arith.index_cast %402 : i32 to index
    %c0_211 = arith.constant 0 : index
    %c0_212 = arith.constant 0 : index
    %404 = vector.load %arg22[%403, %c0_211, %c0_212] : memref<8x8x32xf32, #tpu.memory_space<vmem>>, vector<1x8x32xf32>
    %405 = vector.shape_cast %404 : vector<1x8x32xf32> to vector<8x32xf32>
    %406 = vector.shape_cast %393 : vector<8x32xf32> to vector<1x8x32xf32>
    tpu.vector_store %arg22[%403, %c0_211, %c0_212], %406 {strides = array<i32>} : memref<8x8x32xf32, #tpu.memory_space<vmem>>, vector<1x8x32xf32>,
    %c4_i32 = arith.constant 4 : i32
    %c0_213 = arith.constant 0 : index
    %c0_214 = arith.constant 0 : index
    %407 = vector.load %arg23[%c0_213, %c0_214] : memref<8x32xf32, #tpu.memory_space<vmem>>, vector<8x32xf32>
    %408 = arith.truncf %407 : vector<8x32xf32> to vector<8x32xbf16>
    %c0_215 = arith.constant 0 : index
    %c0_216 = arith.constant 0 : index
    %409 = vector.load %arg15[%c0_215, %c0_216] : memref<32x128xbf16, #tpu.memory_space<vmem>>, vector<32x128xbf16>
    %cst_217 = arith.constant dense<0.000000e+00> : vector<8x128xf32>
    %410 = tpu.matmul %408, %409, %cst_217 {dimension_numbers = #tpu.dot_dimension_numbers<[1], [0], [0], [1], [0, 0, 1, 1], [], []>} : vector<8x32xbf16>, vector<32x128xbf16>, vector<8x128xf32> -> vector<8x128xf32>
    %c0_218 = arith.constant 0 : index
    %c0_219 = arith.constant 0 : index
    %411 = vector.load %arg25[%c0_218, %c0_219] : memref<8x32xf32, #tpu.memory_space<vmem>>, vector<8x32xf32>
    %412 = arith.truncf %411 : vector<8x32xf32> to vector<8x32xbf16>
    %c0_220 = arith.constant 0 : index
    %c0_221 = arith.constant 0 : index
    %413 = vector.load %arg16[%c0_220, %c0_221] : memref<32x128xbf16, #tpu.memory_space<vmem>>, vector<32x128xbf16>
    %cst_222 = arith.constant dense<0.000000e+00> : vector<8x128xf32>
    %414 = tpu.matmul %412, %413, %cst_222 {dimension_numbers = #tpu.dot_dimension_numbers<[1], [0], [0], [1], [0, 0, 1, 1], [], []>} : vector<8x32xbf16>, vector<32x128xbf16>, vector<8x128xf32> -> vector<8x128xf32>
    %415 = arith.index_cast %c4_i32 : i32 to index
    %c0_223 = arith.constant 0 : index
    %c0_224 = arith.constant 0 : index
    %416 = vector.load %arg19[%415, %c0_223, %c0_224] : memref<8x8x128xf32, #tpu.memory_space<vmem>>, vector<1x8x128xf32>
    %417 = vector.shape_cast %416 : vector<1x8x128xf32> to vector<8x128xf32>
    %418 = arith.addf %417, %410 : vector<8x128xf32>
    %c0_225 = arith.constant 0 : index
    %c0_226 = arith.constant 0 : index
    %419 = vector.load %arg24[%c0_225, %c0_226] : memref<8x32xf32, #tpu.memory_space<vmem>>, vector<8x32xf32>
    %420 = vector.extract_strided_slice %418 {offsets = [0, 0], sizes = [8, 32], strides = [1, 1]} : vector<8x128xf32> to vector<8x32xf32>
    %421 = arith.negf %420 : vector<8x32xf32>
    %422 = math.exp %421 : vector<8x32xf32>
    %cst_227 = arith.constant 1.000000e+00 : f32
    %423 = vector.broadcast %cst_227 : f32 to vector<8x32xf32>
    %424 = arith.addf %423, %422 : vector<8x32xf32>
    %425 = arith.divf %423, %424 : vector<8x32xf32>
    %426 = vector.extract_strided_slice %418 {offsets = [0, 32], sizes = [8, 32], strides = [1, 1]} : vector<8x128xf32> to vector<8x32xf32>
    %427 = arith.negf %426 : vector<8x32xf32>
    %428 = math.exp %427 : vector<8x32xf32>
    %cst_228 = arith.constant 1.000000e+00 : f32
    %429 = vector.broadcast %cst_228 : f32 to vector<8x32xf32>
    %430 = arith.addf %429, %428 : vector<8x32xf32>
    %431 = arith.divf %429, %430 : vector<8x32xf32>
    %432 = vector.extract_strided_slice %418 {offsets = [0, 64], sizes = [8, 32], strides = [1, 1]} : vector<8x128xf32> to vector<8x32xf32>
    %433 = math.tanh %432 : vector<8x32xf32>
    %434 = vector.extract_strided_slice %418 {offsets = [0, 96], sizes = [8, 32], strides = [1, 1]} : vector<8x128xf32> to vector<8x32xf32>
    %435 = arith.negf %434 : vector<8x32xf32>
    %436 = math.exp %435 : vector<8x32xf32>
    %cst_229 = arith.constant 1.000000e+00 : f32
    %437 = vector.broadcast %cst_229 : f32 to vector<8x32xf32>
    %438 = arith.addf %437, %436 : vector<8x32xf32>
    %439 = arith.divf %437, %438 : vector<8x32xf32>
    %440 = arith.mulf %431, %419 : vector<8x32xf32>
    %441 = arith.mulf %425, %433 : vector<8x32xf32>
    %442 = arith.addf %440, %441 : vector<8x32xf32>
    %443 = math.tanh %442 : vector<8x32xf32>
    %444 = arith.mulf %439, %443 : vector<8x32xf32>
    %c7_i32_230 = arith.constant 7 : i32
    %445 = arith.subi %c7_i32_230, %c4_i32 : i32
    %446 = arith.index_cast %445 : i32 to index
    %c0_231 = arith.constant 0 : index
    %c0_232 = arith.constant 0 : index
    %447 = vector.load %arg20[%446, %c0_231, %c0_232] : memref<8x8x128xf32, #tpu.memory_space<vmem>>, vector<1x8x128xf32>
    %448 = vector.shape_cast %447 : vector<1x8x128xf32> to vector<8x128xf32>
    %449 = arith.addf %448, %414 : vector<8x128xf32>
    %c0_233 = arith.constant 0 : index
    %c0_234 = arith.constant 0 : index
    %450 = vector.load %arg26[%c0_233, %c0_234] : memref<8x32xf32, #tpu.memory_space<vmem>>, vector<8x32xf32>
    %451 = vector.extract_strided_slice %449 {offsets = [0, 0], sizes = [8, 32], strides = [1, 1]} : vector<8x128xf32> to vector<8x32xf32>
    %452 = arith.negf %451 : vector<8x32xf32>
    %453 = math.exp %452 : vector<8x32xf32>
    %cst_235 = arith.constant 1.000000e+00 : f32
    %454 = vector.broadcast %cst_235 : f32 to vector<8x32xf32>
    %455 = arith.addf %454, %453 : vector<8x32xf32>
    %456 = arith.divf %454, %455 : vector<8x32xf32>
    %457 = vector.extract_strided_slice %449 {offsets = [0, 32], sizes = [8, 32], strides = [1, 1]} : vector<8x128xf32> to vector<8x32xf32>
    %458 = arith.negf %457 : vector<8x32xf32>
    %459 = math.exp %458 : vector<8x32xf32>
    %cst_236 = arith.constant 1.000000e+00 : f32
    %460 = vector.broadcast %cst_236 : f32 to vector<8x32xf32>
    %461 = arith.addf %460, %459 : vector<8x32xf32>
    %462 = arith.divf %460, %461 : vector<8x32xf32>
    %463 = vector.extract_strided_slice %449 {offsets = [0, 64], sizes = [8, 32], strides = [1, 1]} : vector<8x128xf32> to vector<8x32xf32>
    %464 = math.tanh %463 : vector<8x32xf32>
    %465 = vector.extract_strided_slice %449 {offsets = [0, 96], sizes = [8, 32], strides = [1, 1]} : vector<8x128xf32> to vector<8x32xf32>
    %466 = arith.negf %465 : vector<8x32xf32>
    %467 = math.exp %466 : vector<8x32xf32>
    %cst_237 = arith.constant 1.000000e+00 : f32
    %468 = vector.broadcast %cst_237 : f32 to vector<8x32xf32>
    %469 = arith.addf %468, %467 : vector<8x32xf32>
    %470 = arith.divf %468, %469 : vector<8x32xf32>
    %471 = arith.mulf %462, %450 : vector<8x32xf32>
    %472 = arith.mulf %456, %464 : vector<8x32xf32>
    %473 = arith.addf %471, %472 : vector<8x32xf32>
    %474 = math.tanh %473 : vector<8x32xf32>
    %475 = arith.mulf %470, %474 : vector<8x32xf32>
    %c0_238 = arith.constant 0 : index
    %c0_239 = arith.constant 0 : index
    %476 = vector.load %arg23[%c0_238, %c0_239] : memref<8x32xf32, #tpu.memory_space<vmem>>, vector<8x32xf32>
    tpu.vector_store %arg23[%c0_238, %c0_239], %444 {strides = array<i32>} : memref<8x32xf32, #tpu.memory_space<vmem>>, vector<8x32xf32>,
    %c0_240 = arith.constant 0 : index
    %c0_241 = arith.constant 0 : index
    %477 = vector.load %arg24[%c0_240, %c0_241] : memref<8x32xf32, #tpu.memory_space<vmem>>, vector<8x32xf32>
    tpu.vector_store %arg24[%c0_240, %c0_241], %442 {strides = array<i32>} : memref<8x32xf32, #tpu.memory_space<vmem>>, vector<8x32xf32>,
    %c0_242 = arith.constant 0 : index
    %c0_243 = arith.constant 0 : index
    %478 = vector.load %arg25[%c0_242, %c0_243] : memref<8x32xf32, #tpu.memory_space<vmem>>, vector<8x32xf32>
    tpu.vector_store %arg25[%c0_242, %c0_243], %475 {strides = array<i32>} : memref<8x32xf32, #tpu.memory_space<vmem>>, vector<8x32xf32>,
    %c0_244 = arith.constant 0 : index
    %c0_245 = arith.constant 0 : index
    %479 = vector.load %arg26[%c0_244, %c0_245] : memref<8x32xf32, #tpu.memory_space<vmem>>, vector<8x32xf32>
    tpu.vector_store %arg26[%c0_244, %c0_245], %473 {strides = array<i32>} : memref<8x32xf32, #tpu.memory_space<vmem>>, vector<8x32xf32>,
    %480 = arith.index_cast %c4_i32 : i32 to index
    %c0_246 = arith.constant 0 : index
    %c0_247 = arith.constant 0 : index
    %481 = vector.load %arg21[%480, %c0_246, %c0_247] : memref<8x8x32xf32, #tpu.memory_space<vmem>>, vector<1x8x32xf32>
    %482 = vector.shape_cast %481 : vector<1x8x32xf32> to vector<8x32xf32>
    %483 = vector.shape_cast %444 : vector<8x32xf32> to vector<1x8x32xf32>
    tpu.vector_store %arg21[%480, %c0_246, %c0_247], %483 {strides = array<i32>} : memref<8x8x32xf32, #tpu.memory_space<vmem>>, vector<1x8x32xf32>,
    %c7_i32_248 = arith.constant 7 : i32
    %484 = arith.subi %c7_i32_248, %c4_i32 : i32
    %485 = arith.index_cast %484 : i32 to index
    %c0_249 = arith.constant 0 : index
    %c0_250 = arith.constant 0 : index
    %486 = vector.load %arg22[%485, %c0_249, %c0_250] : memref<8x8x32xf32, #tpu.memory_space<vmem>>, vector<1x8x32xf32>
    %487 = vector.shape_cast %486 : vector<1x8x32xf32> to vector<8x32xf32>
    %488 = vector.shape_cast %475 : vector<8x32xf32> to vector<1x8x32xf32>
    tpu.vector_store %arg22[%485, %c0_249, %c0_250], %488 {strides = array<i32>} : memref<8x8x32xf32, #tpu.memory_space<vmem>>, vector<1x8x32xf32>,
    %c5_i32 = arith.constant 5 : i32
    %c0_251 = arith.constant 0 : index
    %c0_252 = arith.constant 0 : index
    %489 = vector.load %arg23[%c0_251, %c0_252] : memref<8x32xf32, #tpu.memory_space<vmem>>, vector<8x32xf32>
    %490 = arith.truncf %489 : vector<8x32xf32> to vector<8x32xbf16>
    %c0_253 = arith.constant 0 : index
    %c0_254 = arith.constant 0 : index
    %491 = vector.load %arg15[%c0_253, %c0_254] : memref<32x128xbf16, #tpu.memory_space<vmem>>, vector<32x128xbf16>
    %cst_255 = arith.constant dense<0.000000e+00> : vector<8x128xf32>
    %492 = tpu.matmul %490, %491, %cst_255 {dimension_numbers = #tpu.dot_dimension_numbers<[1], [0], [0], [1], [0, 0, 1, 1], [], []>} : vector<8x32xbf16>, vector<32x128xbf16>, vector<8x128xf32> -> vector<8x128xf32>
    %c0_256 = arith.constant 0 : index
    %c0_257 = arith.constant 0 : index
    %493 = vector.load %arg25[%c0_256, %c0_257] : memref<8x32xf32, #tpu.memory_space<vmem>>, vector<8x32xf32>
    %494 = arith.truncf %493 : vector<8x32xf32> to vector<8x32xbf16>
    %c0_258 = arith.constant 0 : index
    %c0_259 = arith.constant 0 : index
    %495 = vector.load %arg16[%c0_258, %c0_259] : memref<32x128xbf16, #tpu.memory_space<vmem>>, vector<32x128xbf16>
    %cst_260 = arith.constant dense<0.000000e+00> : vector<8x128xf32>
    %496 = tpu.matmul %494, %495, %cst_260 {dimension_numbers = #tpu.dot_dimension_numbers<[1], [0], [0], [1], [0, 0, 1, 1], [], []>} : vector<8x32xbf16>, vector<32x128xbf16>, vector<8x128xf32> -> vector<8x128xf32>
    %497 = arith.index_cast %c5_i32 : i32 to index
    %c0_261 = arith.constant 0 : index
    %c0_262 = arith.constant 0 : index
    %498 = vector.load %arg19[%497, %c0_261, %c0_262] : memref<8x8x128xf32, #tpu.memory_space<vmem>>, vector<1x8x128xf32>
    %499 = vector.shape_cast %498 : vector<1x8x128xf32> to vector<8x128xf32>
    %500 = arith.addf %499, %492 : vector<8x128xf32>
    %c0_263 = arith.constant 0 : index
    %c0_264 = arith.constant 0 : index
    %501 = vector.load %arg24[%c0_263, %c0_264] : memref<8x32xf32, #tpu.memory_space<vmem>>, vector<8x32xf32>
    %502 = vector.extract_strided_slice %500 {offsets = [0, 0], sizes = [8, 32], strides = [1, 1]} : vector<8x128xf32> to vector<8x32xf32>
    %503 = arith.negf %502 : vector<8x32xf32>
    %504 = math.exp %503 : vector<8x32xf32>
    %cst_265 = arith.constant 1.000000e+00 : f32
    %505 = vector.broadcast %cst_265 : f32 to vector<8x32xf32>
    %506 = arith.addf %505, %504 : vector<8x32xf32>
    %507 = arith.divf %505, %506 : vector<8x32xf32>
    %508 = vector.extract_strided_slice %500 {offsets = [0, 32], sizes = [8, 32], strides = [1, 1]} : vector<8x128xf32> to vector<8x32xf32>
    %509 = arith.negf %508 : vector<8x32xf32>
    %510 = math.exp %509 : vector<8x32xf32>
    %cst_266 = arith.constant 1.000000e+00 : f32
    %511 = vector.broadcast %cst_266 : f32 to vector<8x32xf32>
    %512 = arith.addf %511, %510 : vector<8x32xf32>
    %513 = arith.divf %511, %512 : vector<8x32xf32>
    %514 = vector.extract_strided_slice %500 {offsets = [0, 64], sizes = [8, 32], strides = [1, 1]} : vector<8x128xf32> to vector<8x32xf32>
    %515 = math.tanh %514 : vector<8x32xf32>
    %516 = vector.extract_strided_slice %500 {offsets = [0, 96], sizes = [8, 32], strides = [1, 1]} : vector<8x128xf32> to vector<8x32xf32>
    %517 = arith.negf %516 : vector<8x32xf32>
    %518 = math.exp %517 : vector<8x32xf32>
    %cst_267 = arith.constant 1.000000e+00 : f32
    %519 = vector.broadcast %cst_267 : f32 to vector<8x32xf32>
    %520 = arith.addf %519, %518 : vector<8x32xf32>
    %521 = arith.divf %519, %520 : vector<8x32xf32>
    %522 = arith.mulf %513, %501 : vector<8x32xf32>
    %523 = arith.mulf %507, %515 : vector<8x32xf32>
    %524 = arith.addf %522, %523 : vector<8x32xf32>
    %525 = math.tanh %524 : vector<8x32xf32>
    %526 = arith.mulf %521, %525 : vector<8x32xf32>
    %c7_i32_268 = arith.constant 7 : i32
    %527 = arith.subi %c7_i32_268, %c5_i32 : i32
    %528 = arith.index_cast %527 : i32 to index
    %c0_269 = arith.constant 0 : index
    %c0_270 = arith.constant 0 : index
    %529 = vector.load %arg20[%528, %c0_269, %c0_270] : memref<8x8x128xf32, #tpu.memory_space<vmem>>, vector<1x8x128xf32>
    %530 = vector.shape_cast %529 : vector<1x8x128xf32> to vector<8x128xf32>
    %531 = arith.addf %530, %496 : vector<8x128xf32>
    %c0_271 = arith.constant 0 : index
    %c0_272 = arith.constant 0 : index
    %532 = vector.load %arg26[%c0_271, %c0_272] : memref<8x32xf32, #tpu.memory_space<vmem>>, vector<8x32xf32>
    %533 = vector.extract_strided_slice %531 {offsets = [0, 0], sizes = [8, 32], strides = [1, 1]} : vector<8x128xf32> to vector<8x32xf32>
    %534 = arith.negf %533 : vector<8x32xf32>
    %535 = math.exp %534 : vector<8x32xf32>
    %cst_273 = arith.constant 1.000000e+00 : f32
    %536 = vector.broadcast %cst_273 : f32 to vector<8x32xf32>
    %537 = arith.addf %536, %535 : vector<8x32xf32>
    %538 = arith.divf %536, %537 : vector<8x32xf32>
    %539 = vector.extract_strided_slice %531 {offsets = [0, 32], sizes = [8, 32], strides = [1, 1]} : vector<8x128xf32> to vector<8x32xf32>
    %540 = arith.negf %539 : vector<8x32xf32>
    %541 = math.exp %540 : vector<8x32xf32>
    %cst_274 = arith.constant 1.000000e+00 : f32
    %542 = vector.broadcast %cst_274 : f32 to vector<8x32xf32>
    %543 = arith.addf %542, %541 : vector<8x32xf32>
    %544 = arith.divf %542, %543 : vector<8x32xf32>
    %545 = vector.extract_strided_slice %531 {offsets = [0, 64], sizes = [8, 32], strides = [1, 1]} : vector<8x128xf32> to vector<8x32xf32>
    %546 = math.tanh %545 : vector<8x32xf32>
    %547 = vector.extract_strided_slice %531 {offsets = [0, 96], sizes = [8, 32], strides = [1, 1]} : vector<8x128xf32> to vector<8x32xf32>
    %548 = arith.negf %547 : vector<8x32xf32>
    %549 = math.exp %548 : vector<8x32xf32>
    %cst_275 = arith.constant 1.000000e+00 : f32
    %550 = vector.broadcast %cst_275 : f32 to vector<8x32xf32>
    %551 = arith.addf %550, %549 : vector<8x32xf32>
    %552 = arith.divf %550, %551 : vector<8x32xf32>
    %553 = arith.mulf %544, %532 : vector<8x32xf32>
    %554 = arith.mulf %538, %546 : vector<8x32xf32>
    %555 = arith.addf %553, %554 : vector<8x32xf32>
    %556 = math.tanh %555 : vector<8x32xf32>
    %557 = arith.mulf %552, %556 : vector<8x32xf32>
    %c0_276 = arith.constant 0 : index
    %c0_277 = arith.constant 0 : index
    %558 = vector.load %arg23[%c0_276, %c0_277] : memref<8x32xf32, #tpu.memory_space<vmem>>, vector<8x32xf32>
    tpu.vector_store %arg23[%c0_276, %c0_277], %526 {strides = array<i32>} : memref<8x32xf32, #tpu.memory_space<vmem>>, vector<8x32xf32>,
    %c0_278 = arith.constant 0 : index
    %c0_279 = arith.constant 0 : index
    %559 = vector.load %arg24[%c0_278, %c0_279] : memref<8x32xf32, #tpu.memory_space<vmem>>, vector<8x32xf32>
    tpu.vector_store %arg24[%c0_278, %c0_279], %524 {strides = array<i32>} : memref<8x32xf32, #tpu.memory_space<vmem>>, vector<8x32xf32>,
    %c0_280 = arith.constant 0 : index
    %c0_281 = arith.constant 0 : index
    %560 = vector.load %arg25[%c0_280, %c0_281] : memref<8x32xf32, #tpu.memory_space<vmem>>, vector<8x32xf32>
    tpu.vector_store %arg25[%c0_280, %c0_281], %557 {strides = array<i32>} : memref<8x32xf32, #tpu.memory_space<vmem>>, vector<8x32xf32>,
    %c0_282 = arith.constant 0 : index
    %c0_283 = arith.constant 0 : index
    %561 = vector.load %arg26[%c0_282, %c0_283] : memref<8x32xf32, #tpu.memory_space<vmem>>, vector<8x32xf32>
    tpu.vector_store %arg26[%c0_282, %c0_283], %555 {strides = array<i32>} : memref<8x32xf32, #tpu.memory_space<vmem>>, vector<8x32xf32>,
    %562 = arith.index_cast %c5_i32 : i32 to index
    %c0_284 = arith.constant 0 : index
    %c0_285 = arith.constant 0 : index
    %563 = vector.load %arg21[%562, %c0_284, %c0_285] : memref<8x8x32xf32, #tpu.memory_space<vmem>>, vector<1x8x32xf32>
    %564 = vector.shape_cast %563 : vector<1x8x32xf32> to vector<8x32xf32>
    %565 = vector.shape_cast %526 : vector<8x32xf32> to vector<1x8x32xf32>
    tpu.vector_store %arg21[%562, %c0_284, %c0_285], %565 {strides = array<i32>} : memref<8x8x32xf32, #tpu.memory_space<vmem>>, vector<1x8x32xf32>,
    %c7_i32_286 = arith.constant 7 : i32
    %566 = arith.subi %c7_i32_286, %c5_i32 : i32
    %567 = arith.index_cast %566 : i32 to index
    %c0_287 = arith.constant 0 : index
    %c0_288 = arith.constant 0 : index
    %568 = vector.load %arg22[%567, %c0_287, %c0_288] : memref<8x8x32xf32, #tpu.memory_space<vmem>>, vector<1x8x32xf32>
    %569 = vector.shape_cast %568 : vector<1x8x32xf32> to vector<8x32xf32>
    %570 = vector.shape_cast %557 : vector<8x32xf32> to vector<1x8x32xf32>
    tpu.vector_store %arg22[%567, %c0_287, %c0_288], %570 {strides = array<i32>} : memref<8x8x32xf32, #tpu.memory_space<vmem>>, vector<1x8x32xf32>,
    %c6_i32 = arith.constant 6 : i32
    %c0_289 = arith.constant 0 : index
    %c0_290 = arith.constant 0 : index
    %571 = vector.load %arg23[%c0_289, %c0_290] : memref<8x32xf32, #tpu.memory_space<vmem>>, vector<8x32xf32>
    %572 = arith.truncf %571 : vector<8x32xf32> to vector<8x32xbf16>
    %c0_291 = arith.constant 0 : index
    %c0_292 = arith.constant 0 : index
    %573 = vector.load %arg15[%c0_291, %c0_292] : memref<32x128xbf16, #tpu.memory_space<vmem>>, vector<32x128xbf16>
    %cst_293 = arith.constant dense<0.000000e+00> : vector<8x128xf32>
    %574 = tpu.matmul %572, %573, %cst_293 {dimension_numbers = #tpu.dot_dimension_numbers<[1], [0], [0], [1], [0, 0, 1, 1], [], []>} : vector<8x32xbf16>, vector<32x128xbf16>, vector<8x128xf32> -> vector<8x128xf32>
    %c0_294 = arith.constant 0 : index
    %c0_295 = arith.constant 0 : index
    %575 = vector.load %arg25[%c0_294, %c0_295] : memref<8x32xf32, #tpu.memory_space<vmem>>, vector<8x32xf32>
    %576 = arith.truncf %575 : vector<8x32xf32> to vector<8x32xbf16>
    %c0_296 = arith.constant 0 : index
    %c0_297 = arith.constant 0 : index
    %577 = vector.load %arg16[%c0_296, %c0_297] : memref<32x128xbf16, #tpu.memory_space<vmem>>, vector<32x128xbf16>
    %cst_298 = arith.constant dense<0.000000e+00> : vector<8x128xf32>
    %578 = tpu.matmul %576, %577, %cst_298 {dimension_numbers = #tpu.dot_dimension_numbers<[1], [0], [0], [1], [0, 0, 1, 1], [], []>} : vector<8x32xbf16>, vector<32x128xbf16>, vector<8x128xf32> -> vector<8x128xf32>
    %579 = arith.index_cast %c6_i32 : i32 to index
    %c0_299 = arith.constant 0 : index
    %c0_300 = arith.constant 0 : index
    %580 = vector.load %arg19[%579, %c0_299, %c0_300] : memref<8x8x128xf32, #tpu.memory_space<vmem>>, vector<1x8x128xf32>
    %581 = vector.shape_cast %580 : vector<1x8x128xf32> to vector<8x128xf32>
    %582 = arith.addf %581, %574 : vector<8x128xf32>
    %c0_301 = arith.constant 0 : index
    %c0_302 = arith.constant 0 : index
    %583 = vector.load %arg24[%c0_301, %c0_302] : memref<8x32xf32, #tpu.memory_space<vmem>>, vector<8x32xf32>
    %584 = vector.extract_strided_slice %582 {offsets = [0, 0], sizes = [8, 32], strides = [1, 1]} : vector<8x128xf32> to vector<8x32xf32>
    %585 = arith.negf %584 : vector<8x32xf32>
    %586 = math.exp %585 : vector<8x32xf32>
    %cst_303 = arith.constant 1.000000e+00 : f32
    %587 = vector.broadcast %cst_303 : f32 to vector<8x32xf32>
    %588 = arith.addf %587, %586 : vector<8x32xf32>
    %589 = arith.divf %587, %588 : vector<8x32xf32>
    %590 = vector.extract_strided_slice %582 {offsets = [0, 32], sizes = [8, 32], strides = [1, 1]} : vector<8x128xf32> to vector<8x32xf32>
    %591 = arith.negf %590 : vector<8x32xf32>
    %592 = math.exp %591 : vector<8x32xf32>
    %cst_304 = arith.constant 1.000000e+00 : f32
    %593 = vector.broadcast %cst_304 : f32 to vector<8x32xf32>
    %594 = arith.addf %593, %592 : vector<8x32xf32>
    %595 = arith.divf %593, %594 : vector<8x32xf32>
    %596 = vector.extract_strided_slice %582 {offsets = [0, 64], sizes = [8, 32], strides = [1, 1]} : vector<8x128xf32> to vector<8x32xf32>
    %597 = math.tanh %596 : vector<8x32xf32>
    %598 = vector.extract_strided_slice %582 {offsets = [0, 96], sizes = [8, 32], strides = [1, 1]} : vector<8x128xf32> to vector<8x32xf32>
    %599 = arith.negf %598 : vector<8x32xf32>
    %600 = math.exp %599 : vector<8x32xf32>
    %cst_305 = arith.constant 1.000000e+00 : f32
    %601 = vector.broadcast %cst_305 : f32 to vector<8x32xf32>
    %602 = arith.addf %601, %600 : vector<8x32xf32>
    %603 = arith.divf %601, %602 : vector<8x32xf32>
    %604 = arith.mulf %595, %583 : vector<8x32xf32>
    %605 = arith.mulf %589, %597 : vector<8x32xf32>
    %606 = arith.addf %604, %605 : vector<8x32xf32>
    %607 = math.tanh %606 : vector<8x32xf32>
    %608 = arith.mulf %603, %607 : vector<8x32xf32>
    %c7_i32_306 = arith.constant 7 : i32
    %609 = arith.subi %c7_i32_306, %c6_i32 : i32
    %610 = arith.index_cast %609 : i32 to index
    %c0_307 = arith.constant 0 : index
    %c0_308 = arith.constant 0 : index
    %611 = vector.load %arg20[%610, %c0_307, %c0_308] : memref<8x8x128xf32, #tpu.memory_space<vmem>>, vector<1x8x128xf32>
    %612 = vector.shape_cast %611 : vector<1x8x128xf32> to vector<8x128xf32>
    %613 = arith.addf %612, %578 : vector<8x128xf32>
    %c0_309 = arith.constant 0 : index
    %c0_310 = arith.constant 0 : index
    %614 = vector.load %arg26[%c0_309, %c0_310] : memref<8x32xf32, #tpu.memory_space<vmem>>, vector<8x32xf32>
    %615 = vector.extract_strided_slice %613 {offsets = [0, 0], sizes = [8, 32], strides = [1, 1]} : vector<8x128xf32> to vector<8x32xf32>
    %616 = arith.negf %615 : vector<8x32xf32>
    %617 = math.exp %616 : vector<8x32xf32>
    %cst_311 = arith.constant 1.000000e+00 : f32
    %618 = vector.broadcast %cst_311 : f32 to vector<8x32xf32>
    %619 = arith.addf %618, %617 : vector<8x32xf32>
    %620 = arith.divf %618, %619 : vector<8x32xf32>
    %621 = vector.extract_strided_slice %613 {offsets = [0, 32], sizes = [8, 32], strides = [1, 1]} : vector<8x128xf32> to vector<8x32xf32>
    %622 = arith.negf %621 : vector<8x32xf32>
    %623 = math.exp %622 : vector<8x32xf32>
    %cst_312 = arith.constant 1.000000e+00 : f32
    %624 = vector.broadcast %cst_312 : f32 to vector<8x32xf32>
    %625 = arith.addf %624, %623 : vector<8x32xf32>
    %626 = arith.divf %624, %625 : vector<8x32xf32>
    %627 = vector.extract_strided_slice %613 {offsets = [0, 64], sizes = [8, 32], strides = [1, 1]} : vector<8x128xf32> to vector<8x32xf32>
    %628 = math.tanh %627 : vector<8x32xf32>
    %629 = vector.extract_strided_slice %613 {offsets = [0, 96], sizes = [8, 32], strides = [1, 1]} : vector<8x128xf32> to vector<8x32xf32>
    %630 = arith.negf %629 : vector<8x32xf32>
    %631 = math.exp %630 : vector<8x32xf32>
    %cst_313 = arith.constant 1.000000e+00 : f32
    %632 = vector.broadcast %cst_313 : f32 to vector<8x32xf32>
    %633 = arith.addf %632, %631 : vector<8x32xf32>
    %634 = arith.divf %632, %633 : vector<8x32xf32>
    %635 = arith.mulf %626, %614 : vector<8x32xf32>
    %636 = arith.mulf %620, %628 : vector<8x32xf32>
    %637 = arith.addf %635, %636 : vector<8x32xf32>
    %638 = math.tanh %637 : vector<8x32xf32>
    %639 = arith.mulf %634, %638 : vector<8x32xf32>
    %c0_314 = arith.constant 0 : index
    %c0_315 = arith.constant 0 : index
    %640 = vector.load %arg23[%c0_314, %c0_315] : memref<8x32xf32, #tpu.memory_space<vmem>>, vector<8x32xf32>
    tpu.vector_store %arg23[%c0_314, %c0_315], %608 {strides = array<i32>} : memref<8x32xf32, #tpu.memory_space<vmem>>, vector<8x32xf32>,
    %c0_316 = arith.constant 0 : index
    %c0_317 = arith.constant 0 : index
    %641 = vector.load %arg24[%c0_316, %c0_317] : memref<8x32xf32, #tpu.memory_space<vmem>>, vector<8x32xf32>
    tpu.vector_store %arg24[%c0_316, %c0_317], %606 {strides = array<i32>} : memref<8x32xf32, #tpu.memory_space<vmem>>, vector<8x32xf32>,
    %c0_318 = arith.constant 0 : index
    %c0_319 = arith.constant 0 : index
    %642 = vector.load %arg25[%c0_318, %c0_319] : memref<8x32xf32, #tpu.memory_space<vmem>>, vector<8x32xf32>
    tpu.vector_store %arg25[%c0_318, %c0_319], %639 {strides = array<i32>} : memref<8x32xf32, #tpu.memory_space<vmem>>, vector<8x32xf32>,
    %c0_320 = arith.constant 0 : index
    %c0_321 = arith.constant 0 : index
    %643 = vector.load %arg26[%c0_320, %c0_321] : memref<8x32xf32, #tpu.memory_space<vmem>>, vector<8x32xf32>
    tpu.vector_store %arg26[%c0_320, %c0_321], %637 {strides = array<i32>} : memref<8x32xf32, #tpu.memory_space<vmem>>, vector<8x32xf32>,
    %644 = arith.index_cast %c6_i32 : i32 to index
    %c0_322 = arith.constant 0 : index
    %c0_323 = arith.constant 0 : index
    %645 = vector.load %arg21[%644, %c0_322, %c0_323] : memref<8x8x32xf32, #tpu.memory_space<vmem>>, vector<1x8x32xf32>
    %646 = vector.shape_cast %645 : vector<1x8x32xf32> to vector<8x32xf32>
    %647 = vector.shape_cast %608 : vector<8x32xf32> to vector<1x8x32xf32>
    tpu.vector_store %arg21[%644, %c0_322, %c0_323], %647 {strides = array<i32>} : memref<8x8x32xf32, #tpu.memory_space<vmem>>, vector<1x8x32xf32>,
    %c7_i32_324 = arith.constant 7 : i32
    %648 = arith.subi %c7_i32_324, %c6_i32 : i32
    %649 = arith.index_cast %648 : i32 to index
    %c0_325 = arith.constant 0 : index
    %c0_326 = arith.constant 0 : index
    %650 = vector.load %arg22[%649, %c0_325, %c0_326] : memref<8x8x32xf32, #tpu.memory_space<vmem>>, vector<1x8x32xf32>
    %651 = vector.shape_cast %650 : vector<1x8x32xf32> to vector<8x32xf32>
    %652 = vector.shape_cast %639 : vector<8x32xf32> to vector<1x8x32xf32>
    tpu.vector_store %arg22[%649, %c0_325, %c0_326], %652 {strides = array<i32>} : memref<8x8x32xf32, #tpu.memory_space<vmem>>, vector<1x8x32xf32>,
    %c7_i32_327 = arith.constant 7 : i32
    %c0_328 = arith.constant 0 : index
    %c0_329 = arith.constant 0 : index
    %653 = vector.load %arg23[%c0_328, %c0_329] : memref<8x32xf32, #tpu.memory_space<vmem>>, vector<8x32xf32>
    %654 = arith.truncf %653 : vector<8x32xf32> to vector<8x32xbf16>
    %c0_330 = arith.constant 0 : index
    %c0_331 = arith.constant 0 : index
    %655 = vector.load %arg15[%c0_330, %c0_331] : memref<32x128xbf16, #tpu.memory_space<vmem>>, vector<32x128xbf16>
    %cst_332 = arith.constant dense<0.000000e+00> : vector<8x128xf32>
    %656 = tpu.matmul %654, %655, %cst_332 {dimension_numbers = #tpu.dot_dimension_numbers<[1], [0], [0], [1], [0, 0, 1, 1], [], []>} : vector<8x32xbf16>, vector<32x128xbf16>, vector<8x128xf32> -> vector<8x128xf32>
    %c0_333 = arith.constant 0 : index
    %c0_334 = arith.constant 0 : index
    %657 = vector.load %arg25[%c0_333, %c0_334] : memref<8x32xf32, #tpu.memory_space<vmem>>, vector<8x32xf32>
    %658 = arith.truncf %657 : vector<8x32xf32> to vector<8x32xbf16>
    %c0_335 = arith.constant 0 : index
    %c0_336 = arith.constant 0 : index
    %659 = vector.load %arg16[%c0_335, %c0_336] : memref<32x128xbf16, #tpu.memory_space<vmem>>, vector<32x128xbf16>
    %cst_337 = arith.constant dense<0.000000e+00> : vector<8x128xf32>
    %660 = tpu.matmul %658, %659, %cst_337 {dimension_numbers = #tpu.dot_dimension_numbers<[1], [0], [0], [1], [0, 0, 1, 1], [], []>} : vector<8x32xbf16>, vector<32x128xbf16>, vector<8x128xf32> -> vector<8x128xf32>
    %661 = arith.index_cast %c7_i32_327 : i32 to index
    %c0_338 = arith.constant 0 : index
    %c0_339 = arith.constant 0 : index
    %662 = vector.load %arg19[%661, %c0_338, %c0_339] : memref<8x8x128xf32, #tpu.memory_space<vmem>>, vector<1x8x128xf32>
    %663 = vector.shape_cast %662 : vector<1x8x128xf32> to vector<8x128xf32>
    %664 = arith.addf %663, %656 : vector<8x128xf32>
    %c0_340 = arith.constant 0 : index
    %c0_341 = arith.constant 0 : index
    %665 = vector.load %arg24[%c0_340, %c0_341] : memref<8x32xf32, #tpu.memory_space<vmem>>, vector<8x32xf32>
    %666 = vector.extract_strided_slice %664 {offsets = [0, 0], sizes = [8, 32], strides = [1, 1]} : vector<8x128xf32> to vector<8x32xf32>
    %667 = arith.negf %666 : vector<8x32xf32>
    %668 = math.exp %667 : vector<8x32xf32>
    %cst_342 = arith.constant 1.000000e+00 : f32
    %669 = vector.broadcast %cst_342 : f32 to vector<8x32xf32>
    %670 = arith.addf %669, %668 : vector<8x32xf32>
    %671 = arith.divf %669, %670 : vector<8x32xf32>
    %672 = vector.extract_strided_slice %664 {offsets = [0, 32], sizes = [8, 32], strides = [1, 1]} : vector<8x128xf32> to vector<8x32xf32>
    %673 = arith.negf %672 : vector<8x32xf32>
    %674 = math.exp %673 : vector<8x32xf32>
    %cst_343 = arith.constant 1.000000e+00 : f32
    %675 = vector.broadcast %cst_343 : f32 to vector<8x32xf32>
    %676 = arith.addf %675, %674 : vector<8x32xf32>
    %677 = arith.divf %675, %676 : vector<8x32xf32>
    %678 = vector.extract_strided_slice %664 {offsets = [0, 64], sizes = [8, 32], strides = [1, 1]} : vector<8x128xf32> to vector<8x32xf32>
    %679 = math.tanh %678 : vector<8x32xf32>
    %680 = vector.extract_strided_slice %664 {offsets = [0, 96], sizes = [8, 32], strides = [1, 1]} : vector<8x128xf32> to vector<8x32xf32>
    %681 = arith.negf %680 : vector<8x32xf32>
    %682 = math.exp %681 : vector<8x32xf32>
    %cst_344 = arith.constant 1.000000e+00 : f32
    %683 = vector.broadcast %cst_344 : f32 to vector<8x32xf32>
    %684 = arith.addf %683, %682 : vector<8x32xf32>
    %685 = arith.divf %683, %684 : vector<8x32xf32>
    %686 = arith.mulf %677, %665 : vector<8x32xf32>
    %687 = arith.mulf %671, %679 : vector<8x32xf32>
    %688 = arith.addf %686, %687 : vector<8x32xf32>
    %689 = math.tanh %688 : vector<8x32xf32>
    %690 = arith.mulf %685, %689 : vector<8x32xf32>
    %c7_i32_345 = arith.constant 7 : i32
    %691 = arith.subi %c7_i32_345, %c7_i32_327 : i32
    %692 = arith.index_cast %691 : i32 to index
    %c0_346 = arith.constant 0 : index
    %c0_347 = arith.constant 0 : index
    %693 = vector.load %arg20[%692, %c0_346, %c0_347] : memref<8x8x128xf32, #tpu.memory_space<vmem>>, vector<1x8x128xf32>
    %694 = vector.shape_cast %693 : vector<1x8x128xf32> to vector<8x128xf32>
    %695 = arith.addf %694, %660 : vector<8x128xf32>
    %c0_348 = arith.constant 0 : index
    %c0_349 = arith.constant 0 : index
    %696 = vector.load %arg26[%c0_348, %c0_349] : memref<8x32xf32, #tpu.memory_space<vmem>>, vector<8x32xf32>
    %697 = vector.extract_strided_slice %695 {offsets = [0, 0], sizes = [8, 32], strides = [1, 1]} : vector<8x128xf32> to vector<8x32xf32>
    %698 = arith.negf %697 : vector<8x32xf32>
    %699 = math.exp %698 : vector<8x32xf32>
    %cst_350 = arith.constant 1.000000e+00 : f32
    %700 = vector.broadcast %cst_350 : f32 to vector<8x32xf32>
    %701 = arith.addf %700, %699 : vector<8x32xf32>
    %702 = arith.divf %700, %701 : vector<8x32xf32>
    %703 = vector.extract_strided_slice %695 {offsets = [0, 32], sizes = [8, 32], strides = [1, 1]} : vector<8x128xf32> to vector<8x32xf32>
    %704 = arith.negf %703 : vector<8x32xf32>
    %705 = math.exp %704 : vector<8x32xf32>
    %cst_351 = arith.constant 1.000000e+00 : f32
    %706 = vector.broadcast %cst_351 : f32 to vector<8x32xf32>
    %707 = arith.addf %706, %705 : vector<8x32xf32>
    %708 = arith.divf %706, %707 : vector<8x32xf32>
    %709 = vector.extract_strided_slice %695 {offsets = [0, 64], sizes = [8, 32], strides = [1, 1]} : vector<8x128xf32> to vector<8x32xf32>
    %710 = math.tanh %709 : vector<8x32xf32>
    %711 = vector.extract_strided_slice %695 {offsets = [0, 96], sizes = [8, 32], strides = [1, 1]} : vector<8x128xf32> to vector<8x32xf32>
    %712 = arith.negf %711 : vector<8x32xf32>
    %713 = math.exp %712 : vector<8x32xf32>
    %cst_352 = arith.constant 1.000000e+00 : f32
    %714 = vector.broadcast %cst_352 : f32 to vector<8x32xf32>
    %715 = arith.addf %714, %713 : vector<8x32xf32>
    %716 = arith.divf %714, %715 : vector<8x32xf32>
    %717 = arith.mulf %708, %696 : vector<8x32xf32>
    %718 = arith.mulf %702, %710 : vector<8x32xf32>
    %719 = arith.addf %717, %718 : vector<8x32xf32>
    %720 = math.tanh %719 : vector<8x32xf32>
    %721 = arith.mulf %716, %720 : vector<8x32xf32>
    %c0_353 = arith.constant 0 : index
    %c0_354 = arith.constant 0 : index
    %722 = vector.load %arg23[%c0_353, %c0_354] : memref<8x32xf32, #tpu.memory_space<vmem>>, vector<8x32xf32>
    tpu.vector_store %arg23[%c0_353, %c0_354], %690 {strides = array<i32>} : memref<8x32xf32, #tpu.memory_space<vmem>>, vector<8x32xf32>,
    %c0_355 = arith.constant 0 : index
    %c0_356 = arith.constant 0 : index
    %723 = vector.load %arg24[%c0_355, %c0_356] : memref<8x32xf32, #tpu.memory_space<vmem>>, vector<8x32xf32>
    tpu.vector_store %arg24[%c0_355, %c0_356], %688 {strides = array<i32>} : memref<8x32xf32, #tpu.memory_space<vmem>>, vector<8x32xf32>,
    %c0_357 = arith.constant 0 : index
    %c0_358 = arith.constant 0 : index
    %724 = vector.load %arg25[%c0_357, %c0_358] : memref<8x32xf32, #tpu.memory_space<vmem>>, vector<8x32xf32>
    tpu.vector_store %arg25[%c0_357, %c0_358], %721 {strides = array<i32>} : memref<8x32xf32, #tpu.memory_space<vmem>>, vector<8x32xf32>,
    %c0_359 = arith.constant 0 : index
    %c0_360 = arith.constant 0 : index
    %725 = vector.load %arg26[%c0_359, %c0_360] : memref<8x32xf32, #tpu.memory_space<vmem>>, vector<8x32xf32>
    tpu.vector_store %arg26[%c0_359, %c0_360], %719 {strides = array<i32>} : memref<8x32xf32, #tpu.memory_space<vmem>>, vector<8x32xf32>,
    %726 = arith.index_cast %c7_i32_327 : i32 to index
    %c0_361 = arith.constant 0 : index
    %c0_362 = arith.constant 0 : index
    %727 = vector.load %arg21[%726, %c0_361, %c0_362] : memref<8x8x32xf32, #tpu.memory_space<vmem>>, vector<1x8x32xf32>
    %728 = vector.shape_cast %727 : vector<1x8x32xf32> to vector<8x32xf32>
    %729 = vector.shape_cast %690 : vector<8x32xf32> to vector<1x8x32xf32>
    tpu.vector_store %arg21[%726, %c0_361, %c0_362], %729 {strides = array<i32>} : memref<8x8x32xf32, #tpu.memory_space<vmem>>, vector<1x8x32xf32>,
    %c7_i32_363 = arith.constant 7 : i32
    %730 = arith.subi %c7_i32_363, %c7_i32_327 : i32
    %731 = arith.index_cast %730 : i32 to index
    %c0_364 = arith.constant 0 : index
    %c0_365 = arith.constant 0 : index
    %732 = vector.load %arg22[%731, %c0_364, %c0_365] : memref<8x8x32xf32, #tpu.memory_space<vmem>>, vector<1x8x32xf32>
    %733 = vector.shape_cast %732 : vector<1x8x32xf32> to vector<8x32xf32>
    %734 = vector.shape_cast %721 : vector<8x32xf32> to vector<1x8x32xf32>
    tpu.vector_store %arg22[%731, %c0_364, %c0_365], %734 {strides = array<i32>} : memref<8x8x32xf32, #tpu.memory_space<vmem>>, vector<1x8x32xf32>,
    %c8_i32 = arith.constant 8 : i32
    %c0_366 = arith.constant 0 : index
    %c0_367 = arith.constant 0 : index
    %c0_368 = arith.constant 0 : index
    %735 = vector.load %arg21[%c0_366, %c0_367, %c0_368] : memref<8x8x32xf32, #tpu.memory_space<vmem>>, vector<8x8x32xf32>
    %736 = arith.truncf %735 : vector<8x8x32xf32> to vector<8x8x32xbf16>
    %c0_369 = arith.constant 0 : index
    %c0_370 = arith.constant 0 : index
    %c0_371 = arith.constant 0 : index
    %737 = vector.load %arg17[%c0_369, %c0_370, %c0_371] : memref<8x8x32xbf16, #tpu.memory_space<vmem>>, vector<8x8x32xbf16>
    tpu.vector_store %arg17[%c0_369, %c0_370, %c0_371], %736 {strides = array<i32>} : memref<8x8x32xbf16, #tpu.memory_space<vmem>>, vector<8x8x32xbf16>,
    %c0_372 = arith.constant 0 : index
    %c0_373 = arith.constant 0 : index
    %c0_374 = arith.constant 0 : index
    %738 = vector.load %arg22[%c0_372, %c0_373, %c0_374] : memref<8x8x32xf32, #tpu.memory_space<vmem>>, vector<8x8x32xf32>
    %739 = arith.truncf %738 : vector<8x8x32xf32> to vector<8x8x32xbf16>
    %c0_375 = arith.constant 0 : index
    %c0_376 = arith.constant 0 : index
    %c0_377 = arith.constant 0 : index
    %740 = vector.load %arg18[%c0_375, %c0_376, %c0_377] : memref<8x8x32xbf16, #tpu.memory_space<vmem>>, vector<8x8x32xbf16>
    tpu.vector_store %arg18[%c0_375, %c0_376, %c0_377], %739 {strides = array<i32>} : memref<8x8x32xbf16, #tpu.memory_space<vmem>>, vector<8x8x32xbf16>,
    return
  }
  func.func @transform_0(%arg0: i32) -> (i32, i32, i32) {
    %c0_i32 = arith.constant 0 : i32
    %c0_i32_0 = arith.constant 0 : i32
    %c0_i32_1 = arith.constant 0 : i32
    return %arg0, %c0_i32, %c0_i32_0 : i32, i32, i32
  }
  func.func @transform_1(%arg0: i32) -> (i32, i32, i32) {
    %c0_i32 = arith.constant 0 : i32
    %c0_i32_0 = arith.constant 0 : i32
    %c0_i32_1 = arith.constant 0 : i32
    return %arg0, %c0_i32, %c0_i32_0 : i32, i32, i32
  }
  func.func @transform_2(%arg0: i32) -> (i32, i32, i32) {
    %c0_i32 = arith.constant 0 : i32
    %0 = arith.subi %c0_i32, %arg0 : i32
    %c0_i32_0 = arith.constant 0 : i32
    %c0_i32_1 = arith.constant 0 : i32
    %c0_i32_2 = arith.constant 0 : i32
    return %0, %c0_i32_0, %c0_i32_1 : i32, i32, i32
  }
  func.func @transform_3(%arg0: i32) -> (i32, i32, i32) {
    %c0_i32 = arith.constant 0 : i32
    %0 = arith.subi %c0_i32, %arg0 : i32
    %c0_i32_0 = arith.constant 0 : i32
    %c0_i32_1 = arith.constant 0 : i32
    %c0_i32_2 = arith.constant 0 : i32
    return %0, %c0_i32_0, %c0_i32_1 : i32, i32, i32
  }
  func.func @transform_4(%arg0: i32) -> (i32, i32) {
    %c0_i32 = arith.constant 0 : i32
    %c0_i32_0 = arith.constant 0 : i32
    %c0_i32_1 = arith.constant 0 : i32
    return %c0_i32, %c0_i32_0 : i32, i32
  }
  func.func @transform_5(%arg0: i32) -> (i32, i32) {
    %c0_i32 = arith.constant 0 : i32
    %c0_i32_0 = arith.constant 0 : i32
    %c0_i32_1 = arith.constant 0 : i32
    return %c0_i32, %c0_i32_0 : i32, i32
  }
  func.func @transform_6(%arg0: i32) -> (i32, i32) {
    %c0_i32 = arith.constant 0 : i32
    %c0_i32_0 = arith.constant 0 : i32
    %c0_i32_1 = arith.constant 0 : i32
    return %c0_i32, %c0_i32_0 : i32, i32
  }
  func.func @transform_7(%arg0: i32) -> (i32, i32) {
    %c0_i32 = arith.constant 0 : i32
    %c0_i32_0 = arith.constant 0 : i32
    %c0_i32_1 = arith.constant 0 : i32
    return %c0_i32, %c0_i32_0 : i32, i32
  }
  func.func @transform_8(%arg0: i32) -> (i32, i32) {
    %c0_i32 = arith.constant 0 : i32
    %c0_i32_0 = arith.constant 0 : i32
    %c0_i32_1 = arith.constant 0 : i32
    return %c0_i32, %c0_i32_0 : i32, i32
  }
  func.func @transform_9(%arg0: i32) -> (i32, i32) {
    %c0_i32 = arith.constant 0 : i32
    %c0_i32_0 = arith.constant 0 : i32
    %c0_i32_1 = arith.constant 0 : i32
    return %c0_i32, %c0_i32_0 : i32, i32
  }
  func.func @transform_10(%arg0: i32) -> (i32, i32) {
    %c0_i32 = arith.constant 0 : i32
    %c0_i32_0 = arith.constant 0 : i32
    %c0_i32_1 = arith.constant 0 : i32
    return %c0_i32, %c0_i32_0 : i32, i32
  }
  func.func @transform_11(%arg0: i32) -> (i32, i32) {
    %c0_i32 = arith.constant 0 : i32
    %c0_i32_0 = arith.constant 0 : i32
    %c0_i32_1 = arith.constant 0 : i32
    return %c0_i32, %c0_i32_0 : i32, i32
  }
  func.func @transform_12(%arg0: i32) -> (i32, i32) {
    %c0_i32 = arith.constant 0 : i32
    %c0_i32_0 = arith.constant 0 : i32
    %c0_i32_1 = arith.constant 0 : i32
    return %c0_i32, %c0_i32_0 : i32, i32
  }
  func.func @transform_13(%arg0: i32) -> (i32, i32) {
    %c0_i32 = arith.constant 0 : i32
    %c0_i32_0 = arith.constant 0 : i32
    %c0_i32_1 = arith.constant 0 : i32
    return %c0_i32, %c0_i32_0 : i32, i32
  }
  func.func @transform_14(%arg0: i32) -> (i32, i32) {
    %c0_i32 = arith.constant 0 : i32
    %c0_i32_0 = arith.constant 0 : i32
    %c0_i32_1 = arith.constant 0 : i32
    return %c0_i32, %c0_i32_0 : i32, i32
  }
  func.func @transform_15(%arg0: i32) -> (i32, i32) {
    %c0_i32 = arith.constant 0 : i32
    %c0_i32_0 = arith.constant 0 : i32
    %c0_i32_1 = arith.constant 0 : i32
    return %c0_i32, %c0_i32_0 : i32, i32
  }
  func.func @transform_16(%arg0: i32) -> (i32, i32, i32) {
    %c0_i32 = arith.constant 0 : i32
    %c0_i32_0 = arith.constant 0 : i32
    %c0_i32_1 = arith.constant 0 : i32
    return %arg0, %c0_i32, %c0_i32_0 : i32, i32, i32
  }
  func.func @transform_17(%arg0: i32) -> (i32, i32, i32) {
    %c0_i32 = arith.constant 0 : i32
    %0 = arith.subi %c0_i32, %arg0 : i32
    %c0_i32_0 = arith.constant 0 : i32
    %c0_i32_1 = arith.constant 0 : i32
    %c0_i32_2 = arith.constant 0 : i32
    return %0, %c0_i32_0, %c0_i32_1 : i32, i32, i32
  }
}

</mosaic_0001>

<llo_original>
// kernel: tpu_custom_call.1
$region0: #{tpu_custom_call.1}
  #allocation0 [shape = 'u32[]', space=smem, size = 0x4, offset = 0x4, fixed_abs, tag = 'smem constant byte address 0x4 - core index']
  #allocation1 [shape = 'u32[144,128]{1,0:T(1,128)}', space=vmem, size = 0x12000, scoped, tag = 'internal scratch']
  #allocation2 [shape = 'f32[8,8,128]{2,1,0:T(8,128)}', space=vmem, size = 0x8000, scoped, tag = 'scratch operand']
  #allocation3 [shape = 'f32[8,8,128]{2,1,0:T(8,128)}', space=vmem, size = 0x8000, scoped, tag = 'scratch operand']
  #allocation4 [shape = 'f32[8,8,32]{2,1,0:T(8,128)}', space=vmem, size = 0x8000, scoped, tag = 'scratch operand']
  #allocation5 [shape = 'f32[8,8,32]{2,1,0:T(8,128)}', space=vmem, size = 0x8000, scoped, tag = 'scratch operand']
  #allocation6 [shape = 'f32[8,32]{1,0:T(8,128)}', space=vmem, size = 0x1000, scoped, tag = 'scratch operand']
  #allocation7 [shape = 'f32[8,32]{1,0:T(8,128)}', space=vmem, size = 0x1000, scoped, tag = 'scratch operand']
  #allocation8 [shape = 'f32[8,32]{1,0:T(8,128)}', space=vmem, size = 0x1000, scoped, tag = 'scratch operand']
  #allocation9 [shape = 'f32[8,32]{1,0:T(8,128)}', space=vmem, size = 0x1000, scoped, tag = 'scratch operand']
  %s0 = inlined_call_operand.vmem [shape: f32[8,8,4], index: 0, kind: input, shape index: {}]
  %s1 = inlined_call_operand.vmem [shape: f32[8,8,4], index: 1, kind: input, shape index: {}]
  %s2 = inlined_call_operand.vmem [shape: f32[8,8,4], index: 2, kind: input, shape index: {}]
  %s3 = inlined_call_operand.vmem [shape: f32[8,8,4], index: 3, kind: input, shape index: {}]
  %s4 = inlined_call_operand.vmem [shape: bf16[4,16], index: 4, kind: input, shape index: {}]
  %s5 = inlined_call_operand.vmem [shape: f32[1,16], index: 5, kind: input, shape index: {}]
  %s6 = inlined_call_operand.vmem [shape: bf16[4,16], index: 6, kind: input, shape index: {}]
  %s7 = inlined_call_operand.vmem [shape: f32[1,16], index: 7, kind: input, shape index: {}]
  %s8 = inlined_call_operand.vmem [shape: bf16[16,128], index: 8, kind: input, shape index: {}]
  %s9 = inlined_call_operand.vmem [shape: bf16[16,128], index: 9, kind: input, shape index: {}]
  %s10 = inlined_call_operand.vmem [shape: f32[1,128], index: 10, kind: input, shape index: {}]
  %s11 = inlined_call_operand.vmem [shape: bf16[16,128], index: 11, kind: input, shape index: {}]
  %s12 = inlined_call_operand.vmem [shape: bf16[16,128], index: 12, kind: input, shape index: {}]
  %s13 = inlined_call_operand.vmem [shape: f32[1,128], index: 13, kind: input, shape index: {}]
  %s14 = inlined_call_operand.vmem [shape: bf16[32,128], index: 14, kind: input, shape index: {}]
  %s15 = inlined_call_operand.vmem [shape: bf16[32,128], index: 15, kind: input, shape index: {}]
  %s16 = inlined_call_operand.hbm [shape: bf16[8,8,32], index: 16, kind: output, shape index: {0}]
  %s17 = inlined_call_operand.hbm [shape: bf16[8,8,32], index: 17, kind: output, shape index: {1}]
  %18 = xla_tuple %s16, %s17
  %s19 = sld [smem:[#allocation0]]
  $region86: #{tpu_custom_call.1} parent=0
    _
  %s21 = ssub.s32 1, %s19
  %s22 = scalar_select 0, %s21, %s19
  $region1: #{tpu_custom_call.1} parent=0
    #allocation10 [shape = 'u8[16384]{0}', space=vmem, size = 0x4000, scoped, tag = 'output window, operand 0, single buffered']
    #allocation11 [shape = 's32[1]{0}', space=sflag, size = 0x4, scoped, tag = 'scoped memory for tpu_custom_call.1']
    #allocation12 [shape = 'u8[16384]{0}', space=vmem, size = 0x4000, scoped, tag = 'output window, operand 1, single buffered']
    #allocation13 [shape = 's32[1]{0}', space=sflag, size = 0x4, scoped, tag = 'scoped memory for tpu_custom_call.1']
    %23 = vsyncpa [#allocation11], 0
    %24 = vsyncpa [#allocation13], 0
    // Predicated region
    $region2: #{tpu_custom_call.1} parent=1 // pred_check
      _
    $region3: #{tpu_custom_call.1} parent=1 // pred_check_branch
      %26 = sbr.rel (0) target = $region5
    $region4: #{tpu_custom_call.1} parent=1 // pred_region
      _
    $region5: #{tpu_custom_call.1} parent=1 // pred_fallthru
      _
    // Predicated region
    $region6: #{tpu_custom_call.1} parent=1 // pred_check
      _
    $region7: #{tpu_custom_call.1} parent=1 // pred_check_branch
      %28 = sbr.rel (0) target = $region9
    $region8: #{tpu_custom_call.1} parent=1 // pred_region
      _
    $region9: #{tpu_custom_call.1} parent=1 // pred_fallthru
      _
    // Predicated region
    $region10: #{tpu_custom_call.1} parent=1 // pred_check
      _
    $region11: #{tpu_custom_call.1} parent=1 // pred_check_branch
      %30 = sbr.rel (0) target = $region13
    $region12: #{tpu_custom_call.1} parent=1 // pred_region
      %s31 = ssub.s32 0, 0
      %s32 = smul.u32 8, %s31
      %p33 = scmp.lt.s32.totalorder %s32, 7
      %s34 = scalar_select %p33, %s32, 7
      %s35 = smul.addr %s34, 8
      %s36 = scalar_lea.vmem %s2, %s35
      %s37 = ssub.s32 0, 0
      %s38 = smul.u32 8, %s37
    $region13: #{tpu_custom_call.1} parent=1 // pred_fallthru
      _
    // Predicated region
    $region14: #{tpu_custom_call.1} parent=1 // pred_check
      _
    $region15: #{tpu_custom_call.1} parent=1 // pred_check_branch
      %40 = sbr.rel (0) target = $region17
    $region16: #{tpu_custom_call.1} parent=1 // pred_region
      %s41 = ssub.s32 0, 0
      %s42 = smul.u32 8, %s41
      %p43 = scmp.lt.s32.totalorder %s42, 7
      %s44 = scalar_select %p43, %s42, 7
      %s45 = smul.addr %s44, 8
      %s46 = scalar_lea.vmem %s3, %s45
      %s47 = ssub.s32 0, 0
      %s48 = smul.u32 8, %s47
    $region17: #{tpu_custom_call.1} parent=1 // pred_fallthru
      _
    // Predicated region
    $region18: #{tpu_custom_call.1} parent=1 // pred_check
      _
    $region19: #{tpu_custom_call.1} parent=1 // pred_check_branch
      %50 = sbr.rel (0) target = $region21
    $region20: #{tpu_custom_call.1} parent=1 // pred_region
      _
    $region21: #{tpu_custom_call.1} parent=1 // pred_fallthru
      _
    // Predicated region
    $region22: #{tpu_custom_call.1} parent=1 // pred_check
      _
    $region23: #{tpu_custom_call.1} parent=1 // pred_check_branch
      %52 = sbr.rel (0) target = $region25
    $region24: #{tpu_custom_call.1} parent=1 // pred_region
      _
    $region25: #{tpu_custom_call.1} parent=1 // pred_fallthru
      _
    // Predicated region
    $region26: #{tpu_custom_call.1} parent=1 // pred_check
      _
    $region27: #{tpu_custom_call.1} parent=1 // pred_check_branch
      %54 = sbr.rel (0) target = $region29
    $region28: #{tpu_custom_call.1} parent=1 // pred_region
      _
    $region29: #{tpu_custom_call.1} parent=1 // pred_fallthru
      _
    // Predicated region
    $region30: #{tpu_custom_call.1} parent=1 // pred_check
      _
    $region31: #{tpu_custom_call.1} parent=1 // pred_check_branch
      %56 = sbr.rel (0) target = $region33
    $region32: #{tpu_custom_call.1} parent=1 // pred_region
      _
    $region33: #{tpu_custom_call.1} parent=1 // pred_fallthru
      _
    // Predicated region
    $region34: #{tpu_custom_call.1} parent=1 // pred_check
      _
    $region35: #{tpu_custom_call.1} parent=1 // pred_check_branch
      %58 = sbr.rel (0) target = $region37
    $region36: #{tpu_custom_call.1} parent=1 // pred_region
      _
    $region37: #{tpu_custom_call.1} parent=1 // pred_fallthru
      _
    // Predicated region
    $region38: #{tpu_custom_call.1} parent=1 // pred_check
      _
    $region39: #{tpu_custom_call.1} parent=1 // pred_check_branch
      %60 = sbr.rel (0) target = $region41
    $region40: #{tpu_custom_call.1} parent=1 // pred_region
      _
    $region41: #{tpu_custom_call.1} parent=1 // pred_fallthru
      _
    // Predicated region
    $region42: #{tpu_custom_call.1} parent=1 // pred_check
      _
    $region43: #{tpu_custom_call.1} parent=1 // pred_check_branch
      %62 = sbr.rel (0) target = $region45
    $region44: #{tpu_custom_call.1} parent=1 // pred_region
      _
    $region45: #{tpu_custom_call.1} parent=1 // pred_fallthru
      _
    // Predicated region
    $region46: #{tpu_custom_call.1} parent=1 // pred_check
      _
    $region47: #{tpu_custom_call.1} parent=1 // pred_check_branch
      %64 = sbr.rel (0) target = $region49
    $region48: #{tpu_custom_call.1} parent=1 // pred_region
      _
    $region49: #{tpu_custom_call.1} parent=1 // pred_fallthru
      _
    // Predicated region
    $region50: #{tpu_custom_call.1} parent=1 // pred_check
      _
    $region51: #{tpu_custom_call.1} parent=1 // pred_check_branch
      %66 = sbr.rel (0) target = $region53
    $region52: #{tpu_custom_call.1} parent=1 // pred_region
      _
    $region53: #{tpu_custom_call.1} parent=1 // pred_fallthru
      _
    // Predicated region
    $region54: #{tpu_custom_call.1} parent=1 // pred_check
      _
    $region55: #{tpu_custom_call.1} parent=1 // pred_check_branch
      %68 = sbr.rel (0) target = $region57
    $region56: #{tpu_custom_call.1} parent=1 // pred_region
      _
    $region57: #{tpu_custom_call.1} parent=1 // pred_fallthru
      _
    // Predicated region
    $region58: #{tpu_custom_call.1} parent=1 // pred_check
      _
    $region59: #{tpu_custom_call.1} parent=1 // pred_check_branch
      %70 = sbr.rel (0) target = $region61
    $region60: #{tpu_custom_call.1} parent=1 // pred_region
      _
    $region61: #{tpu_custom_call.1} parent=1 // pred_fallthru
      _
    // Predicated region
    $region62: #{tpu_custom_call.1} parent=1 // pred_check
      _
    $region63: #{tpu_custom_call.1} parent=1 // pred_check_branch
      %72 = sbr.rel (0) target = $region65
    $region64: #{tpu_custom_call.1} parent=1 // pred_region
      _
    $region65: #{tpu_custom_call.1} parent=1 // pred_fallthru
      _
    %s73 = ssub.s32 0, 0
    %s74 = smul.u32 8, %s73
    %p75 = scmp.lt.s32.totalorder %s74, 7
    %s76 = scalar_select %p75, %s74, 7
    %s77 = smul.addr %s76, 8
    %s78 = scalar_lea.vmem %s2, %s77
    %s79 = ssub.s32 0, 0
    %s80 = smul.u32 8, %s79
    %p81 = scmp.lt.s32.totalorder %s80, 7
    %s82 = scalar_select %p81, %s80, 7
    %s83 = smul.addr %s82, 8
    %s84 = scalar_lea.vmem %s3, %s83
    %s85 = ssub.s32 0, 0
    %s86 = smul.u32 8, %s85
    %p87 = scmp.lt.s32.totalorder %s86, 7
    %s88 = scalar_select %p87, %s86, 7
    %s89 = smul.addr %s88, 8
    %s90 = scalar_lea.vmem %s2, %s89
    %s91 = ssub.s32 0, 0
    %s92 = smul.u32 8, %s91
    %s93 = ssub.s32 0, 0
    %s94 = smul.u32 8, %s93
    %p95 = scmp.lt.s32.totalorder %s94, 7
    %s96 = scalar_select %p95, %s94, 7
    %s97 = smul.addr %s96, 8
    %s98 = scalar_lea.vmem %s3, %s97
    %s99 = ssub.s32 0, 0
    %s100 = smul.u32 8, %s99
    %s101 = ssub.s32 0, 0
    %s102 = smul.u32 8, %s101
    %p104 = scmp.eq.s32.totalorder 0, 0
    // Predicated region
    $region66: #{tpu_custom_call.1} parent=1 // pred_check
      %p105 = pneg %p104
    $region67: #{tpu_custom_call.1} parent=1 // pred_check_branch
      %107 = sbr.rel (%p105) target = $region69
    $region68: #{tpu_custom_call.1} parent=1 // pred_region
      %vm108 = vcmask 261120
      %109 = vst.msk [vmem:[#allocation6] sm:$0xff] %vm108, 0.0
      %110 = vst.msk [vmem:[#allocation7] sm:$0xff] %vm108, 0.0
      %111 = vst.msk [vmem:[#allocation8] sm:$0xff] %vm108, 0.0
      %112 = vst.msk [vmem:[#allocation9] sm:$0xff] %vm108, 0.0
    $region69: #{tpu_custom_call.1} parent=1 // pred_fallthru
      _
    %v113 = vld [vmem:[%s0] sm:$0xff]
    %v114 = vld [vmem:[%s0 + $0x8] sm:$0xff]
    %v115 = vld [vmem:[%s0 + $0x10] sm:$0xff]
    %v116 = vld [vmem:[%s0 + $0x18] sm:$0xff]
    %v117 = vld [vmem:[%s0 + $0x20] sm:$0xff]
    %v118 = vld [vmem:[%s0 + $0x28] sm:$0xff]
    %v119 = vld [vmem:[%s0 + $0x30] sm:$0xff]
    %v120 = vld [vmem:[%s0 + $0x38] sm:$0xff]
    %v121 = vld [vmem:[%s1] sm:$0xff]
    %v122 = vld [vmem:[%s1 + $0x8] sm:$0xff]
    %v123 = vld [vmem:[%s1 + $0x10] sm:$0xff]
    %v124 = vld [vmem:[%s1 + $0x18] sm:$0xff]
    %v125 = vld [vmem:[%s1 + $0x20] sm:$0xff]
    %v126 = vld [vmem:[%s1 + $0x28] sm:$0xff]
    %v127 = vld [vmem:[%s1 + $0x30] sm:$0xff]
    %v128 = vld [vmem:[%s1 + $0x38] sm:$0xff]
    %v129 = vld [vmem:[%s8] sm:$0xf]
    %v130 = vld [vmem:[%s8 + $0x4] sm:$0xf]
    %v131 = vld [vmem:[%s9] sm:$0xf]
    %v132 = vld [vmem:[%s9 + $0x4] sm:$0xf]
    %v133 = vld [vmem:[%s10] sm:$0x1]
    %v134 = vpack.c.bf16 %v114, %v113
    %v135 = vpack.c.bf16 %v116, %v115
    %v136 = vpack.c.bf16 %v118, %v117
    %v137 = vpack.c.bf16 %v120, %v119
    %v138 = vld [vmem:[%s4] sm:$0x3]
    %v139 = vld [vmem:[%s5] sm:$0x1]
    %v141 = vlaneseq
    %v142 = vshrl.u32 %v141, 7
    %v143 = vsub.s32 0, %v142
    %v144 = vrot.slane %v139, %v143
    %vm146 = vcmask 31744
    %v148 = vsel %vm146, %v134, 0
    %v151 = vsel %vm146, %v135, 0
    %v154 = vsel %vm146, %v136, 0
    %v157 = vsel %vm146, %v137, 0
    %vm159 = vcmask 1041408
    %v161 = vsel %vm159, %v138, 0
    %163 = vmatprep.subr.bf16.mxu0 0
    %164 = vmatpush1.bf16.msra.mxu0 %v161
    %165 = vmatprep.subr.bf16.mxu0 0
    %166 = vmatpush1.bf16.msra.mxu0 0
    %167 = vmatprep.subr.bf16.mxu0 0
    %168 = vmatpush1.bf16.msra.mxu0 0
    %169 = vmatprep.subr.bf16.mxu0 0
    %170 = vmatpush1.bf16.msra.mxu0 0
    %171 = vmatprep.subr.bf16.mxu0 0
    %172 = vmatpush1.bf16.msra.mxu0 0
    %173 = vmatprep.subr.bf16.mxu0 0
    %174 = vmatpush1.bf16.msra.mxu0 0
    %175 = vmatprep.subr.bf16.mxu0 0
    %176 = vmatpush1.bf16.msra.mxu0 0
    %177 = vmatprep.subr.bf16.mxu0 0
    %178 = vmatpush1.bf16.msra.mxu0 0
    %179 = vmatprep.subr.bf16.mxu0 0
    %180 = vmatpush1.bf16.msra.mxu0 0
    %181 = vmatprep.subr.bf16.mxu0 0
    %182 = vmatpush1.bf16.msra.mxu0 0
    %183 = vmatprep.subr.bf16.mxu0 0
    %184 = vmatpush1.bf16.msra.mxu0 0
    %185 = vmatprep.subr.bf16.mxu0 0
    %186 = vmatpush1.bf16.msra.mxu0 0
    %187 = vmatprep.subr.bf16.mxu0 0
    %188 = vmatpush1.bf16.msra.mxu0 0
    %189 = vmatprep.subr.bf16.mxu0 0
    %190 = vmatpush1.bf16.msra.mxu0 0
    %191 = vmatprep.subr.bf16.mxu0 0
    %192 = vmatpush1.bf16.msra.mxu0 0
    %193 = vmatprep.subr.bf16.mxu0 0
    %194 = vmatpush1.bf16.msra.mxu0 0
    %195 = vmatprep.mubr.bf16.mxu0 0
    %196 = vmatmul.mubr.bf16.gmra.mrb[0].mxu0 %v148
    %v197 = vpop.f32.mrb[0].mxu0
    %v198 = vadd.f32 %v144, %v197
    %v199 = vpop.f32.mrb[0].mxu0
    %v200 = vpop.f32.mrb[0].mxu0
    %v201 = vadd.f32 %v144, %v200
    %v202 = vpop.f32.mrb[0].mxu0
    %203 = vmatprep.mubr.bf16.mxu0 0
    %204 = vmatmul.mubr.bf16.gmra.mrb[0].mxu0 %v151
    %v205 = vpop.f32.mrb[0].mxu0
    %v206 = vadd.f32 %v144, %v205
    %v207 = vpop.f32.mrb[0].mxu0
    %v208 = vpop.f32.mrb[0].mxu0
    %v209 = vadd.f32 %v144, %v208
    %v210 = vpop.f32.mrb[0].mxu0
    %211 = vmatprep.mubr.bf16.mxu0 0
    %212 = vmatmul.mubr.bf16.gmra.mrb[0].mxu0 %v154
    %v213 = vpop.f32.mrb[0].mxu0
    %v214 = vadd.f32 %v144, %v213
    %v215 = vpop.f32.mrb[0].mxu0
    %v216 = vpop.f32.mrb[0].mxu0
    %v217 = vadd.f32 %v144, %v216
    %v218 = vpop.f32.mrb[0].mxu0
    %219 = vmatprep.mubr.bf16.mxu0 0
    %220 = vmatmul.mubr.bf16.gmra.mrb[0].mxu0 %v157
    %v221 = vpop.f32.mrb[0].mxu0
    %v222 = vadd.f32 %v144, %v221
    %v223 = vpop.f32.mrb[0].mxu0
    %v224 = vpop.f32.mrb[0].mxu0
    %v225 = vadd.f32 %v144, %v224
    %v226 = vpop.f32.mrb[0].mxu0
    %227 = vdwg.mxu0
    %vm228 = vcmp.gt.f32.partialorder %v198, 0.0
    %vm229 = vcmp.gt.f32.partialorder %v201, 0.0
    %vm230 = vcmp.gt.f32.partialorder %v206, 0.0
    %vm231 = vcmp.gt.f32.partialorder %v209, 0.0
    %vm232 = vcmp.gt.f32.partialorder %v214, 0.0
    %vm233 = vcmp.gt.f32.partialorder %v217, 0.0
    %vm234 = vcmp.gt.f32.partialorder %v222, 0.0
    %vm235 = vcmp.gt.f32.partialorder %v225, 0.0
    %v236 = vmul.f32 %v198, 0.01
    %v237 = vmul.f32 %v201, 0.01
    %v238 = vmul.f32 %v206, 0.01
    %v239 = vmul.f32 %v209, 0.01
    %v240 = vmul.f32 %v214, 0.01
    %v241 = vmul.f32 %v217, 0.01
    %v242 = vmul.f32 %v222, 0.01
    %v243 = vmul.f32 %v225, 0.01
    %v244 = vsel %vm228, %v198, %v236
    %v245 = vsel %vm229, %v201, %v237
    %v246 = vsel %vm230, %v206, %v238
    %v247 = vsel %vm231, %v209, %v239
    %v248 = vsel %vm232, %v214, %v240
    %v249 = vsel %vm233, %v217, %v241
    %v250 = vsel %vm234, %v222, %v242
    %v251 = vsel %vm235, %v225, %v243
    %v252 = vpack.c.bf16 %v122, %v121
    %v253 = vpack.c.bf16 %v124, %v123
    %v254 = vpack.c.bf16 %v126, %v125
    %v255 = vpack.c.bf16 %v128, %v127
    %v256 = vld [vmem:[%s6] sm:$0x3]
    %v257 = vld [vmem:[%s7] sm:$0x1]
    %v259 = vlaneseq
    %v260 = vshrl.u32 %v259, 7
    %v261 = vsub.s32 0, %v260
    %v262 = vrot.slane %v257, %v261
    %v265 = vsel %vm146, %v252, 0
    %v268 = vsel %vm146, %v253, 0
    %v271 = vsel %vm146, %v254, 0
    %v274 = vsel %vm146, %v255, 0
    %v277 = vsel %vm159, %v256, 0
    %279 = vmatprep.subr.bf16.mxu0 0
    %280 = vmatpush1.bf16.msra.mxu0 %v277
    %281 = vmatprep.subr.bf16.mxu0 0
    %282 = vmatpush1.bf16.msra.mxu0 0
    %283 = vmatprep.subr.bf16.mxu0 0
    %284 = vmatpush1.bf16.msra.mxu0 0
    %285 = vmatprep.subr.bf16.mxu0 0
    %286 = vmatpush1.bf16.msra.mxu0 0
    %287 = vmatprep.subr.bf16.mxu0 0
    %288 = vmatpush1.bf16.msra.mxu0 0
    %289 = vmatprep.subr.bf16.mxu0 0
    %290 = vmatpush1.bf16.msra.mxu0 0
    %291 = vmatprep.subr.bf16.mxu0 0
    %292 = vmatpush1.bf16.msra.mxu0 0
    %293 = vmatprep.subr.bf16.mxu0 0
    %294 = vmatpush1.bf16.msra.mxu0 0
    %295 = vmatprep.subr.bf16.mxu0 0
    %296 = vmatpush1.bf16.msra.mxu0 0
    %297 = vmatprep.subr.bf16.mxu0 0
    %298 = vmatpush1.bf16.msra.mxu0 0
    %299 = vmatprep.subr.bf16.mxu0 0
    %300 = vmatpush1.bf16.msra.mxu0 0
    %301 = vmatprep.subr.bf16.mxu0 0
    %302 = vmatpush1.bf16.msra.mxu0 0
    %303 = vmatprep.subr.bf16.mxu0 0
    %304 = vmatpush1.bf16.msra.mxu0 0
    %305 = vmatprep.subr.bf16.mxu0 0
    %306 = vmatpush1.bf16.msra.mxu0 0
    %307 = vmatprep.subr.bf16.mxu0 0
    %308 = vmatpush1.bf16.msra.mxu0 0
    %309 = vmatprep.subr.bf16.mxu0 0
    %310 = vmatpush1.bf16.msra.mxu0 0
    %311 = vmatprep.mubr.bf16.mxu0 0
    %312 = vmatmul.mubr.bf16.gmra.mrb[0].mxu0 %v265
    %v313 = vpop.f32.mrb[0].mxu0
    %v314 = vadd.f32 %v262, %v313
    %v315 = vpop.f32.mrb[0].mxu0
    %v316 = vpop.f32.mrb[0].mxu0
    %v317 = vadd.f32 %v262, %v316
    %v318 = vpop.f32.mrb[0].mxu0
    %319 = vmatprep.mubr.bf16.mxu0 0
    %320 = vmatmul.mubr.bf16.gmra.mrb[0].mxu0 %v268
    %v321 = vpop.f32.mrb[0].mxu0
    %v322 = vadd.f32 %v262, %v321
    %v323 = vpop.f32.mrb[0].mxu0
    %v324 = vpop.f32.mrb[0].mxu0
    %v325 = vadd.f32 %v262, %v324
    %v326 = vpop.f32.mrb[0].mxu0
    %327 = vmatprep.mubr.bf16.mxu0 0
    %328 = vmatmul.mubr.bf16.gmra.mrb[0].mxu0 %v271
    %v329 = vpop.f32.mrb[0].mxu0
    %v330 = vadd.f32 %v262, %v329
    %v331 = vpop.f32.mrb[0].mxu0
    %v332 = vpop.f32.mrb[0].mxu0
    %v333 = vadd.f32 %v262, %v332
    %v334 = vpop.f32.mrb[0].mxu0
    %335 = vmatprep.mubr.bf16.mxu0 0
    %336 = vmatmul.mubr.bf16.gmra.mrb[0].mxu0 %v274
    %v337 = vpop.f32.mrb[0].mxu0
    %v338 = vadd.f32 %v262, %v337
    %v339 = vpop.f32.mrb[0].mxu0
    %v340 = vpop.f32.mrb[0].mxu0
    %v341 = vadd.f32 %v262, %v340
    %v342 = vpop.f32.mrb[0].mxu0
    %343 = vdwg.mxu0
    %vm344 = vcmp.gt.f32.partialorder %v314, 0.0
    %vm345 = vcmp.gt.f32.partialorder %v317, 0.0
    %vm346 = vcmp.gt.f32.partialorder %v322, 0.0
    %vm347 = vcmp.gt.f32.partialorder %v325, 0.0
    %vm348 = vcmp.gt.f32.partialorder %v330, 0.0
    %vm349 = vcmp.gt.f32.partialorder %v333, 0.0
    %vm350 = vcmp.gt.f32.partialorder %v338, 0.0
    %vm351 = vcmp.gt.f32.partialorder %v341, 0.0
    %v352 = vmul.f32 %v314, 0.01
    %v353 = vmul.f32 %v317, 0.01
    %v354 = vmul.f32 %v322, 0.01
    %v355 = vmul.f32 %v325, 0.01
    %v356 = vmul.f32 %v330, 0.01
    %v357 = vmul.f32 %v333, 0.01
    %v358 = vmul.f32 %v338, 0.01
    %v359 = vmul.f32 %v341, 0.01
    %v360 = vsel %vm344, %v314, %v352
    %v361 = vsel %vm345, %v317, %v353
    %v362 = vsel %vm346, %v322, %v354
    %v363 = vsel %vm347, %v325, %v355
    %v364 = vsel %vm348, %v330, %v356
    %v365 = vsel %vm349, %v333, %v357
    %v366 = vsel %vm350, %v338, %v358
    %v367 = vsel %vm351, %v341, %v359
    %v368 = vpack.c.bf16 %v245, %v244
    %v369 = vpack.c.bf16 %v247, %v246
    %v370 = vpack.c.bf16 %v249, %v248
    %v371 = vpack.c.bf16 %v251, %v250
    %v372 = vpack.c.bf16 %v361, %v360
    %v373 = vpack.c.bf16 %v363, %v362
    %v374 = vpack.c.bf16 %v365, %v364
    %v375 = vpack.c.bf16 %v367, %v366
    %v378 = vunpack.c.l.b16 %v131
    %v379 = vunpack.c.l.b16 %v132
    %v380 = vpack.c.b16 %v379, %v378
    %vm382 = vcmask 130048
    %v384 = vsel %vm382, %v372, 0
    %v387 = vsel %vm382, %v373, 0
    %v390 = vsel %vm382, %v374, 0
    %v393 = vsel %vm382, %v375, 0
    %395 = vmatprep.subr.bf16.mxu0 0
    %396 = vmatpush1.bf16.msra.mxu0 %v380
    %397 = vmatprep.subr.bf16.mxu0 0
    %398 = vmatpush1.bf16.msra.mxu0 0
    %399 = vmatprep.subr.bf16.mxu0 0
    %400 = vmatpush1.bf16.msra.mxu0 0
    %401 = vmatprep.subr.bf16.mxu0 0
    %402 = vmatpush1.bf16.msra.mxu0 0
    %403 = vmatprep.subr.bf16.mxu0 0
    %404 = vmatpush1.bf16.msra.mxu0 0
    %405 = vmatprep.subr.bf16.mxu0 0
    %406 = vmatpush1.bf16.msra.mxu0 0
    %407 = vmatprep.subr.bf16.mxu0 0
    %408 = vmatpush1.bf16.msra.mxu0 0
    %409 = vmatprep.subr.bf16.mxu0 0
    %410 = vmatpush1.bf16.msra.mxu0 0
    %411 = vmatprep.subr.bf16.mxu0 0
    %412 = vmatpush1.bf16.msra.mxu0 0
    %413 = vmatprep.subr.bf16.mxu0 0
    %414 = vmatpush1.bf16.msra.mxu0 0
    %415 = vmatprep.subr.bf16.mxu0 0
    %416 = vmatpush1.bf16.msra.mxu0 0
    %417 = vmatprep.subr.bf16.mxu0 0
    %418 = vmatpush1.bf16.msra.mxu0 0
    %419 = vmatprep.subr.bf16.mxu0 0
    %420 = vmatpush1.bf16.msra.mxu0 0
    %421 = vmatprep.subr.bf16.mxu0 0
    %422 = vmatpush1.bf16.msra.mxu0 0
    %423 = vmatprep.subr.bf16.mxu0 0
    %424 = vmatpush1.bf16.msra.mxu0 0
    %425 = vmatprep.subr.bf16.mxu0 0
    %426 = vmatpush1.bf16.msra.mxu0 0
    %427 = vmatprep.mubr.bf16.mxu0 0
    %428 = vmatmul.mubr.bf16.gmra.mrb[0].mxu0 %v384
    %v429 = vpop.f32.mrb[0].mxu0
    %v430 = vadd.f32 0.0, %v429
    %v431 = vpop.f32.mrb[0].mxu0
    %v432 = vpop.f32.mrb[0].mxu0
    %v433 = vadd.f32 0.0, %v432
    %v434 = vpop.f32.mrb[0].mxu0
    %435 = vmatprep.mubr.bf16.mxu0 0
    %436 = vmatmul.mubr.bf16.gmra.mrb[0].mxu0 %v387
    %v437 = vpop.f32.mrb[0].mxu0
    %v438 = vadd.f32 0.0, %v437
    %v439 = vpop.f32.mrb[0].mxu0
    %v440 = vpop.f32.mrb[0].mxu0
    %v441 = vadd.f32 0.0, %v440
    %v442 = vpop.f32.mrb[0].mxu0
    %443 = vmatprep.mubr.bf16.mxu0 0
    %444 = vmatmul.mubr.bf16.gmra.mrb[0].mxu0 %v390
    %v445 = vpop.f32.mrb[0].mxu0
    %v446 = vadd.f32 0.0, %v445
    %v447 = vpop.f32.mrb[0].mxu0
    %v448 = vpop.f32.mrb[0].mxu0
    %v449 = vadd.f32 0.0, %v448
    %v450 = vpop.f32.mrb[0].mxu0
    %451 = vmatprep.mubr.bf16.mxu0 0
    %452 = vmatmul.mubr.bf16.gmra.mrb[0].mxu0 %v393
    %v453 = vpop.f32.mrb[0].mxu0
    %v454 = vadd.f32 0.0, %v453
    %v455 = vpop.f32.mrb[0].mxu0
    %v456 = vpop.f32.mrb[0].mxu0
    %v457 = vadd.f32 0.0, %v456
    %v458 = vpop.f32.mrb[0].mxu0
    %459 = vdwg.mxu0
    %v462 = vunpack.c.l.b16 %v129
    %v463 = vunpack.c.l.b16 %v130
    %v464 = vpack.c.b16 %v463, %v462
    %v467 = vsel %vm382, %v368, 0
    %v470 = vsel %vm382, %v369, 0
    %v473 = vsel %vm382, %v370, 0
    %v476 = vsel %vm382, %v371, 0
    %478 = vmatprep.subr.bf16.mxu0 0
    %479 = vmatpush1.bf16.msra.mxu0 %v464
    %480 = vmatprep.subr.bf16.mxu0 0
    %481 = vmatpush1.bf16.msra.mxu0 0
    %482 = vmatprep.subr.bf16.mxu0 0
    %483 = vmatpush1.bf16.msra.mxu0 0
    %484 = vmatprep.subr.bf16.mxu0 0
    %485 = vmatpush1.bf16.msra.mxu0 0
    %486 = vmatprep.subr.bf16.mxu0 0
    %487 = vmatpush1.bf16.msra.mxu0 0
    %488 = vmatprep.subr.bf16.mxu0 0
    %489 = vmatpush1.bf16.msra.mxu0 0
    %490 = vmatprep.subr.bf16.mxu0 0
    %491 = vmatpush1.bf16.msra.mxu0 0
    %492 = vmatprep.subr.bf16.mxu0 0
    %493 = vmatpush1.bf16.msra.mxu0 0
    %494 = vmatprep.subr.bf16.mxu0 0
    %495 = vmatpush1.bf16.msra.mxu0 0
    %496 = vmatprep.subr.bf16.mxu0 0
    %497 = vmatpush1.bf16.msra.mxu0 0
    %498 = vmatprep.subr.bf16.mxu0 0
    %499 = vmatpush1.bf16.msra.mxu0 0
    %500 = vmatprep.subr.bf16.mxu0 0
    %501 = vmatpush1.bf16.msra.mxu0 0
    %502 = vmatprep.subr.bf16.mxu0 0
    %503 = vmatpush1.bf16.msra.mxu0 0
    %504 = vmatprep.subr.bf16.mxu0 0
    %505 = vmatpush1.bf16.msra.mxu0 0
    %506 = vmatprep.subr.bf16.mxu0 0
    %507 = vmatpush1.bf16.msra.mxu0 0
    %508 = vmatprep.subr.bf16.mxu0 0
    %509 = vmatpush1.bf16.msra.mxu0 0
    %510 = vmatprep.mubr.bf16.mxu0 0
    %511 = vmatmul.mubr.bf16.gmra.mrb[0].mxu0 %v467
    %v512 = vpop.f32.mrb[0].mxu0
    %v513 = vadd.f32 %v430, %v512
    %v514 = vpop.f32.mrb[0].mxu0
    %v515 = vpop.f32.mrb[0].mxu0
    %v516 = vadd.f32 %v433, %v515
    %v517 = vpop.f32.mrb[0].mxu0
    %518 = vmatprep.mubr.bf16.mxu0 0
    %519 = vmatmul.mubr.bf16.gmra.mrb[0].mxu0 %v470
    %v520 = vpop.f32.mrb[0].mxu0
    %v521 = vadd.f32 %v438, %v520
    %v522 = vpop.f32.mrb[0].mxu0
    %v523 = vpop.f32.mrb[0].mxu0
    %v524 = vadd.f32 %v441, %v523
    %v525 = vpop.f32.mrb[0].mxu0
    %526 = vmatprep.mubr.bf16.mxu0 0
    %527 = vmatmul.mubr.bf16.gmra.mrb[0].mxu0 %v473
    %v528 = vpop.f32.mrb[0].mxu0
    %v529 = vadd.f32 %v446, %v528
    %v530 = vpop.f32.mrb[0].mxu0
    %v531 = vpop.f32.mrb[0].mxu0
    %v532 = vadd.f32 %v449, %v531
    %v533 = vpop.f32.mrb[0].mxu0
    %534 = vmatprep.mubr.bf16.mxu0 0
    %535 = vmatmul.mubr.bf16.gmra.mrb[0].mxu0 %v476
    %v536 = vpop.f32.mrb[0].mxu0
    %v537 = vadd.f32 %v454, %v536
    %v538 = vpop.f32.mrb[0].mxu0
    %v539 = vpop.f32.mrb[0].mxu0
    %v540 = vadd.f32 %v457, %v539
    %v541 = vpop.f32.mrb[0].mxu0
    %542 = vdwg.mxu0
    %v544 = vlaneseq
    %v545 = vshrl.u32 %v544, 7
    %v546 = vsub.s32 0, %v545
    %v547 = vrot.slane %v133, %v546
    %v549 = vadd.f32 %v513, %v547
    %v550 = vadd.f32 %v516, %v547
    %v551 = vadd.f32 %v521, %v547
    %v552 = vadd.f32 %v524, %v547
    %v553 = vadd.f32 %v529, %v547
    %v554 = vadd.f32 %v532, %v547
    %v555 = vadd.f32 %v537, %v547
    %v556 = vadd.f32 %v540, %v547
    %557 = vst [vmem:[#allocation2] sm:$0xff] %v549
    %558 = vst [vmem:[#allocation2 + $0x8] sm:$0xff] %v550
    %559 = vst [vmem:[#allocation2 + $0x10] sm:$0xff] %v551
    %560 = vst [vmem:[#allocation2 + $0x18] sm:$0xff] %v552
    %561 = vst [vmem:[#allocation2 + $0x20] sm:$0xff] %v553
    %562 = vst [vmem:[#allocation2 + $0x28] sm:$0xff] %v554
    %563 = vst [vmem:[#allocation2 + $0x30] sm:$0xff] %v555
    %564 = vst [vmem:[#allocation2 + $0x38] sm:$0xff] %v556
    %v565 = vld [vmem:[%s90] sm:$0xff]
    %v566 = vld [vmem:[%s90 + $0x8] sm:$0xff]
    %v567 = vld [vmem:[%s90 + $0x10] sm:$0xff]
    %v568 = vld [vmem:[%s90 + $0x18] sm:$0xff]
    %v569 = vld [vmem:[%s90 + $0x20] sm:$0xff]
    %v570 = vld [vmem:[%s90 + $0x28] sm:$0xff]
    %v571 = vld [vmem:[%s90 + $0x30] sm:$0xff]
    %v572 = vld [vmem:[%s90 + $0x38] sm:$0xff]
    %v573 = vld [vmem:[%s98] sm:$0xff]
    %v574 = vld [vmem:[%s98 + $0x8] sm:$0xff]
    %v575 = vld [vmem:[%s98 + $0x10] sm:$0xff]
    %v576 = vld [vmem:[%s98 + $0x18] sm:$0xff]
    %v577 = vld [vmem:[%s98 + $0x20] sm:$0xff]
    %v578 = vld [vmem:[%s98 + $0x28] sm:$0xff]
    %v579 = vld [vmem:[%s98 + $0x30] sm:$0xff]
    %v580 = vld [vmem:[%s98 + $0x38] sm:$0xff]
    %v581 = vld [vmem:[%s11] sm:$0xf]
    %v582 = vld [vmem:[%s11 + $0x4] sm:$0xf]
    %v583 = vld [vmem:[%s12] sm:$0xf]
    %v584 = vld [vmem:[%s12 + $0x4] sm:$0xf]
    %v585 = vld [vmem:[%s13] sm:$0x1]
    %v586 = vpack.c.bf16 %v566, %v565
    %v587 = vpack.c.bf16 %v568, %v567
    %v588 = vpack.c.bf16 %v570, %v569
    %v589 = vpack.c.bf16 %v572, %v571
    %v590 = vld [vmem:[%s4] sm:$0x3]
    %v591 = vld [vmem:[%s5] sm:$0x1]
    %v593 = vlaneseq
    %v594 = vshrl.u32 %v593, 7
    %v595 = vsub.s32 0, %v594
    %v596 = vrot.slane %v591, %v595
    %v599 = vsel %vm146, %v586, 0
    %v602 = vsel %vm146, %v587, 0
    %v605 = vsel %vm146, %v588, 0
    %v608 = vsel %vm146, %v589, 0
    %v611 = vsel %vm159, %v590, 0
    %613 = vmatprep.subr.bf16.mxu0 0
    %614 = vmatpush1.bf16.msra.mxu0 %v611
    %615 = vmatprep.subr.bf16.mxu0 0
    %616 = vmatpush1.bf16.msra.mxu0 0
    %617 = vmatprep.subr.bf16.mxu0 0
    %618 = vmatpush1.bf16.msra.mxu0 0
    %619 = vmatprep.subr.bf16.mxu0 0
    %620 = vmatpush1.bf16.msra.mxu0 0
    %621 = vmatprep.subr.bf16.mxu0 0
    %622 = vmatpush1.bf16.msra.mxu0 0
    %623 = vmatprep.subr.bf16.mxu0 0
    %624 = vmatpush1.bf16.msra.mxu0 0
    %625 = vmatprep.subr.bf16.mxu0 0
    %626 = vmatpush1.bf16.msra.mxu0 0
    %627 = vmatprep.subr.bf16.mxu0 0
    %628 = vmatpush1.bf16.msra.mxu0 0
    %629 = vmatprep.subr.bf16.mxu0 0
    %630 = vmatpush1.bf16.msra.mxu0 0
    %631 = vmatprep.subr.bf16.mxu0 0
    %632 = vmatpush1.bf16.msra.mxu0 0
    %633 = vmatprep.subr.bf16.mxu0 0
    %634 = vmatpush1.bf16.msra.mxu0 0
    %635 = vmatprep.subr.bf16.mxu0 0
    %636 = vmatpush1.bf16.msra.mxu0 0
    %637 = vmatprep.subr.bf16.mxu0 0
    %638 = vmatpush1.bf16.msra.mxu0 0
    %639 = vmatprep.subr.bf16.mxu0 0
    %640 = vmatpush1.bf16.msra.mxu0 0
    %641 = vmatprep.subr.bf16.mxu0 0
    %642 = vmatpush1.bf16.msra.mxu0 0
    %643 = vmatprep.subr.bf16.mxu0 0
    %644 = vmatpush1.bf16.msra.mxu0 0
    %645 = vmatprep.mubr.bf16.mxu0 0
    %646 = vmatmul.mubr.bf16.gmra.mrb[0].mxu0 %v599
    %v647 = vpop.f32.mrb[0].mxu0
    %v648 = vadd.f32 %v596, %v647
    %v649 = vpop.f32.mrb[0].mxu0
    %v650 = vpop.f32.mrb[0].mxu0
    %v651 = vadd.f32 %v596, %v650
    %v652 = vpop.f32.mrb[0].mxu0
    %653 = vmatprep.mubr.bf16.mxu0 0
    %654 = vmatmul.mubr.bf16.gmra.mrb[0].mxu0 %v602
    %v655 = vpop.f32.mrb[0].mxu0
    %v656 = vadd.f32 %v596, %v655
    %v657 = vpop.f32.mrb[0].mxu0
    %v658 = vpop.f32.mrb[0].mxu0
    %v659 = vadd.f32 %v596, %v658
    %v660 = vpop.f32.mrb[0].mxu0
    %661 = vmatprep.mubr.bf16.mxu0 0
    %662 = vmatmul.mubr.bf16.gmra.mrb[0].mxu0 %v605
    %v663 = vpop.f32.mrb[0].mxu0
    %v664 = vadd.f32 %v596, %v663
    %v665 = vpop.f32.mrb[0].mxu0
    %v666 = vpop.f32.mrb[0].mxu0
    %v667 = vadd.f32 %v596, %v666
    %v668 = vpop.f32.mrb[0].mxu0
    %669 = vmatprep.mubr.bf16.mxu0 0
    %670 = vmatmul.mubr.bf16.gmra.mrb[0].mxu0 %v608
    %v671 = vpop.f32.mrb[0].mxu0
    %v672 = vadd.f32 %v596, %v671
    %v673 = vpop.f32.mrb[0].mxu0
    %v674 = vpop.f32.mrb[0].mxu0
    %v675 = vadd.f32 %v596, %v674
    %v676 = vpop.f32.mrb[0].mxu0
    %677 = vdwg.mxu0
    %vm678 = vcmp.gt.f32.partialorder %v648, 0.0
    %vm679 = vcmp.gt.f32.partialorder %v651, 0.0
    %vm680 = vcmp.gt.f32.partialorder %v656, 0.0
    %vm681 = vcmp.gt.f32.partialorder %v659, 0.0
    %vm682 = vcmp.gt.f32.partialorder %v664, 0.0
    %vm683 = vcmp.gt.f32.partialorder %v667, 0.0
    %vm684 = vcmp.gt.f32.partialorder %v672, 0.0
    %vm685 = vcmp.gt.f32.partialorder %v675, 0.0
    %v686 = vmul.f32 %v648, 0.01
    %v687 = vmul.f32 %v651, 0.01
    %v688 = vmul.f32 %v656, 0.01
    %v689 = vmul.f32 %v659, 0.01
    %v690 = vmul.f32 %v664, 0.01
    %v691 = vmul.f32 %v667, 0.01
    %v692 = vmul.f32 %v672, 0.01
    %v693 = vmul.f32 %v675, 0.01
    %v694 = vsel %vm678, %v648, %v686
    %v695 = vsel %vm679, %v651, %v687
    %v696 = vsel %vm680, %v656, %v688
    %v697 = vsel %vm681, %v659, %v689
    %v698 = vsel %vm682, %v664, %v690
    %v699 = vsel %vm683, %v667, %v691
    %v700 = vsel %vm684, %v672, %v692
    %v701 = vsel %vm685, %v675, %v693
    %v702 = vpack.c.bf16 %v574, %v573
    %v703 = vpack.c.bf16 %v576, %v575
    %v704 = vpack.c.bf16 %v578, %v577
    %v705 = vpack.c.bf16 %v580, %v579
    %v706 = vld [vmem:[%s6] sm:$0x3]
    %v707 = vld [vmem:[%s7] sm:$0x1]
    %v709 = vlaneseq
    %v710 = vshrl.u32 %v709, 7
    %v711 = vsub.s32 0, %v710
    %v712 = vrot.slane %v707, %v711
    %v715 = vsel %vm146, %v702, 0
    %v718 = vsel %vm146, %v703, 0
    %v721 = vsel %vm146, %v704, 0
    %v724 = vsel %vm146, %v705, 0
    %v727 = vsel %vm159, %v706, 0
    %729 = vmatprep.subr.bf16.mxu0 0
    %730 = vmatpush1.bf16.msra.mxu0 %v727
    %731 = vmatprep.subr.bf16.mxu0 0
    %732 = vmatpush1.bf16.msra.mxu0 0
    %733 = vmatprep.subr.bf16.mxu0 0
    %734 = vmatpush1.bf16.msra.mxu0 0
    %735 = vmatprep.subr.bf16.mxu0 0
    %736 = vmatpush1.bf16.msra.mxu0 0
    %737 = vmatprep.subr.bf16.mxu0 0
    %738 = vmatpush1.bf16.msra.mxu0 0
    %739 = vmatprep.subr.bf16.mxu0 0
    %740 = vmatpush1.bf16.msra.mxu0 0
    %741 = vmatprep.subr.bf16.mxu0 0
    %742 = vmatpush1.bf16.msra.mxu0 0
    %743 = vmatprep.subr.bf16.mxu0 0
    %744 = vmatpush1.bf16.msra.mxu0 0
    %745 = vmatprep.subr.bf16.mxu0 0
    %746 = vmatpush1.bf16.msra.mxu0 0
    %747 = vmatprep.subr.bf16.mxu0 0
    %748 = vmatpush1.bf16.msra.mxu0 0
    %749 = vmatprep.subr.bf16.mxu0 0
    %750 = vmatpush1.bf16.msra.mxu0 0
    %751 = vmatprep.subr.bf16.mxu0 0
    %752 = vmatpush1.bf16.msra.mxu0 0
    %753 = vmatprep.subr.bf16.mxu0 0
    %754 = vmatpush1.bf16.msra.mxu0 0
    %755 = vmatprep.subr.bf16.mxu0 0
    %756 = vmatpush1.bf16.msra.mxu0 0
    %757 = vmatprep.subr.bf16.mxu0 0
    %758 = vmatpush1.bf16.msra.mxu0 0
    %759 = vmatprep.subr.bf16.mxu0 0
    %760 = vmatpush1.bf16.msra.mxu0 0
    %761 = vmatprep.mubr.bf16.mxu0 0
    %762 = vmatmul.mubr.bf16.gmra.mrb[0].mxu0 %v715
    %v763 = vpop.f32.mrb[0].mxu0
    %v764 = vadd.f32 %v712, %v763
    %v765 = vpop.f32.mrb[0].mxu0
    %v766 = vpop.f32.mrb[0].mxu0
    %v767 = vadd.f32 %v712, %v766
    %v768 = vpop.f32.mrb[0].mxu0
    %769 = vmatprep.mubr.bf16.mxu0 0
    %770 = vmatmul.mubr.bf16.gmra.mrb[0].mxu0 %v718
    %v771 = vpop.f32.mrb[0].mxu0
    %v772 = vadd.f32 %v712, %v771
    %v773 = vpop.f32.mrb[0].mxu0
    %v774 = vpop.f32.mrb[0].mxu0
    %v775 = vadd.f32 %v712, %v774
    %v776 = vpop.f32.mrb[0].mxu0
    %777 = vmatprep.mubr.bf16.mxu0 0
    %778 = vmatmul.mubr.bf16.gmra.mrb[0].mxu0 %v721
    %v779 = vpop.f32.mrb[0].mxu0
    %v780 = vadd.f32 %v712, %v779
    %v781 = vpop.f32.mrb[0].mxu0
    %v782 = vpop.f32.mrb[0].mxu0
    %v783 = vadd.f32 %v712, %v782
    %v784 = vpop.f32.mrb[0].mxu0
    %785 = vmatprep.mubr.bf16.mxu0 0
    %786 = vmatmul.mubr.bf16.gmra.mrb[0].mxu0 %v724
    %v787 = vpop.f32.mrb[0].mxu0
    %v788 = vadd.f32 %v712, %v787
    %v789 = vpop.f32.mrb[0].mxu0
    %v790 = vpop.f32.mrb[0].mxu0
    %v791 = vadd.f32 %v712, %v790
    %v792 = vpop.f32.mrb[0].mxu0
    %793 = vdwg.mxu0
    %vm794 = vcmp.gt.f32.partialorder %v764, 0.0
    %vm795 = vcmp.gt.f32.partialorder %v767, 0.0
    %vm796 = vcmp.gt.f32.partialorder %v772, 0.0
    %vm797 = vcmp.gt.f32.partialorder %v775, 0.0
    %vm798 = vcmp.gt.f32.partialorder %v780, 0.0
    %vm799 = vcmp.gt.f32.partialorder %v783, 0.0
    %vm800 = vcmp.gt.f32.partialorder %v788, 0.0
    %vm801 = vcmp.gt.f32.partialorder %v791, 0.0
    %v802 = vmul.f32 %v764, 0.01
    %v803 = vmul.f32 %v767, 0.01
    %v804 = vmul.f32 %v772, 0.01
    %v805 = vmul.f32 %v775, 0.01
    %v806 = vmul.f32 %v780, 0.01
    %v807 = vmul.f32 %v783, 0.01
    %v808 = vmul.f32 %v788, 0.01
    %v809 = vmul.f32 %v791, 0.01
    %v810 = vsel %vm794, %v764, %v802
    %v811 = vsel %vm795, %v767, %v803
    %v812 = vsel %vm796, %v772, %v804
    %v813 = vsel %vm797, %v775, %v805
    %v814 = vsel %vm798, %v780, %v806
    %v815 = vsel %vm799, %v783, %v807
    %v816 = vsel %vm800, %v788, %v808
    %v817 = vsel %vm801, %v791, %v809
    %v818 = vpack.c.bf16 %v695, %v694
    %v819 = vpack.c.bf16 %v697, %v696
    %v820 = vpack.c.bf16 %v699, %v698
    %v821 = vpack.c.bf16 %v701, %v700
    %v822 = vpack.c.bf16 %v811, %v810
    %v823 = vpack.c.bf16 %v813, %v812
    %v824 = vpack.c.bf16 %v815, %v814
    %v825 = vpack.c.bf16 %v817, %v816
    %v828 = vunpack.c.l.b16 %v583
    %v829 = vunpack.c.l.b16 %v584
    %v830 = vpack.c.b16 %v829, %v828
    %v833 = vsel %vm382, %v822, 0
    %v836 = vsel %vm382, %v823, 0
    %v839 = vsel %vm382, %v824, 0
    %v842 = vsel %vm382, %v825, 0
    %844 = vmatprep.subr.bf16.mxu0 0
    %845 = vmatpush1.bf16.msra.mxu0 %v830
    %846 = vmatprep.subr.bf16.mxu0 0
    %847 = vmatpush1.bf16.msra.mxu0 0
    %848 = vmatprep.subr.bf16.mxu0 0
    %849 = vmatpush1.bf16.msra.mxu0 0
    %850 = vmatprep.subr.bf16.mxu0 0
    %851 = vmatpush1.bf16.msra.mxu0 0
    %852 = vmatprep.subr.bf16.mxu0 0
    %853 = vmatpush1.bf16.msra.mxu0 0
    %854 = vmatprep.subr.bf16.mxu0 0
    %855 = vmatpush1.bf16.msra.mxu0 0
    %856 = vmatprep.subr.bf16.mxu0 0
    %857 = vmatpush1.bf16.msra.mxu0 0
    %858 = vmatprep.subr.bf16.mxu0 0
    %859 = vmatpush1.bf16.msra.mxu0 0
    %860 = vmatprep.subr.bf16.mxu0 0
    %861 = vmatpush1.bf16.msra.mxu0 0
    %862 = vmatprep.subr.bf16.mxu0 0
    %863 = vmatpush1.bf16.msra.mxu0 0
    %864 = vmatprep.subr.bf16.mxu0 0
    %865 = vmatpush1.bf16.msra.mxu0 0
    %866 = vmatprep.subr.bf16.mxu0 0
    %867 = vmatpush1.bf16.msra.mxu0 0
    %868 = vmatprep.subr.bf16.mxu0 0
    %869 = vmatpush1.bf16.msra.mxu0 0
    %870 = vmatprep.subr.bf16.mxu0 0
    %871 = vmatpush1.bf16.msra.mxu0 0
    %872 = vmatprep.subr.bf16.mxu0 0
    %873 = vmatpush1.bf16.msra.mxu0 0
    %874 = vmatprep.subr.bf16.mxu0 0
    %875 = vmatpush1.bf16.msra.mxu0 0
    %876 = vmatprep.mubr.bf16.mxu0 0
    %877 = vmatmul.mubr.bf16.gmra.mrb[0].mxu0 %v833
    %v878 = vpop.f32.mrb[0].mxu0
    %v879 = vadd.f32 0.0, %v878
    %v880 = vpop.f32.mrb[0].mxu0
    %v881 = vpop.f32.mrb[0].mxu0
    %v882 = vadd.f32 0.0, %v881
    %v883 = vpop.f32.mrb[0].mxu0
    %884 = vmatprep.mubr.bf16.mxu0 0
    %885 = vmatmul.mubr.bf16.gmra.mrb[0].mxu0 %v836
    %v886 = vpop.f32.mrb[0].mxu0
    %v887 = vadd.f32 0.0, %v886
    %v888 = vpop.f32.mrb[0].mxu0
    %v889 = vpop.f32.mrb[0].mxu0
    %v890 = vadd.f32 0.0, %v889
    %v891 = vpop.f32.mrb[0].mxu0
    %892 = vmatprep.mubr.bf16.mxu0 0
    %893 = vmatmul.mubr.bf16.gmra.mrb[0].mxu0 %v839
    %v894 = vpop.f32.mrb[0].mxu0
    %v895 = vadd.f32 0.0, %v894
    %v896 = vpop.f32.mrb[0].mxu0
    %v897 = vpop.f32.mrb[0].mxu0
    %v898 = vadd.f32 0.0, %v897
    %v899 = vpop.f32.mrb[0].mxu0
    %900 = vmatprep.mubr.bf16.mxu0 0
    %901 = vmatmul.mubr.bf16.gmra.mrb[0].mxu0 %v842
    %v902 = vpop.f32.mrb[0].mxu0
    %v903 = vadd.f32 0.0, %v902
    %v904 = vpop.f32.mrb[0].mxu0
    %v905 = vpop.f32.mrb[0].mxu0
    %v906 = vadd.f32 0.0, %v905
    %v907 = vpop.f32.mrb[0].mxu0
    %908 = vdwg.mxu0
    %v911 = vunpack.c.l.b16 %v581
    %v912 = vunpack.c.l.b16 %v582
    %v913 = vpack.c.b16 %v912, %v911
    %v916 = vsel %vm382, %v818, 0
    %v919 = vsel %vm382, %v819, 0
    %v922 = vsel %vm382, %v820, 0
    %v925 = vsel %vm382, %v821, 0
    %927 = vmatprep.subr.bf16.mxu0 0
    %928 = vmatpush1.bf16.msra.mxu0 %v913
    %929 = vmatprep.subr.bf16.mxu0 0
    %930 = vmatpush1.bf16.msra.mxu0 0
    %931 = vmatprep.subr.bf16.mxu0 0
    %932 = vmatpush1.bf16.msra.mxu0 0
    %933 = vmatprep.subr.bf16.mxu0 0
    %934 = vmatpush1.bf16.msra.mxu0 0
    %935 = vmatprep.subr.bf16.mxu0 0
    %936 = vmatpush1.bf16.msra.mxu0 0
    %937 = vmatprep.subr.bf16.mxu0 0
    %938 = vmatpush1.bf16.msra.mxu0 0
    %939 = vmatprep.subr.bf16.mxu0 0
    %940 = vmatpush1.bf16.msra.mxu0 0
    %941 = vmatprep.subr.bf16.mxu0 0
    %942 = vmatpush1.bf16.msra.mxu0 0
    %943 = vmatprep.subr.bf16.mxu0 0
    %944 = vmatpush1.bf16.msra.mxu0 0
    %945 = vmatprep.subr.bf16.mxu0 0
    %946 = vmatpush1.bf16.msra.mxu0 0
    %947 = vmatprep.subr.bf16.mxu0 0
    %948 = vmatpush1.bf16.msra.mxu0 0
    %949 = vmatprep.subr.bf16.mxu0 0
    %950 = vmatpush1.bf16.msra.mxu0 0
    %951 = vmatprep.subr.bf16.mxu0 0
    %952 = vmatpush1.bf16.msra.mxu0 0
    %953 = vmatprep.subr.bf16.mxu0 0
    %954 = vmatpush1.bf16.msra.mxu0 0
    %955 = vmatprep.subr.bf16.mxu0 0
    %956 = vmatpush1.bf16.msra.mxu0 0
    %957 = vmatprep.subr.bf16.mxu0 0
    %958 = vmatpush1.bf16.msra.mxu0 0
    %959 = vmatprep.mubr.bf16.mxu0 0
    %960 = vmatmul.mubr.bf16.gmra.mrb[0].mxu0 %v916
    %v961 = vpop.f32.mrb[0].mxu0
    %v962 = vadd.f32 %v879, %v961
    %v963 = vpop.f32.mrb[0].mxu0
    %v964 = vpop.f32.mrb[0].mxu0
    %v965 = vadd.f32 %v882, %v964
    %v966 = vpop.f32.mrb[0].mxu0
    %967 = vmatprep.mubr.bf16.mxu0 0
    %968 = vmatmul.mubr.bf16.gmra.mrb[0].mxu0 %v919
    %v969 = vpop.f32.mrb[0].mxu0
    %v970 = vadd.f32 %v887, %v969
    %v971 = vpop.f32.mrb[0].mxu0
    %v972 = vpop.f32.mrb[0].mxu0
    %v973 = vadd.f32 %v890, %v972
    %v974 = vpop.f32.mrb[0].mxu0
    %975 = vmatprep.mubr.bf16.mxu0 0
    %976 = vmatmul.mubr.bf16.gmra.mrb[0].mxu0 %v922
    %v977 = vpop.f32.mrb[0].mxu0
    %v978 = vadd.f32 %v895, %v977
    %v979 = vpop.f32.mrb[0].mxu0
    %v980 = vpop.f32.mrb[0].mxu0
    %v981 = vadd.f32 %v898, %v980
    %v982 = vpop.f32.mrb[0].mxu0
    %983 = vmatprep.mubr.bf16.mxu0 0
    %984 = vmatmul.mubr.bf16.gmra.mrb[0].mxu0 %v925
    %v985 = vpop.f32.mrb[0].mxu0
    %v986 = vadd.f32 %v903, %v985
    %v987 = vpop.f32.mrb[0].mxu0
    %v988 = vpop.f32.mrb[0].mxu0
    %v989 = vadd.f32 %v906, %v988
    %v990 = vpop.f32.mrb[0].mxu0
    %991 = vdwg.mxu0
    %v993 = vlaneseq
    %v994 = vshrl.u32 %v993, 7
    %v995 = vsub.s32 0, %v994
    %v996 = vrot.slane %v585, %v995
    %v998 = vadd.f32 %v962, %v996
    %v999 = vadd.f32 %v965, %v996
    %v1000 = vadd.f32 %v970, %v996
    %v1001 = vadd.f32 %v973, %v996
    %v1002 = vadd.f32 %v978, %v996
    %v1003 = vadd.f32 %v981, %v996
    %v1004 = vadd.f32 %v986, %v996
    %v1005 = vadd.f32 %v989, %v996
    %1006 = vst [vmem:[#allocation3] sm:$0xff] %v998
    %1007 = vst [vmem:[#allocation3 + $0x8] sm:$0xff] %v999
    %1008 = vst [vmem:[#allocation3 + $0x10] sm:$0xff] %v1000
    %1009 = vst [vmem:[#allocation3 + $0x18] sm:$0xff] %v1001
    %1010 = vst [vmem:[#allocation3 + $0x20] sm:$0xff] %v1002
    %1011 = vst [vmem:[#allocation3 + $0x28] sm:$0xff] %v1003
    %1012 = vst [vmem:[#allocation3 + $0x30] sm:$0xff] %v1004
    %1013 = vst [vmem:[#allocation3 + $0x38] sm:$0xff] %v1005
    %v1014 = vld [vmem:[#allocation6] sm:$0xff]
    %v1015 = vpack.c.bf16 %v1014, %v1014
    %v1016 = vld [vmem:[%s14] sm:$0xf]
    %v1017 = vld [vmem:[%s14 + $0x4] sm:$0xf]
    %v1018 = vld [vmem:[%s14 + $0x8] sm:$0xf]
    %v1019 = vld [vmem:[%s14 + $0xc] sm:$0xf]
    %v1024 = vunpack.c.l.b16 %v1016
    %v1025 = vunpack.c.l.b16 %v1017
    %v1026 = vunpack.c.l.b16 %v1018
    %v1027 = vunpack.c.l.b16 %v1019
    %v1028 = vpack.c.b16 %v1025, %v1024
    %v1029 = vpack.c.b16 %v1027, %v1026
    %vm1032 = vcmask 261120
    %v1034 = vsel %vm1032, %v1015, 0
    %1036 = vmatprep.subr.bf16.mxu0 0
    %1037 = vmatpush1.bf16.msra.mxu0 %v1028
    %1038 = vmatprep.subr.bf16.mxu0 0
    %1039 = vmatpush1.bf16.msra.mxu0 %v1029
    %1040 = vmatprep.subr.bf16.mxu0 0
    %1041 = vmatpush1.bf16.msra.mxu0 0
    %1042 = vmatprep.subr.bf16.mxu0 0
    %1043 = vmatpush1.bf16.msra.mxu0 0
    %1044 = vmatprep.subr.bf16.mxu0 0
    %1045 = vmatpush1.bf16.msra.mxu0 0
    %1046 = vmatprep.subr.bf16.mxu0 0
    %1047 = vmatpush1.bf16.msra.mxu0 0
    %1048 = vmatprep.subr.bf16.mxu0 0
    %1049 = vmatpush1.bf16.msra.mxu0 0
    %1050 = vmatprep.subr.bf16.mxu0 0
    %1051 = vmatpush1.bf16.msra.mxu0 0
    %1052 = vmatprep.subr.bf16.mxu0 0
    %1053 = vmatpush1.bf16.msra.mxu0 0
    %1054 = vmatprep.subr.bf16.mxu0 0
    %1055 = vmatpush1.bf16.msra.mxu0 0
    %1056 = vmatprep.subr.bf16.mxu0 0
    %1057 = vmatpush1.bf16.msra.mxu0 0
    %1058 = vmatprep.subr.bf16.mxu0 0
    %1059 = vmatpush1.bf16.msra.mxu0 0
    %1060 = vmatprep.subr.bf16.mxu0 0
    %1061 = vmatpush1.bf16.msra.mxu0 0
    %1062 = vmatprep.subr.bf16.mxu0 0
    %1063 = vmatpush1.bf16.msra.mxu0 0
    %1064 = vmatprep.subr.bf16.mxu0 0
    %1065 = vmatpush1.bf16.msra.mxu0 0
    %1066 = vmatprep.subr.bf16.mxu0 0
    %1067 = vmatpush1.bf16.msra.mxu0 0
    %1068 = vmatprep.mubr.bf16.mxu0 0
    %1069 = vmatmul.mubr.bf16.gmra.mrb[0].mxu0 %v1034
    %v1070 = vpop.f32.mrb[0].mxu0
    %v1071 = vadd.f32 0.0, %v1070
    %v1072 = vpop.f32.mrb[0].mxu0
    %v1073 = vpop.f32.mrb[0].mxu0
    %v1074 = vpop.f32.mrb[0].mxu0
    %1075 = vdwg.mxu0
    %v1076 = vld [vmem:[#allocation8] sm:$0xff]
    %v1077 = vpack.c.bf16 %v1076, %v1076
    %v1078 = vld [vmem:[%s15] sm:$0xf]
    %v1079 = vld [vmem:[%s15 + $0x4] sm:$0xf]
    %v1080 = vld [vmem:[%s15 + $0x8] sm:$0xf]
    %v1081 = vld [vmem:[%s15 + $0xc] sm:$0xf]
    %v1086 = vunpack.c.l.b16 %v1078
    %v1087 = vunpack.c.l.b16 %v1079
    %v1088 = vunpack.c.l.b16 %v1080
    %v1089 = vunpack.c.l.b16 %v1081
    %v1090 = vpack.c.b16 %v1087, %v1086
    %v1091 = vpack.c.b16 %v1089, %v1088
    %v1095 = vsel %vm1032, %v1077, 0
    %1097 = vmatprep.subr.bf16.mxu0 0
    %1098 = vmatpush1.bf16.msra.mxu0 %v1090
    %1099 = vmatprep.subr.bf16.mxu0 0
    %1100 = vmatpush1.bf16.msra.mxu0 %v1091
    %1101 = vmatprep.subr.bf16.mxu0 0
    %1102 = vmatpush1.bf16.msra.mxu0 0
    %1103 = vmatprep.subr.bf16.mxu0 0
    %1104 = vmatpush1.bf16.msra.mxu0 0
    %1105 = vmatprep.subr.bf16.mxu0 0
    %1106 = vmatpush1.bf16.msra.mxu0 0
    %1107 = vmatprep.subr.bf16.mxu0 0
    %1108 = vmatpush1.bf16.msra.mxu0 0
    %1109 = vmatprep.subr.bf16.mxu0 0
    %1110 = vmatpush1.bf16.msra.mxu0 0
    %1111 = vmatprep.subr.bf16.mxu0 0
    %1112 = vmatpush1.bf16.msra.mxu0 0
    %1113 = vmatprep.subr.bf16.mxu0 0
    %1114 = vmatpush1.bf16.msra.mxu0 0
    %1115 = vmatprep.subr.bf16.mxu0 0
    %1116 = vmatpush1.bf16.msra.mxu0 0
    %1117 = vmatprep.subr.bf16.mxu0 0
    %1118 = vmatpush1.bf16.msra.mxu0 0
    %1119 = vmatprep.subr.bf16.mxu0 0
    %1120 = vmatpush1.bf16.msra.mxu0 0
    %1121 = vmatprep.subr.bf16.mxu0 0
    %1122 = vmatpush1.bf16.msra.mxu0 0
    %1123 = vmatprep.subr.bf16.mxu0 0
    %1124 = vmatpush1.bf16.msra.mxu0 0
    %1125 = vmatprep.subr.bf16.mxu0 0
    %1126 = vmatpush1.bf16.msra.mxu0 0
    %1127 = vmatprep.subr.bf16.mxu0 0
    %1128 = vmatpush1.bf16.msra.mxu0 0
    %1129 = vmatprep.mubr.bf16.mxu0 0
    %1130 = vmatmul.mubr.bf16.gmra.mrb[0].mxu0 %v1095
    %v1131 = vpop.f32.mrb[0].mxu0
    %v1132 = vadd.f32 0.0, %v1131
    %v1133 = vpop.f32.mrb[0].mxu0
    %v1134 = vpop.f32.mrb[0].mxu0
    %v1135 = vpop.f32.mrb[0].mxu0
    %1136 = vdwg.mxu0
    %v1137 = vld [vmem:[#allocation2] sm:$0xff]
    %v1138 = vadd.f32 %v1137, %v1071
    %v1139 = vld [vmem:[#allocation7] sm:$0xff]
    %v1140 = vxor.u32 %v1138, 2147483648
    %v1141 = vmul.f32 %v1140, 1.442695
    %v1142 = vpow.pop %v1141
    %v1143 = vadd.f32 %v1142, 1.0
    %v1144 = vrcp.pop %v1143
    %v1145 = vmul.f32 1.0, %v1144
    %v1146 = vtanh.pop %v1138
    %1148 = vrot.lane.b32.xlu0 %v1139, 32
    %v1149 = vpop.permute.xlu0 %1148
    %v1151 = vmul.f32 %v1145, %v1149
    %1153 = vrot.lane.b32.xlu0 %v1146, 64
    %v1154 = vpop.permute.xlu0 %1153
    %v1156 = vmul.f32 %v1145, %v1154
    %1158 = vrot.lane.b32.xlu0 %v1156, 32
    %v1159 = vpop.permute.xlu0 %1158
    %v1161 = vadd.f32 %v1151, %v1159
    %v1162 = vtanh.pop %v1161
    %1164 = vrot.lane.b32.xlu0 %v1162, 64
    %v1165 = vpop.permute.xlu0 %1164
    %v1167 = vmul.f32 %v1145, %v1165
    %s1168 = scalar_lea.vmem [#allocation3], 56
    %v1169 = vld [vmem:[%s1168] sm:$0xff]
    %v1170 = vadd.f32 %v1169, %v1132
    %v1171 = vld [vmem:[#allocation9] sm:$0xff]
    %v1172 = vxor.u32 %v1170, 2147483648
    %v1173 = vmul.f32 %v1172, 1.442695
    %v1174 = vpow.pop %v1173
    %v1175 = vadd.f32 %v1174, 1.0
    %v1176 = vrcp.pop %v1175
    %v1177 = vmul.f32 1.0, %v1176
    %v1178 = vtanh.pop %v1170
    %1180 = vrot.lane.b32.xlu0 %v1171, 32
    %v1181 = vpop.permute.xlu0 %1180
    %v1183 = vmul.f32 %v1177, %v1181
    %1185 = vrot.lane.b32.xlu0 %v1178, 64
    %v1186 = vpop.permute.xlu0 %1185
    %v1188 = vmul.f32 %v1177, %v1186
    %1190 = vrot.lane.b32.xlu0 %v1188, 32
    %v1191 = vpop.permute.xlu0 %1190
    %v1193 = vadd.f32 %v1183, %v1191
    %v1194 = vtanh.pop %v1193
    %1196 = vrot.lane.b32.xlu0 %v1194, 64
    %v1197 = vpop.permute.xlu0 %1196
    %v1199 = vmul.f32 %v1177, %v1197
    %1201 = vrot.lane.b32.xlu0 %v1167, 32
    %v1202 = vpop.permute.xlu0 %1201
    %1204 = vst.msk [vmem:[#allocation6] sm:$0xff] %vm1032, %v1202
    %1206 = vrot.lane.b32.xlu0 %v1161, 96
    %v1207 = vpop.permute.xlu0 %1206
    %1209 = vst.msk [vmem:[#allocation7] sm:$0xff] %vm1032, %v1207
    %1211 = vrot.lane.b32.xlu0 %v1199, 32
    %v1212 = vpop.permute.xlu0 %1211
    %1214 = vst.msk [vmem:[#allocation8] sm:$0xff] %vm1032, %v1212
    %1216 = vrot.lane.b32.xlu0 %v1193, 96
    %v1217 = vpop.permute.xlu0 %1216
    %1219 = vst.msk [vmem:[#allocation9] sm:$0xff] %vm1032, %v1217
    %1220 = vst.msk [vmem:[#allocation4] sm:$0xff] %vm1032, %v1202
    %s1221 = scalar_lea.vmem [#allocation5], 56
    %1222 = vst.msk [vmem:[%s1221] sm:$0xff] %vm1032, %v1212
    %v1223 = vld [vmem:[#allocation6] sm:$0xff]
    %v1224 = vpack.c.bf16 %v1223, %v1223
    %v1225 = vld [vmem:[%s14] sm:$0xf]
    %v1226 = vld [vmem:[%s14 + $0x4] sm:$0xf]
    %v1227 = vld [vmem:[%s14 + $0x8] sm:$0xf]
    %v1228 = vld [vmem:[%s14 + $0xc] sm:$0xf]
    %v1233 = vunpack.c.l.b16 %v1225
    %v1234 = vunpack.c.l.b16 %v1226
    %v1235 = vunpack.c.l.b16 %v1227
    %v1236 = vunpack.c.l.b16 %v1228
    %v1237 = vpack.c.b16 %v1234, %v1233
    %v1238 = vpack.c.b16 %v1236, %v1235
    %v1242 = vsel %vm1032, %v1224, 0
    %1244 = vmatprep.subr.bf16.mxu0 0
    %1245 = vmatpush1.bf16.msra.mxu0 %v1237
    %1246 = vmatprep.subr.bf16.mxu0 0
    %1247 = vmatpush1.bf16.msra.mxu0 %v1238
    %1248 = vmatprep.subr.bf16.mxu0 0
    %1249 = vmatpush1.bf16.msra.mxu0 0
    %1250 = vmatprep.subr.bf16.mxu0 0
    %1251 = vmatpush1.bf16.msra.mxu0 0
    %1252 = vmatprep.subr.bf16.mxu0 0
    %1253 = vmatpush1.bf16.msra.mxu0 0
    %1254 = vmatprep.subr.bf16.mxu0 0
    %1255 = vmatpush1.bf16.msra.mxu0 0
    %1256 = vmatprep.subr.bf16.mxu0 0
    %1257 = vmatpush1.bf16.msra.mxu0 0
    %1258 = vmatprep.subr.bf16.mxu0 0
    %1259 = vmatpush1.bf16.msra.mxu0 0
    %1260 = vmatprep.subr.bf16.mxu0 0
    %1261 = vmatpush1.bf16.msra.mxu0 0
    %1262 = vmatprep.subr.bf16.mxu0 0
    %1263 = vmatpush1.bf16.msra.mxu0 0
    %1264 = vmatprep.subr.bf16.mxu0 0
    %1265 = vmatpush1.bf16.msra.mxu0 0
    %1266 = vmatprep.subr.bf16.mxu0 0
    %1267 = vmatpush1.bf16.msra.mxu0 0
    %1268 = vmatprep.subr.bf16.mxu0 0
    %1269 = vmatpush1.bf16.msra.mxu0 0
    %1270 = vmatprep.subr.bf16.mxu0 0
    %1271 = vmatpush1.bf16.msra.mxu0 0
    %1272 = vmatprep.subr.bf16.mxu0 0
    %1273 = vmatpush1.bf16.msra.mxu0 0
    %1274 = vmatprep.subr.bf16.mxu0 0
    %1275 = vmatpush1.bf16.msra.mxu0 0
    %1276 = vmatprep.mubr.bf16.mxu0 0
    %1277 = vmatmul.mubr.bf16.gmra.mrb[0].mxu0 %v1242
    %v1278 = vpop.f32.mrb[0].mxu0
    %v1279 = vadd.f32 0.0, %v1278
    %v1280 = vpop.f32.mrb[0].mxu0
    %v1281 = vpop.f32.mrb[0].mxu0
    %v1282 = vpop.f32.mrb[0].mxu0
    %1283 = vdwg.mxu0
    %v1284 = vld [vmem:[#allocation8] sm:$0xff]
    %v1285 = vpack.c.bf16 %v1284, %v1284
    %v1286 = vld [vmem:[%s15] sm:$0xf]
    %v1287 = vld [vmem:[%s15 + $0x4] sm:$0xf]
    %v1288 = vld [vmem:[%s15 + $0x8] sm:$0xf]
    %v1289 = vld [vmem:[%s15 + $0xc] sm:$0xf]
    %v1294 = vunpack.c.l.b16 %v1286
    %v1295 = vunpack.c.l.b16 %v1287
    %v1296 = vunpack.c.l.b16 %v1288
    %v1297 = vunpack.c.l.b16 %v1289
    %v1298 = vpack.c.b16 %v1295, %v1294
    %v1299 = vpack.c.b16 %v1297, %v1296
    %v1303 = vsel %vm1032, %v1285, 0
    %1305 = vmatprep.subr.bf16.mxu0 0
    %1306 = vmatpush1.bf16.msra.mxu0 %v1298
    %1307 = vmatprep.subr.bf16.mxu0 0
    %1308 = vmatpush1.bf16.msra.mxu0 %v1299
    %1309 = vmatprep.subr.bf16.mxu0 0
    %1310 = vmatpush1.bf16.msra.mxu0 0
    %1311 = vmatprep.subr.bf16.mxu0 0
    %1312 = vmatpush1.bf16.msra.mxu0 0
    %1313 = vmatprep.subr.bf16.mxu0 0
    %1314 = vmatpush1.bf16.msra.mxu0 0
    %1315 = vmatprep.subr.bf16.mxu0 0
    %1316 = vmatpush1.bf16.msra.mxu0 0
    %1317 = vmatprep.subr.bf16.mxu0 0
    %1318 = vmatpush1.bf16.msra.mxu0 0
    %1319 = vmatprep.subr.bf16.mxu0 0
    %1320 = vmatpush1.bf16.msra.mxu0 0
    %1321 = vmatprep.subr.bf16.mxu0 0
    %1322 = vmatpush1.bf16.msra.mxu0 0
    %1323 = vmatprep.subr.bf16.mxu0 0
    %1324 = vmatpush1.bf16.msra.mxu0 0
    %1325 = vmatprep.subr.bf16.mxu0 0
    %1326 = vmatpush1.bf16.msra.mxu0 0
    %1327 = vmatprep.subr.bf16.mxu0 0
    %1328 = vmatpush1.bf16.msra.mxu0 0
    %1329 = vmatprep.subr.bf16.mxu0 0
    %1330 = vmatpush1.bf16.msra.mxu0 0
    %1331 = vmatprep.subr.bf16.mxu0 0
    %1332 = vmatpush1.bf16.msra.mxu0 0
    %1333 = vmatprep.subr.bf16.mxu0 0
    %1334 = vmatpush1.bf16.msra.mxu0 0
    %1335 = vmatprep.subr.bf16.mxu0 0
    %1336 = vmatpush1.bf16.msra.mxu0 0
    %1337 = vmatprep.mubr.bf16.mxu0 0
    %1338 = vmatmul.mubr.bf16.gmra.mrb[0].mxu0 %v1303
    %v1339 = vpop.f32.mrb[0].mxu0
    %v1340 = vadd.f32 0.0, %v1339
    %v1341 = vpop.f32.mrb[0].mxu0
    %v1342 = vpop.f32.mrb[0].mxu0
    %v1343 = vpop.f32.mrb[0].mxu0
    %1344 = vdwg.mxu0
    %s1345 = scalar_lea.vmem [#allocation2], 8
    %v1346 = vld [vmem:[%s1345] sm:$0xff]
    %v1347 = vadd.f32 %v1346, %v1279
    %v1348 = vld [vmem:[#allocation7] sm:$0xff]
    %v1349 = vxor.u32 %v1347, 2147483648
    %v1350 = vmul.f32 %v1349, 1.442695
    %v1351 = vpow.pop %v1350
    %v1352 = vadd.f32 %v1351, 1.0
    %v1353 = vrcp.pop %v1352
    %v1354 = vmul.f32 1.0, %v1353
    %v1355 = vtanh.pop %v1347
    %1357 = vrot.lane.b32.xlu0 %v1348, 32
    %v1358 = vpop.permute.xlu0 %1357
    %v1360 = vmul.f32 %v1354, %v1358
    %1362 = vrot.lane.b32.xlu0 %v1355, 64
    %v1363 = vpop.permute.xlu0 %1362
    %v1365 = vmul.f32 %v1354, %v1363
    %1367 = vrot.lane.b32.xlu0 %v1365, 32
    %v1368 = vpop.permute.xlu0 %1367
    %v1370 = vadd.f32 %v1360, %v1368
    %v1371 = vtanh.pop %v1370
    %1373 = vrot.lane.b32.xlu0 %v1371, 64
    %v1374 = vpop.permute.xlu0 %1373
    %v1376 = vmul.f32 %v1354, %v1374
    %s1377 = scalar_lea.vmem [#allocation3], 48
    %v1378 = vld [vmem:[%s1377] sm:$0xff]
    %v1379 = vadd.f32 %v1378, %v1340
    %v1380 = vld [vmem:[#allocation9] sm:$0xff]
    %v1381 = vxor.u32 %v1379, 2147483648
    %v1382 = vmul.f32 %v1381, 1.442695
    %v1383 = vpow.pop %v1382
    %v1384 = vadd.f32 %v1383, 1.0
    %v1385 = vrcp.pop %v1384
    %v1386 = vmul.f32 1.0, %v1385
    %v1387 = vtanh.pop %v1379
    %1389 = vrot.lane.b32.xlu0 %v1380, 32
    %v1390 = vpop.permute.xlu0 %1389
    %v1392 = vmul.f32 %v1386, %v1390
    %1394 = vrot.lane.b32.xlu0 %v1387, 64
    %v1395 = vpop.permute.xlu0 %1394
    %v1397 = vmul.f32 %v1386, %v1395
    %1399 = vrot.lane.b32.xlu0 %v1397, 32
    %v1400 = vpop.permute.xlu0 %1399
    %v1402 = vadd.f32 %v1392, %v1400
    %v1403 = vtanh.pop %v1402
    %1405 = vrot.lane.b32.xlu0 %v1403, 64
    %v1406 = vpop.permute.xlu0 %1405
    %v1408 = vmul.f32 %v1386, %v1406
    %1410 = vrot.lane.b32.xlu0 %v1376, 32
    %v1411 = vpop.permute.xlu0 %1410
    %1413 = vst.msk [vmem:[#allocation6] sm:$0xff] %vm1032, %v1411
    %1415 = vrot.lane.b32.xlu0 %v1370, 96
    %v1416 = vpop.permute.xlu0 %1415
    %1418 = vst.msk [vmem:[#allocation7] sm:$0xff] %vm1032, %v1416
    %1420 = vrot.lane.b32.xlu0 %v1408, 32
    %v1421 = vpop.permute.xlu0 %1420
    %1423 = vst.msk [vmem:[#allocation8] sm:$0xff] %vm1032, %v1421
    %1425 = vrot.lane.b32.xlu0 %v1402, 96
    %v1426 = vpop.permute.xlu0 %1425
    %1428 = vst.msk [vmem:[#allocation9] sm:$0xff] %vm1032, %v1426
    %s1429 = scalar_lea.vmem [#allocation4], 8
    %1430 = vst.msk [vmem:[%s1429] sm:$0xff] %vm1032, %v1411
    %s1431 = scalar_lea.vmem [#allocation5], 48
    %1432 = vst.msk [vmem:[%s1431] sm:$0xff] %vm1032, %v1421
    %v1433 = vld [vmem:[#allocation6] sm:$0xff]
    %v1434 = vpack.c.bf16 %v1433, %v1433
    %v1435 = vld [vmem:[%s14] sm:$0xf]
    %v1436 = vld [vmem:[%s14 + $0x4] sm:$0xf]
    %v1437 = vld [vmem:[%s14 + $0x8] sm:$0xf]
    %v1438 = vld [vmem:[%s14 + $0xc] sm:$0xf]
    %v1443 = vunpack.c.l.b16 %v1435
    %v1444 = vunpack.c.l.b16 %v1436
    %v1445 = vunpack.c.l.b16 %v1437
    %v1446 = vunpack.c.l.b16 %v1438
    %v1447 = vpack.c.b16 %v1444, %v1443
    %v1448 = vpack.c.b16 %v1446, %v1445
    %v1452 = vsel %vm1032, %v1434, 0
    %1454 = vmatprep.subr.bf16.mxu0 0
    %1455 = vmatpush1.bf16.msra.mxu0 %v1447
    %1456 = vmatprep.subr.bf16.mxu0 0
    %1457 = vmatpush1.bf16.msra.mxu0 %v1448
    %1458 = vmatprep.subr.bf16.mxu0 0
    %1459 = vmatpush1.bf16.msra.mxu0 0
    %1460 = vmatprep.subr.bf16.mxu0 0
    %1461 = vmatpush1.bf16.msra.mxu0 0
    %1462 = vmatprep.subr.bf16.mxu0 0
    %1463 = vmatpush1.bf16.msra.mxu0 0
    %1464 = vmatprep.subr.bf16.mxu0 0
    %1465 = vmatpush1.bf16.msra.mxu0 0
    %1466 = vmatprep.subr.bf16.mxu0 0
    %1467 = vmatpush1.bf16.msra.mxu0 0
    %1468 = vmatprep.subr.bf16.mxu0 0
    %1469 = vmatpush1.bf16.msra.mxu0 0
    %1470 = vmatprep.subr.bf16.mxu0 0
    %1471 = vmatpush1.bf16.msra.mxu0 0
    %1472 = vmatprep.subr.bf16.mxu0 0
    %1473 = vmatpush1.bf16.msra.mxu0 0
    %1474 = vmatprep.subr.bf16.mxu0 0
    %1475 = vmatpush1.bf16.msra.mxu0 0
    %1476 = vmatprep.subr.bf16.mxu0 0
    %1477 = vmatpush1.bf16.msra.mxu0 0
    %1478 = vmatprep.subr.bf16.mxu0 0
    %1479 = vmatpush1.bf16.msra.mxu0 0
    %1480 = vmatprep.subr.bf16.mxu0 0
    %1481 = vmatpush1.bf16.msra.mxu0 0
    %1482 = vmatprep.subr.bf16.mxu0 0
    %1483 = vmatpush1.bf16.msra.mxu0 0
    %1484 = vmatprep.subr.bf16.mxu0 0
    %1485 = vmatpush1.bf16.msra.mxu0 0
    %1486 = vmatprep.mubr.bf16.mxu0 0
    %1487 = vmatmul.mubr.bf16.gmra.mrb[0].mxu0 %v1452
    %v1488 = vpop.f32.mrb[0].mxu0
    %v1489 = vadd.f32 0.0, %v1488
    %v1490 = vpop.f32.mrb[0].mxu0
    %v1491 = vpop.f32.mrb[0].mxu0
    %v1492 = vpop.f32.mrb[0].mxu0
    %1493 = vdwg.mxu0
    %v1494 = vld [vmem:[#allocation8] sm:$0xff]
    %v1495 = vpack.c.bf16 %v1494, %v1494
    %v1496 = vld [vmem:[%s15] sm:$0xf]
    %v1497 = vld [vmem:[%s15 + $0x4] sm:$0xf]
    %v1498 = vld [vmem:[%s15 + $0x8] sm:$0xf]
    %v1499 = vld [vmem:[%s15 + $0xc] sm:$0xf]
    %v1504 = vunpack.c.l.b16 %v1496
    %v1505 = vunpack.c.l.b16 %v1497
    %v1506 = vunpack.c.l.b16 %v1498
    %v1507 = vunpack.c.l.b16 %v1499
    %v1508 = vpack.c.b16 %v1505, %v1504
    %v1509 = vpack.c.b16 %v1507, %v1506
    %v1513 = vsel %vm1032, %v1495, 0
    %1515 = vmatprep.subr.bf16.mxu0 0
    %1516 = vmatpush1.bf16.msra.mxu0 %v1508
    %1517 = vmatprep.subr.bf16.mxu0 0
    %1518 = vmatpush1.bf16.msra.mxu0 %v1509
    %1519 = vmatprep.subr.bf16.mxu0 0
    %1520 = vmatpush1.bf16.msra.mxu0 0
    %1521 = vmatprep.subr.bf16.mxu0 0
    %1522 = vmatpush1.bf16.msra.mxu0 0
    %1523 = vmatprep.subr.bf16.mxu0 0
    %1524 = vmatpush1.bf16.msra.mxu0 0
    %1525 = vmatprep.subr.bf16.mxu0 0
    %1526 = vmatpush1.bf16.msra.mxu0 0
    %1527 = vmatprep.subr.bf16.mxu0 0
    %1528 = vmatpush1.bf16.msra.mxu0 0
    %1529 = vmatprep.subr.bf16.mxu0 0
    %1530 = vmatpush1.bf16.msra.mxu0 0
    %1531 = vmatprep.subr.bf16.mxu0 0
    %1532 = vmatpush1.bf16.msra.mxu0 0
    %1533 = vmatprep.subr.bf16.mxu0 0
    %1534 = vmatpush1.bf16.msra.mxu0 0
    %1535 = vmatprep.subr.bf16.mxu0 0
    %1536 = vmatpush1.bf16.msra.mxu0 0
    %1537 = vmatprep.subr.bf16.mxu0 0
    %1538 = vmatpush1.bf16.msra.mxu0 0
    %1539 = vmatprep.subr.bf16.mxu0 0
    %1540 = vmatpush1.bf16.msra.mxu0 0
    %1541 = vmatprep.subr.bf16.mxu0 0
    %1542 = vmatpush1.bf16.msra.mxu0 0
    %1543 = vmatprep.subr.bf16.mxu0 0
    %1544 = vmatpush1.bf16.msra.mxu0 0
    %1545 = vmatprep.subr.bf16.mxu0 0
    %1546 = vmatpush1.bf16.msra.mxu0 0
    %1547 = vmatprep.mubr.bf16.mxu0 0
    %1548 = vmatmul.mubr.bf16.gmra.mrb[0].mxu0 %v1513
    %v1549 = vpop.f32.mrb[0].mxu0
    %v1550 = vadd.f32 0.0, %v1549
    %v1551 = vpop.f32.mrb[0].mxu0
    %v1552 = vpop.f32.mrb[0].mxu0
    %v1553 = vpop.f32.mrb[0].mxu0
    %1554 = vdwg.mxu0
    %s1555 = scalar_lea.vmem [#allocation2], 16
    %v1556 = vld [vmem:[%s1555] sm:$0xff]
    %v1557 = vadd.f32 %v1556, %v1489
    %v1558 = vld [vmem:[#allocation7] sm:$0xff]
    %v1559 = vxor.u32 %v1557, 2147483648
    %v1560 = vmul.f32 %v1559, 1.442695
    %v1561 = vpow.pop %v1560
    %v1562 = vadd.f32 %v1561, 1.0
    %v1563 = vrcp.pop %v1562
    %v1564 = vmul.f32 1.0, %v1563
    %v1565 = vtanh.pop %v1557
    %1567 = vrot.lane.b32.xlu0 %v1558, 32
    %v1568 = vpop.permute.xlu0 %1567
    %v1570 = vmul.f32 %v1564, %v1568
    %1572 = vrot.lane.b32.xlu0 %v1565, 64
    %v1573 = vpop.permute.xlu0 %1572
    %v1575 = vmul.f32 %v1564, %v1573
    %1577 = vrot.lane.b32.xlu0 %v1575, 32
    %v1578 = vpop.permute.xlu0 %1577
    %v1580 = vadd.f32 %v1570, %v1578
    %v1581 = vtanh.pop %v1580
    %1583 = vrot.lane.b32.xlu0 %v1581, 64
    %v1584 = vpop.permute.xlu0 %1583
    %v1586 = vmul.f32 %v1564, %v1584
    %s1587 = scalar_lea.vmem [#allocation3], 40
    %v1588 = vld [vmem:[%s1587] sm:$0xff]
    %v1589 = vadd.f32 %v1588, %v1550
    %v1590 = vld [vmem:[#allocation9] sm:$0xff]
    %v1591 = vxor.u32 %v1589, 2147483648
    %v1592 = vmul.f32 %v1591, 1.442695
    %v1593 = vpow.pop %v1592
    %v1594 = vadd.f32 %v1593, 1.0
    %v1595 = vrcp.pop %v1594
    %v1596 = vmul.f32 1.0, %v1595
    %v1597 = vtanh.pop %v1589
    %1599 = vrot.lane.b32.xlu0 %v1590, 32
    %v1600 = vpop.permute.xlu0 %1599
    %v1602 = vmul.f32 %v1596, %v1600
    %1604 = vrot.lane.b32.xlu0 %v1597, 64
    %v1605 = vpop.permute.xlu0 %1604
    %v1607 = vmul.f32 %v1596, %v1605
    %1609 = vrot.lane.b32.xlu0 %v1607, 32
    %v1610 = vpop.permute.xlu0 %1609
    %v1612 = vadd.f32 %v1602, %v1610
    %v1613 = vtanh.pop %v1612
    %1615 = vrot.lane.b32.xlu0 %v1613, 64
    %v1616 = vpop.permute.xlu0 %1615
    %v1618 = vmul.f32 %v1596, %v1616
    %1620 = vrot.lane.b32.xlu0 %v1586, 32
    %v1621 = vpop.permute.xlu0 %1620
    %1623 = vst.msk [vmem:[#allocation6] sm:$0xff] %vm1032, %v1621
    %1625 = vrot.lane.b32.xlu0 %v1580, 96
    %v1626 = vpop.permute.xlu0 %1625
    %1628 = vst.msk [vmem:[#allocation7] sm:$0xff] %vm1032, %v1626
    %1630 = vrot.lane.b32.xlu0 %v1618, 32
    %v1631 = vpop.permute.xlu0 %1630
    %1633 = vst.msk [vmem:[#allocation8] sm:$0xff] %vm1032, %v1631
    %1635 = vrot.lane.b32.xlu0 %v1612, 96
    %v1636 = vpop.permute.xlu0 %1635
    %1638 = vst.msk [vmem:[#allocation9] sm:$0xff] %vm1032, %v1636
    %s1639 = scalar_lea.vmem [#allocation4], 16
    %1640 = vst.msk [vmem:[%s1639] sm:$0xff] %vm1032, %v1621
    %s1641 = scalar_lea.vmem [#allocation5], 40
    %1642 = vst.msk [vmem:[%s1641] sm:$0xff] %vm1032, %v1631
    %v1643 = vld [vmem:[#allocation6] sm:$0xff]
    %v1644 = vpack.c.bf16 %v1643, %v1643
    %v1645 = vld [vmem:[%s14] sm:$0xf]
    %v1646 = vld [vmem:[%s14 + $0x4] sm:$0xf]
    %v1647 = vld [vmem:[%s14 + $0x8] sm:$0xf]
    %v1648 = vld [vmem:[%s14 + $0xc] sm:$0xf]
    %v1653 = vunpack.c.l.b16 %v1645
    %v1654 = vunpack.c.l.b16 %v1646
    %v1655 = vunpack.c.l.b16 %v1647
    %v1656 = vunpack.c.l.b16 %v1648
    %v1657 = vpack.c.b16 %v1654, %v1653
    %v1658 = vpack.c.b16 %v1656, %v1655
    %v1662 = vsel %vm1032, %v1644, 0
    %1664 = vmatprep.subr.bf16.mxu0 0
    %1665 = vmatpush1.bf16.msra.mxu0 %v1657
    %1666 = vmatprep.subr.bf16.mxu0 0
    %1667 = vmatpush1.bf16.msra.mxu0 %v1658
    %1668 = vmatprep.subr.bf16.mxu0 0
    %1669 = vmatpush1.bf16.msra.mxu0 0
    %1670 = vmatprep.subr.bf16.mxu0 0
    %1671 = vmatpush1.bf16.msra.mxu0 0
    %1672 = vmatprep.subr.bf16.mxu0 0
    %1673 = vmatpush1.bf16.msra.mxu0 0
    %1674 = vmatprep.subr.bf16.mxu0 0
    %1675 = vmatpush1.bf16.msra.mxu0 0
    %1676 = vmatprep.subr.bf16.mxu0 0
    %1677 = vmatpush1.bf16.msra.mxu0 0
    %1678 = vmatprep.subr.bf16.mxu0 0
    %1679 = vmatpush1.bf16.msra.mxu0 0
    %1680 = vmatprep.subr.bf16.mxu0 0
    %1681 = vmatpush1.bf16.msra.mxu0 0
    %1682 = vmatprep.subr.bf16.mxu0 0
    %1683 = vmatpush1.bf16.msra.mxu0 0
    %1684 = vmatprep.subr.bf16.mxu0 0
    %1685 = vmatpush1.bf16.msra.mxu0 0
    %1686 = vmatprep.subr.bf16.mxu0 0
    %1687 = vmatpush1.bf16.msra.mxu0 0
    %1688 = vmatprep.subr.bf16.mxu0 0
    %1689 = vmatpush1.bf16.msra.mxu0 0
    %1690 = vmatprep.subr.bf16.mxu0 0
    %1691 = vmatpush1.bf16.msra.mxu0 0
    %1692 = vmatprep.subr.bf16.mxu0 0
    %1693 = vmatpush1.bf16.msra.mxu0 0
    %1694 = vmatprep.subr.bf16.mxu0 0
    %1695 = vmatpush1.bf16.msra.mxu0 0
    %1696 = vmatprep.mubr.bf16.mxu0 0
    %1697 = vmatmul.mubr.bf16.gmra.mrb[0].mxu0 %v1662
    %v1698 = vpop.f32.mrb[0].mxu0
    %v1699 = vadd.f32 0.0, %v1698
    %v1700 = vpop.f32.mrb[0].mxu0
    %v1701 = vpop.f32.mrb[0].mxu0
    %v1702 = vpop.f32.mrb[0].mxu0
    %1703 = vdwg.mxu0
    %v1704 = vld [vmem:[#allocation8] sm:$0xff]
    %v1705 = vpack.c.bf16 %v1704, %v1704
    %v1706 = vld [vmem:[%s15] sm:$0xf]
    %v1707 = vld [vmem:[%s15 + $0x4] sm:$0xf]
    %v1708 = vld [vmem:[%s15 + $0x8] sm:$0xf]
    %v1709 = vld [vmem:[%s15 + $0xc] sm:$0xf]
    %v1714 = vunpack.c.l.b16 %v1706
    %v1715 = vunpack.c.l.b16 %v1707
    %v1716 = vunpack.c.l.b16 %v1708
    %v1717 = vunpack.c.l.b16 %v1709
    %v1718 = vpack.c.b16 %v1715, %v1714
    %v1719 = vpack.c.b16 %v1717, %v1716
    %v1723 = vsel %vm1032, %v1705, 0
    %1725 = vmatprep.subr.bf16.mxu0 0
    %1726 = vmatpush1.bf16.msra.mxu0 %v1718
    %1727 = vmatprep.subr.bf16.mxu0 0
    %1728 = vmatpush1.bf16.msra.mxu0 %v1719
    %1729 = vmatprep.subr.bf16.mxu0 0
    %1730 = vmatpush1.bf16.msra.mxu0 0
    %1731 = vmatprep.subr.bf16.mxu0 0
    %1732 = vmatpush1.bf16.msra.mxu0 0
    %1733 = vmatprep.subr.bf16.mxu0 0
    %1734 = vmatpush1.bf16.msra.mxu0 0
    %1735 = vmatprep.subr.bf16.mxu0 0
    %1736 = vmatpush1.bf16.msra.mxu0 0
    %1737 = vmatprep.subr.bf16.mxu0 0
    %1738 = vmatpush1.bf16.msra.mxu0 0
    %1739 = vmatprep.subr.bf16.mxu0 0
    %1740 = vmatpush1.bf16.msra.mxu0 0
    %1741 = vmatprep.subr.bf16.mxu0 0
    %1742 = vmatpush1.bf16.msra.mxu0 0
    %1743 = vmatprep.subr.bf16.mxu0 0
    %1744 = vmatpush1.bf16.msra.mxu0 0
    %1745 = vmatprep.subr.bf16.mxu0 0
    %1746 = vmatpush1.bf16.msra.mxu0 0
    %1747 = vmatprep.subr.bf16.mxu0 0
    %1748 = vmatpush1.bf16.msra.mxu0 0
    %1749 = vmatprep.subr.bf16.mxu0 0
    %1750 = vmatpush1.bf16.msra.mxu0 0
    %1751 = vmatprep.subr.bf16.mxu0 0
    %1752 = vmatpush1.bf16.msra.mxu0 0
    %1753 = vmatprep.subr.bf16.mxu0 0
    %1754 = vmatpush1.bf16.msra.mxu0 0
    %1755 = vmatprep.subr.bf16.mxu0 0
    %1756 = vmatpush1.bf16.msra.mxu0 0
    %1757 = vmatprep.mubr.bf16.mxu0 0
    %1758 = vmatmul.mubr.bf16.gmra.mrb[0].mxu0 %v1723
    %v1759 = vpop.f32.mrb[0].mxu0
    %v1760 = vadd.f32 0.0, %v1759
    %v1761 = vpop.f32.mrb[0].mxu0
    %v1762 = vpop.f32.mrb[0].mxu0
    %v1763 = vpop.f32.mrb[0].mxu0
    %1764 = vdwg.mxu0
    %s1765 = scalar_lea.vmem [#allocation2], 24
    %v1766 = vld [vmem:[%s1765] sm:$0xff]
    %v1767 = vadd.f32 %v1766, %v1699
    %v1768 = vld [vmem:[#allocation7] sm:$0xff]
    %v1769 = vxor.u32 %v1767, 2147483648
    %v1770 = vmul.f32 %v1769, 1.442695
    %v1771 = vpow.pop %v1770
    %v1772 = vadd.f32 %v1771, 1.0
    %v1773 = vrcp.pop %v1772
    %v1774 = vmul.f32 1.0, %v1773
    %v1775 = vtanh.pop %v1767
    %1777 = vrot.lane.b32.xlu0 %v1768, 32
    %v1778 = vpop.permute.xlu0 %1777
    %v1780 = vmul.f32 %v1774, %v1778
    %1782 = vrot.lane.b32.xlu0 %v1775, 64
    %v1783 = vpop.permute.xlu0 %1782
    %v1785 = vmul.f32 %v1774, %v1783
    %1787 = vrot.lane.b32.xlu0 %v1785, 32
    %v1788 = vpop.permute.xlu0 %1787
    %v1790 = vadd.f32 %v1780, %v1788
    %v1791 = vtanh.pop %v1790
    %1793 = vrot.lane.b32.xlu0 %v1791, 64
    %v1794 = vpop.permute.xlu0 %1793
    %v1796 = vmul.f32 %v1774, %v1794
    %s1797 = scalar_lea.vmem [#allocation3], 32
    %v1798 = vld [vmem:[%s1797] sm:$0xff]
    %v1799 = vadd.f32 %v1798, %v1760
    %v1800 = vld [vmem:[#allocation9] sm:$0xff]
    %v1801 = vxor.u32 %v1799, 2147483648
    %v1802 = vmul.f32 %v1801, 1.442695
    %v1803 = vpow.pop %v1802
    %v1804 = vadd.f32 %v1803, 1.0
    %v1805 = vrcp.pop %v1804
    %v1806 = vmul.f32 1.0, %v1805
    %v1807 = vtanh.pop %v1799
    %1809 = vrot.lane.b32.xlu0 %v1800, 32
    %v1810 = vpop.permute.xlu0 %1809
    %v1812 = vmul.f32 %v1806, %v1810
    %1814 = vrot.lane.b32.xlu0 %v1807, 64
    %v1815 = vpop.permute.xlu0 %1814
    %v1817 = vmul.f32 %v1806, %v1815
    %1819 = vrot.lane.b32.xlu0 %v1817, 32
    %v1820 = vpop.permute.xlu0 %1819
    %v1822 = vadd.f32 %v1812, %v1820
    %v1823 = vtanh.pop %v1822
    %1825 = vrot.lane.b32.xlu0 %v1823, 64
    %v1826 = vpop.permute.xlu0 %1825
    %v1828 = vmul.f32 %v1806, %v1826
    %1830 = vrot.lane.b32.xlu0 %v1796, 32
    %v1831 = vpop.permute.xlu0 %1830
    %1833 = vst.msk [vmem:[#allocation6] sm:$0xff] %vm1032, %v1831
    %1835 = vrot.lane.b32.xlu0 %v1790, 96
    %v1836 = vpop.permute.xlu0 %1835
    %1838 = vst.msk [vmem:[#allocation7] sm:$0xff] %vm1032, %v1836
    %1840 = vrot.lane.b32.xlu0 %v1828, 32
    %v1841 = vpop.permute.xlu0 %1840
    %1843 = vst.msk [vmem:[#allocation8] sm:$0xff] %vm1032, %v1841
    %1845 = vrot.lane.b32.xlu0 %v1822, 96
    %v1846 = vpop.permute.xlu0 %1845
    %1848 = vst.msk [vmem:[#allocation9] sm:$0xff] %vm1032, %v1846
    %s1849 = scalar_lea.vmem [#allocation4], 24
    %1850 = vst.msk [vmem:[%s1849] sm:$0xff] %vm1032, %v1831
    %s1851 = scalar_lea.vmem [#allocation5], 32
    %1852 = vst.msk [vmem:[%s1851] sm:$0xff] %vm1032, %v1841
    %v1853 = vld [vmem:[#allocation6] sm:$0xff]
    %v1854 = vpack.c.bf16 %v1853, %v1853
    %v1855 = vld [vmem:[%s14] sm:$0xf]
    %v1856 = vld [vmem:[%s14 + $0x4] sm:$0xf]
    %v1857 = vld [vmem:[%s14 + $0x8] sm:$0xf]
    %v1858 = vld [vmem:[%s14 + $0xc] sm:$0xf]
    %v1863 = vunpack.c.l.b16 %v1855
    %v1864 = vunpack.c.l.b16 %v1856
    %v1865 = vunpack.c.l.b16 %v1857
    %v1866 = vunpack.c.l.b16 %v1858
    %v1867 = vpack.c.b16 %v1864, %v1863
    %v1868 = vpack.c.b16 %v1866, %v1865
    %v1872 = vsel %vm1032, %v1854, 0
    %1874 = vmatprep.subr.bf16.mxu0 0
    %1875 = vmatpush1.bf16.msra.mxu0 %v1867
    %1876 = vmatprep.subr.bf16.mxu0 0
    %1877 = vmatpush1.bf16.msra.mxu0 %v1868
    %1878 = vmatprep.subr.bf16.mxu0 0
    %1879 = vmatpush1.bf16.msra.mxu0 0
    %1880 = vmatprep.subr.bf16.mxu0 0
    %1881 = vmatpush1.bf16.msra.mxu0 0
    %1882 = vmatprep.subr.bf16.mxu0 0
    %1883 = vmatpush1.bf16.msra.mxu0 0
    %1884 = vmatprep.subr.bf16.mxu0 0
    %1885 = vmatpush1.bf16.msra.mxu0 0
    %1886 = vmatprep.subr.bf16.mxu0 0
    %1887 = vmatpush1.bf16.msra.mxu0 0
    %1888 = vmatprep.subr.bf16.mxu0 0
    %1889 = vmatpush1.bf16.msra.mxu0 0
    %1890 = vmatprep.subr.bf16.mxu0 0
    %1891 = vmatpush1.bf16.msra.mxu0 0
    %1892 = vmatprep.subr.bf16.mxu0 0
    %1893 = vmatpush1.bf16.msra.mxu0 0
    %1894 = vmatprep.subr.bf16.mxu0 0
    %1895 = vmatpush1.bf16.msra.mxu0 0
    %1896 = vmatprep.subr.bf16.mxu0 0
    %1897 = vmatpush1.bf16.msra.mxu0 0
    %1898 = vmatprep.subr.bf16.mxu0 0
    %1899 = vmatpush1.bf16.msra.mxu0 0
    %1900 = vmatprep.subr.bf16.mxu0 0
    %1901 = vmatpush1.bf16.msra.mxu0 0
    %1902 = vmatprep.subr.bf16.mxu0 0
    %1903 = vmatpush1.bf16.msra.mxu0 0
    %1904 = vmatprep.subr.bf16.mxu0 0
    %1905 = vmatpush1.bf16.msra.mxu0 0
    %1906 = vmatprep.mubr.bf16.mxu0 0
    %1907 = vmatmul.mubr.bf16.gmra.mrb[0].mxu0 %v1872
    %v1908 = vpop.f32.mrb[0].mxu0
    %v1909 = vadd.f32 0.0, %v1908
    %v1910 = vpop.f32.mrb[0].mxu0
    %v1911 = vpop.f32.mrb[0].mxu0
    %v1912 = vpop.f32.mrb[0].mxu0
    %1913 = vdwg.mxu0
    %v1914 = vld [vmem:[#allocation8] sm:$0xff]
    %v1915 = vpack.c.bf16 %v1914, %v1914
    %v1916 = vld [vmem:[%s15] sm:$0xf]
    %v1917 = vld [vmem:[%s15 + $0x4] sm:$0xf]
    %v1918 = vld [vmem:[%s15 + $0x8] sm:$0xf]
    %v1919 = vld [vmem:[%s15 + $0xc] sm:$0xf]
    %v1924 = vunpack.c.l.b16 %v1916
    %v1925 = vunpack.c.l.b16 %v1917
    %v1926 = vunpack.c.l.b16 %v1918
    %v1927 = vunpack.c.l.b16 %v1919
    %v1928 = vpack.c.b16 %v1925, %v1924
    %v1929 = vpack.c.b16 %v1927, %v1926
    %v1933 = vsel %vm1032, %v1915, 0
    %1935 = vmatprep.subr.bf16.mxu0 0
    %1936 = vmatpush1.bf16.msra.mxu0 %v1928
    %1937 = vmatprep.subr.bf16.mxu0 0
    %1938 = vmatpush1.bf16.msra.mxu0 %v1929
    %1939 = vmatprep.subr.bf16.mxu0 0
    %1940 = vmatpush1.bf16.msra.mxu0 0
    %1941 = vmatprep.subr.bf16.mxu0 0
    %1942 = vmatpush1.bf16.msra.mxu0 0
    %1943 = vmatprep.subr.bf16.mxu0 0
    %1944 = vmatpush1.bf16.msra.mxu0 0
    %1945 = vmatprep.subr.bf16.mxu0 0
    %1946 = vmatpush1.bf16.msra.mxu0 0
    %1947 = vmatprep.subr.bf16.mxu0 0
    %1948 = vmatpush1.bf16.msra.mxu0 0
    %1949 = vmatprep.subr.bf16.mxu0 0
    %1950 = vmatpush1.bf16.msra.mxu0 0
    %1951 = vmatprep.subr.bf16.mxu0 0
    %1952 = vmatpush1.bf16.msra.mxu0 0
    %1953 = vmatprep.subr.bf16.mxu0 0
    %1954 = vmatpush1.bf16.msra.mxu0 0
    %1955 = vmatprep.subr.bf16.mxu0 0
    %1956 = vmatpush1.bf16.msra.mxu0 0
    %1957 = vmatprep.subr.bf16.mxu0 0
    %1958 = vmatpush1.bf16.msra.mxu0 0
    %1959 = vmatprep.subr.bf16.mxu0 0
    %1960 = vmatpush1.bf16.msra.mxu0 0
    %1961 = vmatprep.subr.bf16.mxu0 0
    %1962 = vmatpush1.bf16.msra.mxu0 0
    %1963 = vmatprep.subr.bf16.mxu0 0
    %1964 = vmatpush1.bf16.msra.mxu0 0
    %1965 = vmatprep.subr.bf16.mxu0 0
    %1966 = vmatpush1.bf16.msra.mxu0 0
    %1967 = vmatprep.mubr.bf16.mxu0 0
    %1968 = vmatmul.mubr.bf16.gmra.mrb[0].mxu0 %v1933
    %v1969 = vpop.f32.mrb[0].mxu0
    %v1970 = vadd.f32 0.0, %v1969
    %v1971 = vpop.f32.mrb[0].mxu0
    %v1972 = vpop.f32.mrb[0].mxu0
    %v1973 = vpop.f32.mrb[0].mxu0
    %1974 = vdwg.mxu0
    %s1975 = scalar_lea.vmem [#allocation2], 32
    %v1976 = vld [vmem:[%s1975] sm:$0xff]
    %v1977 = vadd.f32 %v1976, %v1909
    %v1978 = vld [vmem:[#allocation7] sm:$0xff]
    %v1979 = vxor.u32 %v1977, 2147483648
    %v1980 = vmul.f32 %v1979, 1.442695
    %v1981 = vpow.pop %v1980
    %v1982 = vadd.f32 %v1981, 1.0
    %v1983 = vrcp.pop %v1982
    %v1984 = vmul.f32 1.0, %v1983
    %v1985 = vtanh.pop %v1977
    %1987 = vrot.lane.b32.xlu0 %v1978, 32
    %v1988 = vpop.permute.xlu0 %1987
    %v1990 = vmul.f32 %v1984, %v1988
    %1992 = vrot.lane.b32.xlu0 %v1985, 64
    %v1993 = vpop.permute.xlu0 %1992
    %v1995 = vmul.f32 %v1984, %v1993
    %1997 = vrot.lane.b32.xlu0 %v1995, 32
    %v1998 = vpop.permute.xlu0 %1997
    %v2000 = vadd.f32 %v1990, %v1998
    %v2001 = vtanh.pop %v2000
    %2003 = vrot.lane.b32.xlu0 %v2001, 64
    %v2004 = vpop.permute.xlu0 %2003
    %v2006 = vmul.f32 %v1984, %v2004
    %s2007 = scalar_lea.vmem [#allocation3], 24
    %v2008 = vld [vmem:[%s2007] sm:$0xff]
    %v2009 = vadd.f32 %v2008, %v1970
    %v2010 = vld [vmem:[#allocation9] sm:$0xff]
    %v2011 = vxor.u32 %v2009, 2147483648
    %v2012 = vmul.f32 %v2011, 1.442695
    %v2013 = vpow.pop %v2012
    %v2014 = vadd.f32 %v2013, 1.0
    %v2015 = vrcp.pop %v2014
    %v2016 = vmul.f32 1.0, %v2015
    %v2017 = vtanh.pop %v2009
    %2019 = vrot.lane.b32.xlu0 %v2010, 32
    %v2020 = vpop.permute.xlu0 %2019
    %v2022 = vmul.f32 %v2016, %v2020
    %2024 = vrot.lane.b32.xlu0 %v2017, 64
    %v2025 = vpop.permute.xlu0 %2024
    %v2027 = vmul.f32 %v2016, %v2025
    %2029 = vrot.lane.b32.xlu0 %v2027, 32
    %v2030 = vpop.permute.xlu0 %2029
    %v2032 = vadd.f32 %v2022, %v2030
    %v2033 = vtanh.pop %v2032
    %2035 = vrot.lane.b32.xlu0 %v2033, 64
    %v2036 = vpop.permute.xlu0 %2035
    %v2038 = vmul.f32 %v2016, %v2036
    %2040 = vrot.lane.b32.xlu0 %v2006, 32
    %v2041 = vpop.permute.xlu0 %2040
    %2043 = vst.msk [vmem:[#allocation6] sm:$0xff] %vm1032, %v2041
    %2045 = vrot.lane.b32.xlu0 %v2000, 96
    %v2046 = vpop.permute.xlu0 %2045
    %2048 = vst.msk [vmem:[#allocation7] sm:$0xff] %vm1032, %v2046
    %2050 = vrot.lane.b32.xlu0 %v2038, 32
    %v2051 = vpop.permute.xlu0 %2050
    %2053 = vst.msk [vmem:[#allocation8] sm:$0xff] %vm1032, %v2051
    %2055 = vrot.lane.b32.xlu0 %v2032, 96
    %v2056 = vpop.permute.xlu0 %2055
    %2058 = vst.msk [vmem:[#allocation9] sm:$0xff] %vm1032, %v2056
    %s2059 = scalar_lea.vmem [#allocation4], 32
    %2060 = vst.msk [vmem:[%s2059] sm:$0xff] %vm1032, %v2041
    %s2061 = scalar_lea.vmem [#allocation5], 24
    %2062 = vst.msk [vmem:[%s2061] sm:$0xff] %vm1032, %v2051
    %v2063 = vld [vmem:[#allocation6] sm:$0xff]
    %v2064 = vpack.c.bf16 %v2063, %v2063
    %v2065 = vld [vmem:[%s14] sm:$0xf]
    %v2066 = vld [vmem:[%s14 + $0x4] sm:$0xf]
    %v2067 = vld [vmem:[%s14 + $0x8] sm:$0xf]
    %v2068 = vld [vmem:[%s14 + $0xc] sm:$0xf]
    %v2073 = vunpack.c.l.b16 %v2065
    %v2074 = vunpack.c.l.b16 %v2066
    %v2075 = vunpack.c.l.b16 %v2067
    %v2076 = vunpack.c.l.b16 %v2068
    %v2077 = vpack.c.b16 %v2074, %v2073
    %v2078 = vpack.c.b16 %v2076, %v2075
    %v2082 = vsel %vm1032, %v2064, 0
    %2084 = vmatprep.subr.bf16.mxu0 0
    %2085 = vmatpush1.bf16.msra.mxu0 %v2077
    %2086 = vmatprep.subr.bf16.mxu0 0
    %2087 = vmatpush1.bf16.msra.mxu0 %v2078
    %2088 = vmatprep.subr.bf16.mxu0 0
    %2089 = vmatpush1.bf16.msra.mxu0 0
    %2090 = vmatprep.subr.bf16.mxu0 0
    %2091 = vmatpush1.bf16.msra.mxu0 0
    %2092 = vmatprep.subr.bf16.mxu0 0
    %2093 = vmatpush1.bf16.msra.mxu0 0
    %2094 = vmatprep.subr.bf16.mxu0 0
    %2095 = vmatpush1.bf16.msra.mxu0 0
    %2096 = vmatprep.subr.bf16.mxu0 0
    %2097 = vmatpush1.bf16.msra.mxu0 0
    %2098 = vmatprep.subr.bf16.mxu0 0
    %2099 = vmatpush1.bf16.msra.mxu0 0
    %2100 = vmatprep.subr.bf16.mxu0 0
    %2101 = vmatpush1.bf16.msra.mxu0 0
    %2102 = vmatprep.subr.bf16.mxu0 0
    %2103 = vmatpush1.bf16.msra.mxu0 0
    %2104 = vmatprep.subr.bf16.mxu0 0
    %2105 = vmatpush1.bf16.msra.mxu0 0
    %2106 = vmatprep.subr.bf16.mxu0 0
    %2107 = vmatpush1.bf16.msra.mxu0 0
    %2108 = vmatprep.subr.bf16.mxu0 0
    %2109 = vmatpush1.bf16.msra.mxu0 0
    %2110 = vmatprep.subr.bf16.mxu0 0
    %2111 = vmatpush1.bf16.msra.mxu0 0
    %2112 = vmatprep.subr.bf16.mxu0 0
    %2113 = vmatpush1.bf16.msra.mxu0 0
    %2114 = vmatprep.subr.bf16.mxu0 0
    %2115 = vmatpush1.bf16.msra.mxu0 0
    %2116 = vmatprep.mubr.bf16.mxu0 0
    %2117 = vmatmul.mubr.bf16.gmra.mrb[0].mxu0 %v2082
    %v2118 = vpop.f32.mrb[0].mxu0
    %v2119 = vadd.f32 0.0, %v2118
    %v2120 = vpop.f32.mrb[0].mxu0
    %v2121 = vpop.f32.mrb[0].mxu0
    %v2122 = vpop.f32.mrb[0].mxu0
    %2123 = vdwg.mxu0
    %v2124 = vld [vmem:[#allocation8] sm:$0xff]
    %v2125 = vpack.c.bf16 %v2124, %v2124
    %v2126 = vld [vmem:[%s15] sm:$0xf]
    %v2127 = vld [vmem:[%s15 + $0x4] sm:$0xf]
    %v2128 = vld [vmem:[%s15 + $0x8] sm:$0xf]
    %v2129 = vld [vmem:[%s15 + $0xc] sm:$0xf]
    %v2134 = vunpack.c.l.b16 %v2126
    %v2135 = vunpack.c.l.b16 %v2127
    %v2136 = vunpack.c.l.b16 %v2128
    %v2137 = vunpack.c.l.b16 %v2129
    %v2138 = vpack.c.b16 %v2135, %v2134
    %v2139 = vpack.c.b16 %v2137, %v2136
    %v2143 = vsel %vm1032, %v2125, 0
    %2145 = vmatprep.subr.bf16.mxu0 0
    %2146 = vmatpush1.bf16.msra.mxu0 %v2138
    %2147 = vmatprep.subr.bf16.mxu0 0
    %2148 = vmatpush1.bf16.msra.mxu0 %v2139
    %2149 = vmatprep.subr.bf16.mxu0 0
    %2150 = vmatpush1.bf16.msra.mxu0 0
    %2151 = vmatprep.subr.bf16.mxu0 0
    %2152 = vmatpush1.bf16.msra.mxu0 0
    %2153 = vmatprep.subr.bf16.mxu0 0
    %2154 = vmatpush1.bf16.msra.mxu0 0
    %2155 = vmatprep.subr.bf16.mxu0 0
    %2156 = vmatpush1.bf16.msra.mxu0 0
    %2157 = vmatprep.subr.bf16.mxu0 0
    %2158 = vmatpush1.bf16.msra.mxu0 0
    %2159 = vmatprep.subr.bf16.mxu0 0
    %2160 = vmatpush1.bf16.msra.mxu0 0
    %2161 = vmatprep.subr.bf16.mxu0 0
    %2162 = vmatpush1.bf16.msra.mxu0 0
    %2163 = vmatprep.subr.bf16.mxu0 0
    %2164 = vmatpush1.bf16.msra.mxu0 0
    %2165 = vmatprep.subr.bf16.mxu0 0
    %2166 = vmatpush1.bf16.msra.mxu0 0
    %2167 = vmatprep.subr.bf16.mxu0 0
    %2168 = vmatpush1.bf16.msra.mxu0 0
    %2169 = vmatprep.subr.bf16.mxu0 0
    %2170 = vmatpush1.bf16.msra.mxu0 0
    %2171 = vmatprep.subr.bf16.mxu0 0
    %2172 = vmatpush1.bf16.msra.mxu0 0
    %2173 = vmatprep.subr.bf16.mxu0 0
    %2174 = vmatpush1.bf16.msra.mxu0 0
    %2175 = vmatprep.subr.bf16.mxu0 0
    %2176 = vmatpush1.bf16.msra.mxu0 0
    %2177 = vmatprep.mubr.bf16.mxu0 0
    %2178 = vmatmul.mubr.bf16.gmra.mrb[0].mxu0 %v2143
    %v2179 = vpop.f32.mrb[0].mxu0
    %v2180 = vadd.f32 0.0, %v2179
    %v2181 = vpop.f32.mrb[0].mxu0
    %v2182 = vpop.f32.mrb[0].mxu0
    %v2183 = vpop.f32.mrb[0].mxu0
    %2184 = vdwg.mxu0
    %s2185 = scalar_lea.vmem [#allocation2], 40
    %v2186 = vld [vmem:[%s2185] sm:$0xff]
    %v2187 = vadd.f32 %v2186, %v2119
    %v2188 = vld [vmem:[#allocation7] sm:$0xff]
    %v2189 = vxor.u32 %v2187, 2147483648
    %v2190 = vmul.f32 %v2189, 1.442695
    %v2191 = vpow.pop %v2190
    %v2192 = vadd.f32 %v2191, 1.0
    %v2193 = vrcp.pop %v2192
    %v2194 = vmul.f32 1.0, %v2193
    %v2195 = vtanh.pop %v2187
    %2197 = vrot.lane.b32.xlu0 %v2188, 32
    %v2198 = vpop.permute.xlu0 %2197
    %v2200 = vmul.f32 %v2194, %v2198
    %2202 = vrot.lane.b32.xlu0 %v2195, 64
    %v2203 = vpop.permute.xlu0 %2202
    %v2205 = vmul.f32 %v2194, %v2203
    %2207 = vrot.lane.b32.xlu0 %v2205, 32
    %v2208 = vpop.permute.xlu0 %2207
    %v2210 = vadd.f32 %v2200, %v2208
    %v2211 = vtanh.pop %v2210
    %2213 = vrot.lane.b32.xlu0 %v2211, 64
    %v2214 = vpop.permute.xlu0 %2213
    %v2216 = vmul.f32 %v2194, %v2214
    %s2217 = scalar_lea.vmem [#allocation3], 16
    %v2218 = vld [vmem:[%s2217] sm:$0xff]
    %v2219 = vadd.f32 %v2218, %v2180
    %v2220 = vld [vmem:[#allocation9] sm:$0xff]
    %v2221 = vxor.u32 %v2219, 2147483648
    %v2222 = vmul.f32 %v2221, 1.442695
    %v2223 = vpow.pop %v2222
    %v2224 = vadd.f32 %v2223, 1.0
    %v2225 = vrcp.pop %v2224
    %v2226 = vmul.f32 1.0, %v2225
    %v2227 = vtanh.pop %v2219
    %2229 = vrot.lane.b32.xlu0 %v2220, 32
    %v2230 = vpop.permute.xlu0 %2229
    %v2232 = vmul.f32 %v2226, %v2230
    %2234 = vrot.lane.b32.xlu0 %v2227, 64
    %v2235 = vpop.permute.xlu0 %2234
    %v2237 = vmul.f32 %v2226, %v2235
    %2239 = vrot.lane.b32.xlu0 %v2237, 32
    %v2240 = vpop.permute.xlu0 %2239
    %v2242 = vadd.f32 %v2232, %v2240
    %v2243 = vtanh.pop %v2242
    %2245 = vrot.lane.b32.xlu0 %v2243, 64
    %v2246 = vpop.permute.xlu0 %2245
    %v2248 = vmul.f32 %v2226, %v2246
    %2250 = vrot.lane.b32.xlu0 %v2216, 32
    %v2251 = vpop.permute.xlu0 %2250
    %2253 = vst.msk [vmem:[#allocation6] sm:$0xff] %vm1032, %v2251
    %2255 = vrot.lane.b32.xlu0 %v2210, 96
    %v2256 = vpop.permute.xlu0 %2255
    %2258 = vst.msk [vmem:[#allocation7] sm:$0xff] %vm1032, %v2256
    %2260 = vrot.lane.b32.xlu0 %v2248, 32
    %v2261 = vpop.permute.xlu0 %2260
    %2263 = vst.msk [vmem:[#allocation8] sm:$0xff] %vm1032, %v2261
    %2265 = vrot.lane.b32.xlu0 %v2242, 96
    %v2266 = vpop.permute.xlu0 %2265
    %2268 = vst.msk [vmem:[#allocation9] sm:$0xff] %vm1032, %v2266
    %s2269 = scalar_lea.vmem [#allocation4], 40
    %2270 = vst.msk [vmem:[%s2269] sm:$0xff] %vm1032, %v2251
    %s2271 = scalar_lea.vmem [#allocation5], 16
    %2272 = vst.msk [vmem:[%s2271] sm:$0xff] %vm1032, %v2261
    %v2273 = vld [vmem:[#allocation6] sm:$0xff]
    %v2274 = vpack.c.bf16 %v2273, %v2273
    %v2275 = vld [vmem:[%s14] sm:$0xf]
    %v2276 = vld [vmem:[%s14 + $0x4] sm:$0xf]
    %v2277 = vld [vmem:[%s14 + $0x8] sm:$0xf]
    %v2278 = vld [vmem:[%s14 + $0xc] sm:$0xf]
    %v2283 = vunpack.c.l.b16 %v2275
    %v2284 = vunpack.c.l.b16 %v2276
    %v2285 = vunpack.c.l.b16 %v2277
    %v2286 = vunpack.c.l.b16 %v2278
    %v2287 = vpack.c.b16 %v2284, %v2283
    %v2288 = vpack.c.b16 %v2286, %v2285
    %v2292 = vsel %vm1032, %v2274, 0
    %2294 = vmatprep.subr.bf16.mxu0 0
    %2295 = vmatpush1.bf16.msra.mxu0 %v2287
    %2296 = vmatprep.subr.bf16.mxu0 0
    %2297 = vmatpush1.bf16.msra.mxu0 %v2288
    %2298 = vmatprep.subr.bf16.mxu0 0
    %2299 = vmatpush1.bf16.msra.mxu0 0
    %2300 = vmatprep.subr.bf16.mxu0 0
    %2301 = vmatpush1.bf16.msra.mxu0 0
    %2302 = vmatprep.subr.bf16.mxu0 0
    %2303 = vmatpush1.bf16.msra.mxu0 0
    %2304 = vmatprep.subr.bf16.mxu0 0
    %2305 = vmatpush1.bf16.msra.mxu0 0
    %2306 = vmatprep.subr.bf16.mxu0 0
    %2307 = vmatpush1.bf16.msra.mxu0 0
    %2308 = vmatprep.subr.bf16.mxu0 0
    %2309 = vmatpush1.bf16.msra.mxu0 0
    %2310 = vmatprep.subr.bf16.mxu0 0
    %2311 = vmatpush1.bf16.msra.mxu0 0
    %2312 = vmatprep.subr.bf16.mxu0 0
    %2313 = vmatpush1.bf16.msra.mxu0 0
    %2314 = vmatprep.subr.bf16.mxu0 0
    %2315 = vmatpush1.bf16.msra.mxu0 0
    %2316 = vmatprep.subr.bf16.mxu0 0
    %2317 = vmatpush1.bf16.msra.mxu0 0
    %2318 = vmatprep.subr.bf16.mxu0 0
    %2319 = vmatpush1.bf16.msra.mxu0 0
    %2320 = vmatprep.subr.bf16.mxu0 0
    %2321 = vmatpush1.bf16.msra.mxu0 0
    %2322 = vmatprep.subr.bf16.mxu0 0
    %2323 = vmatpush1.bf16.msra.mxu0 0
    %2324 = vmatprep.subr.bf16.mxu0 0
    %2325 = vmatpush1.bf16.msra.mxu0 0
    %2326 = vmatprep.mubr.bf16.mxu0 0
    %2327 = vmatmul.mubr.bf16.gmra.mrb[0].mxu0 %v2292
    %v2328 = vpop.f32.mrb[0].mxu0
    %v2329 = vadd.f32 0.0, %v2328
    %v2330 = vpop.f32.mrb[0].mxu0
    %v2331 = vpop.f32.mrb[0].mxu0
    %v2332 = vpop.f32.mrb[0].mxu0
    %2333 = vdwg.mxu0
    %v2334 = vld [vmem:[#allocation8] sm:$0xff]
    %v2335 = vpack.c.bf16 %v2334, %v2334
    %v2336 = vld [vmem:[%s15] sm:$0xf]
    %v2337 = vld [vmem:[%s15 + $0x4] sm:$0xf]
    %v2338 = vld [vmem:[%s15 + $0x8] sm:$0xf]
    %v2339 = vld [vmem:[%s15 + $0xc] sm:$0xf]
    %v2344 = vunpack.c.l.b16 %v2336
    %v2345 = vunpack.c.l.b16 %v2337
    %v2346 = vunpack.c.l.b16 %v2338
    %v2347 = vunpack.c.l.b16 %v2339
    %v2348 = vpack.c.b16 %v2345, %v2344
    %v2349 = vpack.c.b16 %v2347, %v2346
    %v2353 = vsel %vm1032, %v2335, 0
    %2355 = vmatprep.subr.bf16.mxu0 0
    %2356 = vmatpush1.bf16.msra.mxu0 %v2348
    %2357 = vmatprep.subr.bf16.mxu0 0
    %2358 = vmatpush1.bf16.msra.mxu0 %v2349
    %2359 = vmatprep.subr.bf16.mxu0 0
    %2360 = vmatpush1.bf16.msra.mxu0 0
    %2361 = vmatprep.subr.bf16.mxu0 0
    %2362 = vmatpush1.bf16.msra.mxu0 0
    %2363 = vmatprep.subr.bf16.mxu0 0
    %2364 = vmatpush1.bf16.msra.mxu0 0
    %2365 = vmatprep.subr.bf16.mxu0 0
    %2366 = vmatpush1.bf16.msra.mxu0 0
    %2367 = vmatprep.subr.bf16.mxu0 0
    %2368 = vmatpush1.bf16.msra.mxu0 0
    %2369 = vmatprep.subr.bf16.mxu0 0
    %2370 = vmatpush1.bf16.msra.mxu0 0
    %2371 = vmatprep.subr.bf16.mxu0 0
    %2372 = vmatpush1.bf16.msra.mxu0 0
    %2373 = vmatprep.subr.bf16.mxu0 0
    %2374 = vmatpush1.bf16.msra.mxu0 0
    %2375 = vmatprep.subr.bf16.mxu0 0
    %2376 = vmatpush1.bf16.msra.mxu0 0
    %2377 = vmatprep.subr.bf16.mxu0 0
    %2378 = vmatpush1.bf16.msra.mxu0 0
    %2379 = vmatprep.subr.bf16.mxu0 0
    %2380 = vmatpush1.bf16.msra.mxu0 0
    %2381 = vmatprep.subr.bf16.mxu0 0
    %2382 = vmatpush1.bf16.msra.mxu0 0
    %2383 = vmatprep.subr.bf16.mxu0 0
    %2384 = vmatpush1.bf16.msra.mxu0 0
    %2385 = vmatprep.subr.bf16.mxu0 0
    %2386 = vmatpush1.bf16.msra.mxu0 0
    %2387 = vmatprep.mubr.bf16.mxu0 0
    %2388 = vmatmul.mubr.bf16.gmra.mrb[0].mxu0 %v2353
    %v2389 = vpop.f32.mrb[0].mxu0
    %v2390 = vadd.f32 0.0, %v2389
    %v2391 = vpop.f32.mrb[0].mxu0
    %v2392 = vpop.f32.mrb[0].mxu0
    %v2393 = vpop.f32.mrb[0].mxu0
    %2394 = vdwg.mxu0
    %s2395 = scalar_lea.vmem [#allocation2], 48
    %v2396 = vld [vmem:[%s2395] sm:$0xff]
    %v2397 = vadd.f32 %v2396, %v2329
    %v2398 = vld [vmem:[#allocation7] sm:$0xff]
    %v2399 = vxor.u32 %v2397, 2147483648
    %v2400 = vmul.f32 %v2399, 1.442695
    %v2401 = vpow.pop %v2400
    %v2402 = vadd.f32 %v2401, 1.0
    %v2403 = vrcp.pop %v2402
    %v2404 = vmul.f32 1.0, %v2403
    %v2405 = vtanh.pop %v2397
    %2407 = vrot.lane.b32.xlu0 %v2398, 32
    %v2408 = vpop.permute.xlu0 %2407
    %v2410 = vmul.f32 %v2404, %v2408
    %2412 = vrot.lane.b32.xlu0 %v2405, 64
    %v2413 = vpop.permute.xlu0 %2412
    %v2415 = vmul.f32 %v2404, %v2413
    %2417 = vrot.lane.b32.xlu0 %v2415, 32
    %v2418 = vpop.permute.xlu0 %2417
    %v2420 = vadd.f32 %v2410, %v2418
    %v2421 = vtanh.pop %v2420
    %2423 = vrot.lane.b32.xlu0 %v2421, 64
    %v2424 = vpop.permute.xlu0 %2423
    %v2426 = vmul.f32 %v2404, %v2424
    %s2427 = scalar_lea.vmem [#allocation3], 8
    %v2428 = vld [vmem:[%s2427] sm:$0xff]
    %v2429 = vadd.f32 %v2428, %v2390
    %v2430 = vld [vmem:[#allocation9] sm:$0xff]
    %v2431 = vxor.u32 %v2429, 2147483648
    %v2432 = vmul.f32 %v2431, 1.442695
    %v2433 = vpow.pop %v2432
    %v2434 = vadd.f32 %v2433, 1.0
    %v2435 = vrcp.pop %v2434
    %v2436 = vmul.f32 1.0, %v2435
    %v2437 = vtanh.pop %v2429
    %2439 = vrot.lane.b32.xlu0 %v2430, 32
    %v2440 = vpop.permute.xlu0 %2439
    %v2442 = vmul.f32 %v2436, %v2440
    %2444 = vrot.lane.b32.xlu0 %v2437, 64
    %v2445 = vpop.permute.xlu0 %2444
    %v2447 = vmul.f32 %v2436, %v2445
    %2449 = vrot.lane.b32.xlu0 %v2447, 32
    %v2450 = vpop.permute.xlu0 %2449
    %v2452 = vadd.f32 %v2442, %v2450
    %v2453 = vtanh.pop %v2452
    %2455 = vrot.lane.b32.xlu0 %v2453, 64
    %v2456 = vpop.permute.xlu0 %2455
    %v2458 = vmul.f32 %v2436, %v2456
    %2460 = vrot.lane.b32.xlu0 %v2426, 32
    %v2461 = vpop.permute.xlu0 %2460
    %2463 = vst.msk [vmem:[#allocation6] sm:$0xff] %vm1032, %v2461
    %2465 = vrot.lane.b32.xlu0 %v2420, 96
    %v2466 = vpop.permute.xlu0 %2465
    %2468 = vst.msk [vmem:[#allocation7] sm:$0xff] %vm1032, %v2466
    %2470 = vrot.lane.b32.xlu0 %v2458, 32
    %v2471 = vpop.permute.xlu0 %2470
    %2473 = vst.msk [vmem:[#allocation8] sm:$0xff] %vm1032, %v2471
    %2475 = vrot.lane.b32.xlu0 %v2452, 96
    %v2476 = vpop.permute.xlu0 %2475
    %2478 = vst.msk [vmem:[#allocation9] sm:$0xff] %vm1032, %v2476
    %s2479 = scalar_lea.vmem [#allocation4], 48
    %2480 = vst.msk [vmem:[%s2479] sm:$0xff] %vm1032, %v2461
    %s2481 = scalar_lea.vmem [#allocation5], 8
    %2482 = vst.msk [vmem:[%s2481] sm:$0xff] %vm1032, %v2471
    %v2483 = vld [vmem:[#allocation6] sm:$0xff]
    %v2484 = vpack.c.bf16 %v2483, %v2483
    %v2485 = vld [vmem:[%s14] sm:$0xf]
    %v2486 = vld [vmem:[%s14 + $0x4] sm:$0xf]
    %v2487 = vld [vmem:[%s14 + $0x8] sm:$0xf]
    %v2488 = vld [vmem:[%s14 + $0xc] sm:$0xf]
    %v2493 = vunpack.c.l.b16 %v2485
    %v2494 = vunpack.c.l.b16 %v2486
    %v2495 = vunpack.c.l.b16 %v2487
    %v2496 = vunpack.c.l.b16 %v2488
    %v2497 = vpack.c.b16 %v2494, %v2493
    %v2498 = vpack.c.b16 %v2496, %v2495
    %v2502 = vsel %vm1032, %v2484, 0
    %2504 = vmatprep.subr.bf16.mxu0 0
    %2505 = vmatpush1.bf16.msra.mxu0 %v2497
    %2506 = vmatprep.subr.bf16.mxu0 0
    %2507 = vmatpush1.bf16.msra.mxu0 %v2498
    %2508 = vmatprep.subr.bf16.mxu0 0
    %2509 = vmatpush1.bf16.msra.mxu0 0
    %2510 = vmatprep.subr.bf16.mxu0 0
    %2511 = vmatpush1.bf16.msra.mxu0 0
    %2512 = vmatprep.subr.bf16.mxu0 0
    %2513 = vmatpush1.bf16.msra.mxu0 0
    %2514 = vmatprep.subr.bf16.mxu0 0
    %2515 = vmatpush1.bf16.msra.mxu0 0
    %2516 = vmatprep.subr.bf16.mxu0 0
    %2517 = vmatpush1.bf16.msra.mxu0 0
    %2518 = vmatprep.subr.bf16.mxu0 0
    %2519 = vmatpush1.bf16.msra.mxu0 0
    %2520 = vmatprep.subr.bf16.mxu0 0
    %2521 = vmatpush1.bf16.msra.mxu0 0
    %2522 = vmatprep.subr.bf16.mxu0 0
    %2523 = vmatpush1.bf16.msra.mxu0 0
    %2524 = vmatprep.subr.bf16.mxu0 0
    %2525 = vmatpush1.bf16.msra.mxu0 0
    %2526 = vmatprep.subr.bf16.mxu0 0
    %2527 = vmatpush1.bf16.msra.mxu0 0
    %2528 = vmatprep.subr.bf16.mxu0 0
    %2529 = vmatpush1.bf16.msra.mxu0 0
    %2530 = vmatprep.subr.bf16.mxu0 0
    %2531 = vmatpush1.bf16.msra.mxu0 0
    %2532 = vmatprep.subr.bf16.mxu0 0
    %2533 = vmatpush1.bf16.msra.mxu0 0
    %2534 = vmatprep.subr.bf16.mxu0 0
    %2535 = vmatpush1.bf16.msra.mxu0 0
    %2536 = vmatprep.mubr.bf16.mxu0 0
    %2537 = vmatmul.mubr.bf16.gmra.mrb[0].mxu0 %v2502
    %v2538 = vpop.f32.mrb[0].mxu0
    %v2539 = vadd.f32 0.0, %v2538
    %v2540 = vpop.f32.mrb[0].mxu0
    %v2541 = vpop.f32.mrb[0].mxu0
    %v2542 = vpop.f32.mrb[0].mxu0
    %2543 = vdwg.mxu0
    %v2544 = vld [vmem:[#allocation8] sm:$0xff]
    %v2545 = vpack.c.bf16 %v2544, %v2544
    %v2546 = vld [vmem:[%s15] sm:$0xf]
    %v2547 = vld [vmem:[%s15 + $0x4] sm:$0xf]
    %v2548 = vld [vmem:[%s15 + $0x8] sm:$0xf]
    %v2549 = vld [vmem:[%s15 + $0xc] sm:$0xf]
    %v2554 = vunpack.c.l.b16 %v2546
    %v2555 = vunpack.c.l.b16 %v2547
    %v2556 = vunpack.c.l.b16 %v2548
    %v2557 = vunpack.c.l.b16 %v2549
    %v2558 = vpack.c.b16 %v2555, %v2554
    %v2559 = vpack.c.b16 %v2557, %v2556
    %v2563 = vsel %vm1032, %v2545, 0
    %2565 = vmatprep.subr.bf16.mxu0 0
    %2566 = vmatpush1.bf16.msra.mxu0 %v2558
    %2567 = vmatprep.subr.bf16.mxu0 0
    %2568 = vmatpush1.bf16.msra.mxu0 %v2559
    %2569 = vmatprep.subr.bf16.mxu0 0
    %2570 = vmatpush1.bf16.msra.mxu0 0
    %2571 = vmatprep.subr.bf16.mxu0 0
    %2572 = vmatpush1.bf16.msra.mxu0 0
    %2573 = vmatprep.subr.bf16.mxu0 0
    %2574 = vmatpush1.bf16.msra.mxu0 0
    %2575 = vmatprep.subr.bf16.mxu0 0
    %2576 = vmatpush1.bf16.msra.mxu0 0
    %2577 = vmatprep.subr.bf16.mxu0 0
    %2578 = vmatpush1.bf16.msra.mxu0 0
    %2579 = vmatprep.subr.bf16.mxu0 0
    %2580 = vmatpush1.bf16.msra.mxu0 0
    %2581 = vmatprep.subr.bf16.mxu0 0
    %2582 = vmatpush1.bf16.msra.mxu0 0
    %2583 = vmatprep.subr.bf16.mxu0 0
    %2584 = vmatpush1.bf16.msra.mxu0 0
    %2585 = vmatprep.subr.bf16.mxu0 0
    %2586 = vmatpush1.bf16.msra.mxu0 0
    %2587 = vmatprep.subr.bf16.mxu0 0
    %2588 = vmatpush1.bf16.msra.mxu0 0
    %2589 = vmatprep.subr.bf16.mxu0 0
    %2590 = vmatpush1.bf16.msra.mxu0 0
    %2591 = vmatprep.subr.bf16.mxu0 0
    %2592 = vmatpush1.bf16.msra.mxu0 0
    %2593 = vmatprep.subr.bf16.mxu0 0
    %2594 = vmatpush1.bf16.msra.mxu0 0
    %2595 = vmatprep.subr.bf16.mxu0 0
    %2596 = vmatpush1.bf16.msra.mxu0 0
    %2597 = vmatprep.mubr.bf16.mxu0 0
    %2598 = vmatmul.mubr.bf16.gmra.mrb[0].mxu0 %v2563
    %v2599 = vpop.f32.mrb[0].mxu0
    %v2600 = vadd.f32 0.0, %v2599
    %v2601 = vpop.f32.mrb[0].mxu0
    %v2602 = vpop.f32.mrb[0].mxu0
    %v2603 = vpop.f32.mrb[0].mxu0
    %2604 = vdwg.mxu0
    %s2605 = scalar_lea.vmem [#allocation2], 56
    %v2606 = vld [vmem:[%s2605] sm:$0xff]
    %v2607 = vadd.f32 %v2606, %v2539
    %v2608 = vld [vmem:[#allocation7] sm:$0xff]
    %v2609 = vxor.u32 %v2607, 2147483648
    %v2610 = vmul.f32 %v2609, 1.442695
    %v2611 = vpow.pop %v2610
    %v2612 = vadd.f32 %v2611, 1.0
    %v2613 = vrcp.pop %v2612
    %v2614 = vmul.f32 1.0, %v2613
    %v2615 = vtanh.pop %v2607
    %2617 = vrot.lane.b32.xlu0 %v2608, 32
    %v2618 = vpop.permute.xlu0 %2617
    %v2620 = vmul.f32 %v2614, %v2618
    %2622 = vrot.lane.b32.xlu0 %v2615, 64
    %v2623 = vpop.permute.xlu0 %2622
    %v2625 = vmul.f32 %v2614, %v2623
    %2627 = vrot.lane.b32.xlu0 %v2625, 32
    %v2628 = vpop.permute.xlu0 %2627
    %v2630 = vadd.f32 %v2620, %v2628
    %v2631 = vtanh.pop %v2630
    %2633 = vrot.lane.b32.xlu0 %v2631, 64
    %v2634 = vpop.permute.xlu0 %2633
    %v2636 = vmul.f32 %v2614, %v2634
    %v2637 = vld [vmem:[#allocation3] sm:$0xff]
    %v2638 = vadd.f32 %v2637, %v2600
    %v2639 = vld [vmem:[#allocation9] sm:$0xff]
    %v2640 = vxor.u32 %v2638, 2147483648
    %v2641 = vmul.f32 %v2640, 1.442695
    %v2642 = vpow.pop %v2641
    %v2643 = vadd.f32 %v2642, 1.0
    %v2644 = vrcp.pop %v2643
    %v2645 = vmul.f32 1.0, %v2644
    %v2646 = vtanh.pop %v2638
    %2648 = vrot.lane.b32.xlu0 %v2639, 32
    %v2649 = vpop.permute.xlu0 %2648
    %v2651 = vmul.f32 %v2645, %v2649
    %2653 = vrot.lane.b32.xlu0 %v2646, 64
    %v2654 = vpop.permute.xlu0 %2653
    %v2656 = vmul.f32 %v2645, %v2654
    %2658 = vrot.lane.b32.xlu0 %v2656, 32
    %v2659 = vpop.permute.xlu0 %2658
    %v2661 = vadd.f32 %v2651, %v2659
    %v2662 = vtanh.pop %v2661
    %2664 = vrot.lane.b32.xlu0 %v2662, 64
    %v2665 = vpop.permute.xlu0 %2664
    %v2667 = vmul.f32 %v2645, %v2665
    %2669 = vrot.lane.b32.xlu0 %v2636, 32
    %v2670 = vpop.permute.xlu0 %2669
    %2672 = vst.msk [vmem:[#allocation6] sm:$0xff] %vm1032, %v2670
    %2674 = vrot.lane.b32.xlu0 %v2630, 96
    %v2675 = vpop.permute.xlu0 %2674
    %2677 = vst.msk [vmem:[#allocation7] sm:$0xff] %vm1032, %v2675
    %2679 = vrot.lane.b32.xlu0 %v2667, 32
    %v2680 = vpop.permute.xlu0 %2679
    %2682 = vst.msk [vmem:[#allocation8] sm:$0xff] %vm1032, %v2680
    %2684 = vrot.lane.b32.xlu0 %v2661, 96
    %v2685 = vpop.permute.xlu0 %2684
    %2687 = vst.msk [vmem:[#allocation9] sm:$0xff] %vm1032, %v2685
    %s2688 = scalar_lea.vmem [#allocation4], 56
    %2689 = vst.msk [vmem:[%s2688] sm:$0xff] %vm1032, %v2670
    %2690 = vst.msk [vmem:[#allocation5] sm:$0xff] %vm1032, %v2680
    %v2691 = vld [vmem:[#allocation4] sm:$0xff]
    %v2692 = vld [vmem:[#allocation4 + $0x8] sm:$0xff]
    %v2693 = vld [vmem:[#allocation4 + $0x10] sm:$0xff]
    %v2694 = vld [vmem:[#allocation4 + $0x18] sm:$0xff]
    %v2695 = vld [vmem:[#allocation4 + $0x20] sm:$0xff]
    %v2696 = vld [vmem:[#allocation4 + $0x28] sm:$0xff]
    %v2697 = vld [vmem:[#allocation4 + $0x30] sm:$0xff]
    %v2698 = vld [vmem:[#allocation4 + $0x38] sm:$0xff]
    %v2699 = vpack.c.bf16 %v2691, %v2691
    %v2700 = vpack.c.bf16 %v2692, %v2692
    %v2701 = vpack.c.bf16 %v2693, %v2693
    %v2702 = vpack.c.bf16 %v2694, %v2694
    %v2703 = vpack.c.bf16 %v2695, %v2695
    %v2704 = vpack.c.bf16 %v2696, %v2696
    %v2705 = vpack.c.bf16 %v2697, %v2697
    %v2706 = vpack.c.bf16 %v2698, %v2698
    %vm2707 = vcmask 257024
    %2708 = vst.msk [vmem:[#allocation10] sm:$0xf] %vm2707, %v2699
    %2709 = vst.msk [vmem:[#allocation10 + $0x4] sm:$0xf] %vm2707, %v2700
    %2710 = vst.msk [vmem:[#allocation10 + $0x8] sm:$0xf] %vm2707, %v2701
    %2711 = vst.msk [vmem:[#allocation10 + $0xc] sm:$0xf] %vm2707, %v2702
    %2712 = vst.msk [vmem:[#allocation10 + $0x10] sm:$0xf] %vm2707, %v2703
    %2713 = vst.msk [vmem:[#allocation10 + $0x14] sm:$0xf] %vm2707, %v2704
    %2714 = vst.msk [vmem:[#allocation10 + $0x18] sm:$0xf] %vm2707, %v2705
    %2715 = vst.msk [vmem:[#allocation10 + $0x1c] sm:$0xf] %vm2707, %v2706
    %v2716 = vld [vmem:[#allocation5] sm:$0xff]
    %v2717 = vld [vmem:[#allocation5 + $0x8] sm:$0xff]
    %v2718 = vld [vmem:[#allocation5 + $0x10] sm:$0xff]
    %v2719 = vld [vmem:[#allocation5 + $0x18] sm:$0xff]
    %v2720 = vld [vmem:[#allocation5 + $0x20] sm:$0xff]
    %v2721 = vld [vmem:[#allocation5 + $0x28] sm:$0xff]
    %v2722 = vld [vmem:[#allocation5 + $0x30] sm:$0xff]
    %v2723 = vld [vmem:[#allocation5 + $0x38] sm:$0xff]
    %v2724 = vpack.c.bf16 %v2716, %v2716
    %v2725 = vpack.c.bf16 %v2717, %v2717
    %v2726 = vpack.c.bf16 %v2718, %v2718
    %v2727 = vpack.c.bf16 %v2719, %v2719
    %v2728 = vpack.c.bf16 %v2720, %v2720
    %v2729 = vpack.c.bf16 %v2721, %v2721
    %v2730 = vpack.c.bf16 %v2722, %v2722
    %v2731 = vpack.c.bf16 %v2723, %v2723
    %2732 = vst.msk [vmem:[#allocation12] sm:$0xf] %vm2707, %v2724
    %2733 = vst.msk [vmem:[#allocation12 + $0x4] sm:$0xf] %vm2707, %v2725
    %2734 = vst.msk [vmem:[#allocation12 + $0x8] sm:$0xf] %vm2707, %v2726
    %2735 = vst.msk [vmem:[#allocation12 + $0xc] sm:$0xf] %vm2707, %v2727
    %2736 = vst.msk [vmem:[#allocation12 + $0x10] sm:$0xf] %vm2707, %v2728
    %2737 = vst.msk [vmem:[#allocation12 + $0x14] sm:$0xf] %vm2707, %v2729
    %2738 = vst.msk [vmem:[#allocation12 + $0x18] sm:$0xf] %vm2707, %v2730
    %2739 = vst.msk [vmem:[#allocation12 + $0x1c] sm:$0xf] %vm2707, %v2731
    // Predicated region
    $region70: #{tpu_custom_call.1} parent=1 // pred_check
      _
    $region71: #{tpu_custom_call.1} parent=1 // pred_check_branch
      %2741 = sbr.rel (0) target = $region73
    $region72: #{tpu_custom_call.1} parent=1 // pred_region
      %s2743 = ssub.s32 512, 512
      %2744 = vsyncadd [#allocation11], %s2743
      %s2745 = sshll.u32 [#allocation10], 4
      %s2746 = int_to_ptr.vmem [resolvable:$true] %s2745
      %2751 = dma.vmem_to_hbm [thread:$0]  %s2746, 512, %s16, [#allocation11], 64, 64, 4
    $region73: #{tpu_custom_call.1} parent=1 // pred_fallthru
      _
    // Predicated region
    $region74: #{tpu_custom_call.1} parent=1 // pred_check
      _
    $region75: #{tpu_custom_call.1} parent=1 // pred_check_branch
      %2753 = sbr.rel (0) target = $region77
    $region76: #{tpu_custom_call.1} parent=1 // pred_region
      %s2754 = ssub.s32 0, 0
      %s2755 = smul.u32 8, %s2754
      %s2757 = ssub.s32 512, 512
      %2758 = vsyncadd [#allocation13], %s2757
      %s2759 = smul.addr %s2755, 64
      %s2760 = scalar_lea.hbm %s17, %s2759
      %s2761 = sshll.u32 [#allocation12], 4
      %s2762 = int_to_ptr.vmem [resolvable:$true] %s2761
      %2767 = dma.vmem_to_hbm [thread:$0]  %s2762, 512, %s2760, [#allocation13], 64, 64, 4
    $region77: #{tpu_custom_call.1} parent=1 // pred_fallthru
      _
    // Predicated region
    $region78: #{tpu_custom_call.1} parent=1 // pred_check
      _
    $region79: #{tpu_custom_call.1} parent=1 // pred_check_branch
      %2769 = sbr.rel (0) target = $region81
    $region80: #{tpu_custom_call.1} parent=1 // pred_region
      %2770 = dma.done [#allocation11], 512
    $region81: #{tpu_custom_call.1} parent=1 // pred_fallthru
      _
    // Predicated region
    $region82: #{tpu_custom_call.1} parent=1 // pred_check
      _
    $region83: #{tpu_custom_call.1} parent=1 // pred_check_branch
      %2772 = sbr.rel (0) target = $region85
    $region84: #{tpu_custom_call.1} parent=1 // pred_region
      %2773 = dma.done [#allocation13], 512
    $region85: #{tpu_custom_call.1} parent=1 // pred_fallthru
      _
    %2774 = vsyncpa [#allocation11], 1
    %2775 = vsyncpa [#allocation13], 1

</llo_original>
